<compile_context>
chip_gen: v5e
topology: v5e:2x2
jax: 0.10.0
libtpu: 0.0.40
codegen_flags: <defaults>
</compile_context>

<pallas_src>
import math
from functools import partial, lru_cache

import jax
import jax.numpy as jnp
from jax.experimental import pallas as pl
from jax.experimental.pallas import tpu as pltpu

BN_EPS = 1e-5
RADIUS = 90  # Preprocess.config['radius']
ACT_DTYPE = jnp.bfloat16  # inter-layer activation storage dtype

_VMEM = pl.BlockSpec(memory_space=pltpu.MemorySpace.VMEM)


def _round_up(n, m):
    return ((n + m - 1) // m) * m


@lru_cache(maxsize=1)
def _tile_config():
    """Generation-adaptive (tm_cap, tk_cap, tn_cap, vmem_limit_bytes)."""
    try:
        vmem_cap = int(pltpu.get_tpu_info().vmem_capacity_bytes)
    except Exception:
        vmem_cap = 64 * 1024 * 1024
    if vmem_cap >= 96 * 1024 * 1024:
        # v5e / v6e: 128 MiB VMEM -> larger tiles amortize per-step overhead.
        return 1024, 2048, 256, 64 * 1024 * 1024
    # v7x: 64 MiB VMEM per TensorCore -> roughly half the footprint.
    return 512, 1536, 256, 32 * 1024 * 1024


# --------------------------------------------------------------------------- #
# Pallas kernels
# --------------------------------------------------------------------------- #
def _mm_bias_kernel(x_ref, w_ref, b_ref, o_ref, acc_ref, *, relu):
    # Tiled matmul: x[tm,tk](bf16) @ w[tk,tn](bf16, BN scale folded) -> f32 acc.
    @pl.when(pl.program_id(2) == 0)
    def _init():
        acc_ref[...] = jnp.zeros_like(acc_ref)

    acc_ref[...] += jnp.dot(x_ref[...], w_ref[...],
                            preferred_element_type=jnp.float32)

    @pl.when(pl.program_id(2) == pl.num_programs(2) - 1)
    def _fin():
        acc = acc_ref[...] + b_ref[...]
        if relu:
            acc = jnp.maximum(acc, 0.0)
        o_ref[...] = acc.astype(o_ref.dtype)


def _mm_bias_res_relu_kernel(x_ref, w_ref, b_ref, r_ref, o_ref, acc_ref):
    # conv + BN + residual add + ReLU (end of a Bottleneck block).
    @pl.when(pl.program_id(2) == 0)
    def _init():
        acc_ref[...] = jnp.zeros_like(acc_ref)

    acc_ref[...] += jnp.dot(x_ref[...], w_ref[...],
                            preferred_element_type=jnp.float32)

    @pl.when(pl.program_id(2) == pl.num_programs(2) - 1)
    def _fin():
        res = r_ref[...].astype(jnp.float32)
        acc = jnp.maximum(acc_ref[...] + b_ref[...] + res, 0.0)
        o_ref[...] = acc.astype(o_ref.dtype)


def _maxpool9_kernel(a00_ref, a01_ref, a10_ref, a11_ref, o_ref):
    # 3x3 / stride-2 / pad-1 maxpool.  Inputs are the padded image split by
    # row/col parity, each [1, ho+1, wo+1, C]; the 9 window taps are contiguous
    # slices of those 4 arrays (no 9x HBM duplication).
    ho, wo = o_ref.shape[1], o_ref.shape[2]
    a00, a01 = a00_ref[...], a01_ref[...]
    a10, a11 = a10_ref[...], a11_ref[...]
    m = a00[:, :ho, :wo, :]
    m = jnp.maximum(m, a00[:, :ho, 1:wo + 1, :])
    m = jnp.maximum(m, a00[:, 1:ho + 1, :wo, :])
    m = jnp.maximum(m, a00[:, 1:ho + 1, 1:wo + 1, :])
    m = jnp.maximum(m, a01[:, :ho, :wo, :])
    m = jnp.maximum(m, a01[:, 1:ho + 1, :wo, :])
    m = jnp.maximum(m, a10[:, :ho, :wo, :])
    m = jnp.maximum(m, a10[:, :ho, 1:wo + 1, :])
    m = jnp.maximum(m, a11[:, :ho, :wo, :])
    o_ref[...] = m.astype(o_ref.dtype)


def _avgpool_fc_kernel(x_ref, w_ref, b_ref, o_ref):
    # x: [B, HW, C] -> adaptive avg-pool to (1,1) then Linear(C, 1).
    # fc has a single output class -> VPU reduction instead of an N=1 MXU pass.
    pooled = jnp.mean(x_ref[...].astype(jnp.float32), axis=1)   # [B, C]
    o_ref[...] = jnp.sum(pooled * w_ref[...], axis=-1, keepdims=True) + b_ref[...]


# --------------------------------------------------------------------------- #
# Tiled fused matmul wrapper
# --------------------------------------------------------------------------- #
def _pad2(a, rows, cols):
    r, c = a.shape
    if r == rows and c == cols:
        return a
    return jnp.pad(a, ((0, rows - r), (0, cols - c)))


def fused_matmul(x, w, bias, *, relu, residual=None, out_dtype=ACT_DTYPE):
    """act(x @ w + bias [+ residual]) with bf16 MXU inputs, f32 accumulation."""
    M, K = x.shape
    _, N = w.shape
    tm_cap, tk_cap, tn_cap, vmem_limit = _tile_config()

    tm = min(_round_up(M, 8), tm_cap)
    tk = min(_round_up(K, 128), tk_cap)
    tn = min(_round_up(N, 128), tn_cap)
    Mp, Kp, Np = _round_up(M, tm), _round_up(K, tk), _round_up(N, tn)

    xp = _pad2(x.astype(jnp.bfloat16), Mp, Kp)
    wp = _pad2(w.astype(jnp.bfloat16), Kp, Np)
    bp = _pad2(bias.astype(jnp.float32)[None, :], 1, Np)

    grid = (Mp // tm, Np // tn, Kp // tk)
    in_specs = [
        pl.BlockSpec((tm, tk), lambda i, j, k: (i, k)),
        pl.BlockSpec((tk, tn), lambda i, j, k: (k, j)),
        pl.BlockSpec((1, tn), lambda i, j, k: (0, j)),
    ]
    operands = [xp, wp, bp]
    io_aliases = {}
    out_bytes = jnp.dtype(out_dtype).itemsize
    bytes_accessed = (Mp * Kp + Kp * Np) * 2 + Mp * Np * out_bytes
    if residual is None:
        kernel = partial(_mm_bias_kernel, relu=relu)
    else:
        kernel = _mm_bias_res_relu_kernel
        in_specs.append(pl.BlockSpec((tm, tn), lambda i, j, k: (i, j)))
        operands.append(_pad2(residual.astype(out_dtype), Mp, Np))
        io_aliases = {3: 0}                 # reuse the residual buffer as output
        bytes_accessed += Mp * Np * out_bytes

    out = pl.pallas_call(
        kernel,
        out_shape=jax.ShapeDtypeStruct((Mp, Np), out_dtype),
        grid_spec=pltpu.PrefetchScalarGridSpec(
            num_scalar_prefetch=0,
            grid=grid,
            in_specs=in_specs,
            out_specs=pl.BlockSpec((tm, tn), lambda i, j, k: (i, j)),
            scratch_shapes=[pltpu.VMEM((tm, tn), jnp.float32)],
        ),
        compiler_params=pltpu.CompilerParams(
            dimension_semantics=("parallel", "parallel", "arbitrary"),
            vmem_limit_bytes=vmem_limit,
        ),
        cost_estimate=pl.CostEstimate(
            flops=2 * Mp * Kp * Np,
            transcendentals=0,
            bytes_accessed=bytes_accessed,
        ),
        input_output_aliases=io_aliases,
    )(*operands)
    if Mp != M or Np != N:
        out = out[:M, :N]
    return out


# --------------------------------------------------------------------------- #
# Plain-JAX glue
# --------------------------------------------------------------------------- #
def fft_high_pass(x_nchw, radius):
    """Preprocess.fft_high_pass_filter, reproduced with jnp.fft."""
    _, _, h, w = x_nchw.shape
    cy, cx = h // 2, w // 2
    yy, xx = jnp.meshgrid(jnp.arange(h, dtype=jnp.float32),
                          jnp.arange(w, dtype=jnp.float32), indexing="ij")
    dist = jnp.sqrt((xx - cx) ** 2 + (yy - cy) ** 2)
    mask = (dist <= float(radius)).astype(jnp.float32)          # [H, W]
    xf = jnp.fft.fftn(x_nchw, axes=(-2, -1))
    xf = jnp.fft.fftshift(xf, axes=(-2, -1))
    xf = xf * (1.0 - mask)
    xf = jnp.fft.ifftshift(xf, axes=(-2, -1))
    return jnp.fft.ifftn(xf, axes=(-2, -1)).real.astype(jnp.float32)


def im2col(x, kh, kw, stride, pad):
    """x: [B,H,W,C] NHWC -> bf16 patches [B*Ho*Wo, kh*kw*C] (feature order (kh,kw,C))."""
    # TODO(synk): fuse im2col into the matmul kernel (accumulate kh*kw shifted
    # sub-matmuls over a resident NHWC tile) to avoid the kh*kw x HBM duplication.
    x = x.astype(jnp.bfloat16)          # halve bytes of the duplicated patch matrix
    b, h, w, c = x.shape
    if pad > 0:
        x = jnp.pad(x, ((0, 0), (pad, pad), (pad, pad), (0, 0)))
    ho = (h + 2 * pad - kh) // stride + 1
    wo = (w + 2 * pad - kw) // stride + 1
    taps = []
    for i in range(kh):
        for j in range(kw):
            taps.append(x[:, i:i + stride * ho:stride, j:j + stride * wo:stride, :])
    patches = jnp.concatenate(taps, axis=-1)                    # [B, Ho, Wo, kh*kw*C]
    return patches.reshape(b * ho * wo, kh * kw * c), (b, ho, wo)


def _weight_mat(w, scale):
    """PyTorch conv weight [Cout,Cin,kh,kw] -> [kh*kw*Cin, Cout] with BN scale folded."""
    cout, cin, kh, kw = w.shape
    wm = jnp.transpose(w, (2, 3, 1, 0)).reshape(kh * kw * cin, cout)
    return wm * scale[None, :]


def conv_bn(x, w, scale, bias, *, stride, pad, relu):
    cout = w.shape[0]
    patches, (b, ho, wo) = im2col(x, w.shape[2], w.shape[3], stride, pad)
    out = fused_matmul(patches, _weight_mat(w, scale), bias, relu=relu)
    return out.reshape(b, ho, wo, cout)


def conv_bn_residual_relu(x, w, scale, bias, identity):
    cout = w.shape[0]
    patches, (b, ho, wo) = im2col(x, 1, 1, 1, 0)
    res = identity.reshape(b * ho * wo, cout)
    out = fused_matmul(patches, _weight_mat(w, scale), bias, relu=True, residual=res)
    return out.reshape(b, ho, wo, cout)


def maxpool_3x3_s2_p1(x):
    b, h, w, c = x.shape
    ho = (h + 2 - 3) // 2 + 1
    wo = (w + 2 - 3) // 2 + 1
    # Pad with -inf to exactly [2*(ho+1), 2*(wo+1)] and split by row/col parity:
    # total bytes ~1x the input (instead of the 9x stacked-taps layout).
    xp = jnp.pad(
        x,
        ((0, 0), (1, 2 * (ho + 1) - h - 1), (1, 2 * (wo + 1) - w - 1), (0, 0)),
        constant_values=-jnp.inf,
    )
    xr = xp.reshape(b, ho + 1, 2, wo + 1, 2, c)
    a00 = xr[:, :, 0, :, 0, :]   # even row, even col
    a01 = xr[:, :, 0, :, 1, :]   # even row, odd  col
    a10 = xr[:, :, 1, :, 0, :]   # odd  row, even col
    a11 = xr[:, :, 1, :, 1, :]   # odd  row, odd  col
    in_spec = pl.BlockSpec((1, ho + 1, wo + 1, c), lambda i: (i, 0, 0, 0))
    return pl.pallas_call(
        _maxpool9_kernel,
        out_shape=jax.ShapeDtypeStruct((b, ho, wo, c), x.dtype),
        grid_spec=pltpu.PrefetchScalarGridSpec(
            num_scalar_prefetch=0,
            grid=(b,),
            in_specs=[in_spec, in_spec, in_spec, in_spec],
            out_specs=pl.BlockSpec((1, ho, wo, c), lambda i: (i, 0, 0, 0)),
        ),
        compiler_params=pltpu.CompilerParams(dimension_semantics=("parallel",)),
    )(a00, a01, a10, a11)


# --------------------------------------------------------------------------- #
# Model
# --------------------------------------------------------------------------- #
def bottleneck_forward(x, p, stride):
    if "dw" in p:
        identity = conv_bn(x, p["dw"], p["ds"], p["db"], stride=stride, pad=0, relu=False)
    else:
        identity = x
    out = conv_bn(x, p["w1"], p["s1"], p["b1"], stride=1, pad=0, relu=True)
    out = conv_bn(out, p["w2"], p["s2"], p["b2"], stride=stride, pad=1, relu=True)
    out = conv_bn_residual_relu(out, p["w3"], p["s3"], p["b3"], identity)
    return out


def resnet_forward(x_nchw, params):
    # TODO(synk): FFT preprocess stays in plain JAX (no Pallas FFT primitive).
    x = fft_high_pass(x_nchw, RADIUS)
    x = jnp.transpose(x, (0, 2, 3, 1))                          # -> NHWC
    x = conv_bn(x, params["conv1_w"], params["bn1_s"], params["bn1_b"],
                stride=2, pad=3, relu=True)
    x = maxpool_3x3_s2_p1(x)
    x = bottleneck_forward(x, params["l1b0"], stride=1)         # layer1 (1 block)
    x = bottleneck_forward(x, params["l2b0"], stride=2)         # layer2 (1 block)
    b, h, w, c = x.shape
    x = x.reshape(b, h * w, c)
    out = pl.pallas_call(
        _avgpool_fc_kernel,
        out_shape=jax.ShapeDtypeStruct((b, 1), jnp.float32),
        in_specs=[_VMEM, _VMEM, _VMEM],
        out_specs=_VMEM,
    )(x, params["fc_w"], params["fc_b"])
    return out                                                   # [B, num_classes=1]


# --------------------------------------------------------------------------- #
# Deterministic parameter init (matches PyTorch __init__ shapes / init scheme)
# --------------------------------------------------------------------------- #
def _bn_fold(c):
    gamma = jnp.ones((c,), jnp.float32)
    beta = jnp.zeros((c,), jnp.float32)
    running_mean = jnp.zeros((c,), jnp.float32)
    running_var = jnp.ones((c,), jnp.float32)
    scale = gamma / jnp.sqrt(running_var + BN_EPS)
    bias = beta - running_mean * scale
    return scale, bias


def init_params(key):
    keys = iter(jax.random.split(key, 32))

    def conv_w(cout, cin, k):
        fan_out = cout * k * k                                   # kaiming_normal_, fan_out
        std = math.sqrt(2.0 / fan_out)
        return jax.random.normal(next(keys), (cout, cin, k, k), jnp.float32) * std

    def bottleneck(inplanes, planes, downsample):
        p = {
            "w1": conv_w(planes, inplanes, 1),
            "w2": conv_w(planes, planes, 3),
            "w3": conv_w(planes * 4, planes, 1),
        }
        p["s1"], p["b1"] = _bn_fold(planes)
        p["s2"], p["b2"] = _bn_fold(planes)
        p["s3"], p["b3"] = _bn_fold(planes * 4)
        if downsample:
            p["dw"] = conv_w(planes * 4, inplanes, 1)
            p["ds"], p["db"] = _bn_fold(planes * 4)
        return p

    params = {"conv1_w": conv_w(64, 3, 7)}
    params["bn1_s"], params["bn1_b"] = _bn_fold(64)
    params["l1b0"] = bottleneck(64, 64, downsample=True)         # 64 -> 256
    params["l2b0"] = bottleneck(256, 128, downsample=True)       # 256 -> 512, stride 2

    bound = 1.0 / math.sqrt(512.0)                               # nn.Linear default init
    params["fc_w"] = jax.random.uniform(next(keys), (1, 512), jnp.float32, -bound, bound)
    params["fc_b"] = jax.random.uniform(next(keys), (1, 1), jnp.float32, -bound, bound)
    return params


# --------------------------------------------------------------------------- #
if __name__ == "__main__":
    key = jax.random.PRNGKey(0)
    k_x, k_p = jax.random.split(key)
    x = jax.random.normal(k_x, (2, 3, 16, 16), jnp.float32)      # NCHW, like PyTorch
    params = init_params(k_p)

    fwd = jax.jit(resnet_forward)
    out = fwd(x, params)
    jax.block_until_ready(out)
    assert out.shape == (2, 1) and out.dtype == jnp.float32
    print("KERNEL_OK")
</pallas_src>

<mosaic_0001>
module attributes {stable_mosaic.version = 11 : i64} {
  func.func @_mm_bias_kernel(%arg0: i32, %arg1: i32, %arg2: i32, %arg3: memref<128x256xbf16, #tpu.memory_space<vmem>>, %arg4: memref<256x128xbf16, #tpu.memory_space<vmem>>, %arg5: memref<1x128xf32, #tpu.memory_space<vmem>>, %arg6: memref<128x128xbf16, #tpu.memory_space<vmem>>, %arg7: memref<128x128xf32, #tpu.memory_space<vmem>>) attributes {dimension_semantics = [#tpu.dimension_semantics<parallel>, #tpu.dimension_semantics<parallel>, #tpu.dimension_semantics<arbitrary>], iteration_bounds = array<i64: 1, 1, 1>, scalar_prefetch = 0 : i64, scratch_operands = 1 : i64, tpu.core_type = #tpu.core_type<tc>, window_params = [{transform_indices = @transform_0, window_bounds = array<i64: 128, 256>}, {transform_indices = @transform_1, window_bounds = array<i64: 256, 128>}, {transform_indices = @transform_2, window_bounds = array<i64: 1, 128>}, {transform_indices = @transform_3, window_bounds = array<i64: 128, 128>}]} {
    %c0_i32 = arith.constant 0 : i32
    %0 = arith.cmpi eq, %arg2, %c0_i32 : i32
    %1 = arith.extui %0 : i1 to i32
    %c0_i32_0 = arith.constant 0 : i32
    %2 = arith.cmpi ne, %1, %c0_i32_0 : i32
    scf.if %2 {
      %cst_10 = arith.constant 0.000000e+00 : f32
      %12 = vector.broadcast %cst_10 : f32 to vector<128x128xf32>
      %c0_11 = arith.constant 0 : index
      %c0_12 = arith.constant 0 : index
      %13 = vector.load %arg7[%c0_11, %c0_12] : memref<128x128xf32, #tpu.memory_space<vmem>>, vector<128x128xf32>
      tpu.vector_store %arg7[%c0_11, %c0_12], %12 {strides = array<i32>} : memref<128x128xf32, #tpu.memory_space<vmem>>, vector<128x128xf32>,
    } else {
    }
    %c0 = arith.constant 0 : index
    %c0_1 = arith.constant 0 : index
    %3 = vector.load %arg7[%c0, %c0_1] : memref<128x128xf32, #tpu.memory_space<vmem>>, vector<128x128xf32>
    %c0_2 = arith.constant 0 : index
    %c0_3 = arith.constant 0 : index
    %4 = vector.load %arg3[%c0_2, %c0_3] : memref<128x256xbf16, #tpu.memory_space<vmem>>, vector<128x256xbf16>
    %c0_4 = arith.constant 0 : index
    %c0_5 = arith.constant 0 : index
    %5 = vector.load %arg4[%c0_4, %c0_5] : memref<256x128xbf16, #tpu.memory_space<vmem>>, vector<256x128xbf16>
    %cst = arith.constant dense<0.000000e+00> : vector<128x128xf32>
    %6 = tpu.matmul %4, %5, %cst {dimension_numbers = #tpu.dot_dimension_numbers<[1], [0], [0], [1], [0, 0, 1, 1], [], []>} : vector<128x256xbf16>, vector<256x128xbf16>, vector<128x128xf32> -> vector<128x128xf32>
    %7 = arith.addf %3, %6 : vector<128x128xf32>
    %c0_6 = arith.constant 0 : index
    %c0_7 = arith.constant 0 : index
    %8 = vector.load %arg7[%c0_6, %c0_7] : memref<128x128xf32, #tpu.memory_space<vmem>>, vector<128x128xf32>
    tpu.vector_store %arg7[%c0_6, %c0_7], %7 {strides = array<i32>} : memref<128x128xf32, #tpu.memory_space<vmem>>, vector<128x128xf32>,
    %c0_i32_8 = arith.constant 0 : i32
    %9 = arith.cmpi eq, %arg2, %c0_i32_8 : i32
    %10 = arith.extui %9 : i1 to i32
    %c0_i32_9 = arith.constant 0 : i32
    %11 = arith.cmpi ne, %10, %c0_i32_9 : i32
    scf.if %11 {
      %c0_10 = arith.constant 0 : index
      %c0_11 = arith.constant 0 : index
      %12 = vector.load %arg7[%c0_10, %c0_11] : memref<128x128xf32, #tpu.memory_space<vmem>>, vector<128x128xf32>
      %c0_12 = arith.constant 0 : index
      %c0_13 = arith.constant 0 : index
      %13 = vector.load %arg5[%c0_12, %c0_13] : memref<1x128xf32, #tpu.memory_space<vmem>>, vector<1x128xf32>
      %14 = vector.broadcast %13 : vector<1x128xf32> to vector<128x128xf32>
      %15 = arith.addf %12, %14 : vector<128x128xf32>
      %cst_14 = arith.constant 0.000000e+00 : f32
      %16 = vector.broadcast %cst_14 : f32 to vector<128x128xf32>
      %17 = arith.maximumf %15, %16 : vector<128x128xf32>
      %18 = arith.truncf %17 : vector<128x128xf32> to vector<128x128xbf16>
      %c0_15 = arith.constant 0 : index
      %c0_16 = arith.constant 0 : index
      %19 = vector.load %arg6[%c0_15, %c0_16] : memref<128x128xbf16, #tpu.memory_space<vmem>>, vector<128x128xbf16>
      tpu.vector_store %arg6[%c0_15, %c0_16], %18 {strides = array<i32>} : memref<128x128xbf16, #tpu.memory_space<vmem>>, vector<128x128xbf16>,
    } else {
    }
    return
  }
  func.func @transform_0(%arg0: i32, %arg1: i32, %arg2: i32) -> (i32, i32) {
    %c0_i32 = arith.constant 0 : i32
    return %arg0, %arg2 : i32, i32
  }
  func.func @transform_1(%arg0: i32, %arg1: i32, %arg2: i32) -> (i32, i32) {
    %c0_i32 = arith.constant 0 : i32
    return %arg2, %arg1 : i32, i32
  }
  func.func @transform_2(%arg0: i32, %arg1: i32, %arg2: i32) -> (i32, i32) {
    %c0_i32 = arith.constant 0 : i32
    %c0_i32_0 = arith.constant 0 : i32
    return %c0_i32, %arg1 : i32, i32
  }
  func.func @transform_3(%arg0: i32, %arg1: i32, %arg2: i32) -> (i32, i32) {
    %c0_i32 = arith.constant 0 : i32
    return %arg0, %arg1 : i32, i32
  }
}

module attributes {stable_mosaic.version = 11 : i64} {
  func.func @_maxpool9_kernel(%arg0: i32, %arg1: memref<1x5x5x64xbf16, #tpu.memory_space<vmem>>, %arg2: memref<1x5x5x64xbf16, #tpu.memory_space<vmem>>, %arg3: memref<1x5x5x64xbf16, #tpu.memory_space<vmem>>, %arg4: memref<1x5x5x64xbf16, #tpu.memory_space<vmem>>, %arg5: memref<1x4x4x64xbf16, #tpu.memory_space<vmem>>) attributes {dimension_semantics = [#tpu.dimension_semantics<parallel>], iteration_bounds = array<i64: 2>, scalar_prefetch = 0 : i64, scratch_operands = 0 : i64, tpu.core_type = #tpu.core_type<tc>, window_params = [{transform_indices = @transform_0, window_bounds = array<i64: 1, 5, 5, 64>}, {transform_indices = @transform_1, window_bounds = array<i64: 1, 5, 5, 64>}, {transform_indices = @transform_2, window_bounds = array<i64: 1, 5, 5, 64>}, {transform_indices = @transform_3, window_bounds = array<i64: 1, 5, 5, 64>}, {transform_indices = @transform_4, window_bounds = array<i64: 1, 4, 4, 64>}]} {
    %c0 = arith.constant 0 : index
    %c0_0 = arith.constant 0 : index
    %c0_1 = arith.constant 0 : index
    %c0_2 = arith.constant 0 : index
    %0 = vector.load %arg1[%c0, %c0_0, %c0_1, %c0_2] : memref<1x5x5x64xbf16, #tpu.memory_space<vmem>>, vector<1x5x5x64xbf16>
    %c0_3 = arith.constant 0 : index
    %c0_4 = arith.constant 0 : index
    %c0_5 = arith.constant 0 : index
    %c0_6 = arith.constant 0 : index
    %1 = vector.load %arg2[%c0_3, %c0_4, %c0_5, %c0_6] : memref<1x5x5x64xbf16, #tpu.memory_space<vmem>>, vector<1x5x5x64xbf16>
    %c0_7 = arith.constant 0 : index
    %c0_8 = arith.constant 0 : index
    %c0_9 = arith.constant 0 : index
    %c0_10 = arith.constant 0 : index
    %2 = vector.load %arg3[%c0_7, %c0_8, %c0_9, %c0_10] : memref<1x5x5x64xbf16, #tpu.memory_space<vmem>>, vector<1x5x5x64xbf16>
    %c0_11 = arith.constant 0 : index
    %c0_12 = arith.constant 0 : index
    %c0_13 = arith.constant 0 : index
    %c0_14 = arith.constant 0 : index
    %3 = vector.load %arg4[%c0_11, %c0_12, %c0_13, %c0_14] : memref<1x5x5x64xbf16, #tpu.memory_space<vmem>>, vector<1x5x5x64xbf16>
    %4 = vector.extract_strided_slice %0 {offsets = [0, 0, 0, 0], sizes = [1, 4, 4, 64], strides = [1, 1, 1, 1]} : vector<1x5x5x64xbf16> to vector<1x4x4x64xbf16>
    %5 = vector.extract_strided_slice %0 {offsets = [0, 0, 1, 0], sizes = [1, 4, 4, 64], strides = [1, 1, 1, 1]} : vector<1x5x5x64xbf16> to vector<1x4x4x64xbf16>
    %6 = arith.maximumf %4, %5 : vector<1x4x4x64xbf16>
    %7 = vector.extract_strided_slice %0 {offsets = [0, 1, 0, 0], sizes = [1, 4, 4, 64], strides = [1, 1, 1, 1]} : vector<1x5x5x64xbf16> to vector<1x4x4x64xbf16>
    %8 = arith.maximumf %6, %7 : vector<1x4x4x64xbf16>
    %9 = vector.extract_strided_slice %0 {offsets = [0, 1, 1, 0], sizes = [1, 4, 4, 64], strides = [1, 1, 1, 1]} : vector<1x5x5x64xbf16> to vector<1x4x4x64xbf16>
    %10 = arith.maximumf %8, %9 : vector<1x4x4x64xbf16>
    %11 = vector.extract_strided_slice %1 {offsets = [0, 0, 0, 0], sizes = [1, 4, 4, 64], strides = [1, 1, 1, 1]} : vector<1x5x5x64xbf16> to vector<1x4x4x64xbf16>
    %12 = arith.maximumf %10, %11 : vector<1x4x4x64xbf16>
    %13 = vector.extract_strided_slice %1 {offsets = [0, 1, 0, 0], sizes = [1, 4, 4, 64], strides = [1, 1, 1, 1]} : vector<1x5x5x64xbf16> to vector<1x4x4x64xbf16>
    %14 = arith.maximumf %12, %13 : vector<1x4x4x64xbf16>
    %15 = vector.extract_strided_slice %2 {offsets = [0, 0, 0, 0], sizes = [1, 4, 4, 64], strides = [1, 1, 1, 1]} : vector<1x5x5x64xbf16> to vector<1x4x4x64xbf16>
    %16 = arith.maximumf %14, %15 : vector<1x4x4x64xbf16>
    %17 = vector.extract_strided_slice %2 {offsets = [0, 0, 1, 0], sizes = [1, 4, 4, 64], strides = [1, 1, 1, 1]} : vector<1x5x5x64xbf16> to vector<1x4x4x64xbf16>
    %18 = arith.maximumf %16, %17 : vector<1x4x4x64xbf16>
    %19 = vector.extract_strided_slice %3 {offsets = [0, 0, 0, 0], sizes = [1, 4, 4, 64], strides = [1, 1, 1, 1]} : vector<1x5x5x64xbf16> to vector<1x4x4x64xbf16>
    %20 = arith.maximumf %18, %19 : vector<1x4x4x64xbf16>
    %c0_15 = arith.constant 0 : index
    %c0_16 = arith.constant 0 : index
    %c0_17 = arith.constant 0 : index
    %c0_18 = arith.constant 0 : index
    %21 = vector.load %arg5[%c0_15, %c0_16, %c0_17, %c0_18] : memref<1x4x4x64xbf16, #tpu.memory_space<vmem>>, vector<1x4x4x64xbf16>
    tpu.vector_store %arg5[%c0_15, %c0_16, %c0_17, %c0_18], %20 {strides = array<i32>} : memref<1x4x4x64xbf16, #tpu.memory_space<vmem>>, vector<1x4x4x64xbf16>,
    return
  }
  func.func @transform_0(%arg0: i32) -> (i32, i32, i32, i32) {
    %c0_i32 = arith.constant 0 : i32
    %c0_i32_0 = arith.constant 0 : i32
    %c0_i32_1 = arith.constant 0 : i32
    %c0_i32_2 = arith.constant 0 : i32
    return %arg0, %c0_i32, %c0_i32_0, %c0_i32_1 : i32, i32, i32, i32
  }
  func.func @transform_1(%arg0: i32) -> (i32, i32, i32, i32) {
    %c0_i32 = arith.constant 0 : i32
    %c0_i32_0 = arith.constant 0 : i32
    %c0_i32_1 = arith.constant 0 : i32
    %c0_i32_2 = arith.constant 0 : i32
    return %arg0, %c0_i32, %c0_i32_0, %c0_i32_1 : i32, i32, i32, i32
  }
  func.func @transform_2(%arg0: i32) -> (i32, i32, i32, i32) {
    %c0_i32 = arith.constant 0 : i32
    %c0_i32_0 = arith.constant 0 : i32
    %c0_i32_1 = arith.constant 0 : i32
    %c0_i32_2 = arith.constant 0 : i32
    return %arg0, %c0_i32, %c0_i32_0, %c0_i32_1 : i32, i32, i32, i32
  }
  func.func @transform_3(%arg0: i32) -> (i32, i32, i32, i32) {
    %c0_i32 = arith.constant 0 : i32
    %c0_i32_0 = arith.constant 0 : i32
    %c0_i32_1 = arith.constant 0 : i32
    %c0_i32_2 = arith.constant 0 : i32
    return %arg0, %c0_i32, %c0_i32_0, %c0_i32_1 : i32, i32, i32, i32
  }
  func.func @transform_4(%arg0: i32) -> (i32, i32, i32, i32) {
    %c0_i32 = arith.constant 0 : i32
    %c0_i32_0 = arith.constant 0 : i32
    %c0_i32_1 = arith.constant 0 : i32
    %c0_i32_2 = arith.constant 0 : i32
    return %arg0, %c0_i32, %c0_i32_0, %c0_i32_1 : i32, i32, i32, i32
  }
}

module attributes {stable_mosaic.version = 11 : i64} {
  func.func @_mm_bias_kernel(%arg0: i32, %arg1: i32, %arg2: i32, %arg3: memref<32x128xbf16, #tpu.memory_space<vmem>>, %arg4: memref<128x128xbf16, #tpu.memory_space<vmem>>, %arg5: memref<1x128xf32, #tpu.memory_space<vmem>>, %arg6: memref<32x128xbf16, #tpu.memory_space<vmem>>, %arg7: memref<32x128xf32, #tpu.memory_space<vmem>>) attributes {dimension_semantics = [#tpu.dimension_semantics<parallel>, #tpu.dimension_semantics<parallel>, #tpu.dimension_semantics<arbitrary>], iteration_bounds = array<i64: 1, 1, 1>, scalar_prefetch = 0 : i64, scratch_operands = 1 : i64, tpu.core_type = #tpu.core_type<tc>, window_params = [{transform_indices = @transform_0, window_bounds = array<i64: 32, 128>}, {transform_indices = @transform_1, window_bounds = array<i64: 128, 128>}, {transform_indices = @transform_2, window_bounds = array<i64: 1, 128>}, {transform_indices = @transform_3, window_bounds = array<i64: 32, 128>}]} {
    %c0_i32 = arith.constant 0 : i32
    %0 = arith.cmpi eq, %arg2, %c0_i32 : i32
    %1 = arith.extui %0 : i1 to i32
    %c0_i32_0 = arith.constant 0 : i32
    %2 = arith.cmpi ne, %1, %c0_i32_0 : i32
    scf.if %2 {
      %cst_10 = arith.constant 0.000000e+00 : f32
      %12 = vector.broadcast %cst_10 : f32 to vector<32x128xf32>
      %c0_11 = arith.constant 0 : index
      %c0_12 = arith.constant 0 : index
      %13 = vector.load %arg7[%c0_11, %c0_12] : memref<32x128xf32, #tpu.memory_space<vmem>>, vector<32x128xf32>
      tpu.vector_store %arg7[%c0_11, %c0_12], %12 {strides = array<i32>} : memref<32x128xf32, #tpu.memory_space<vmem>>, vector<32x128xf32>,
    } else {
    }
    %c0 = arith.constant 0 : index
    %c0_1 = arith.constant 0 : index
    %3 = vector.load %arg7[%c0, %c0_1] : memref<32x128xf32, #tpu.memory_space<vmem>>, vector<32x128xf32>
    %c0_2 = arith.constant 0 : index
    %c0_3 = arith.constant 0 : index
    %4 = vector.load %arg3[%c0_2, %c0_3] : memref<32x128xbf16, #tpu.memory_space<vmem>>, vector<32x128xbf16>
    %c0_4 = arith.constant 0 : index
    %c0_5 = arith.constant 0 : index
    %5 = vector.load %arg4[%c0_4, %c0_5] : memref<128x128xbf16, #tpu.memory_space<vmem>>, vector<128x128xbf16>
    %cst = arith.constant dense<0.000000e+00> : vector<32x128xf32>
    %6 = tpu.matmul %4, %5, %cst {dimension_numbers = #tpu.dot_dimension_numbers<[1], [0], [0], [1], [0, 0, 1, 1], [], []>} : vector<32x128xbf16>, vector<128x128xbf16>, vector<32x128xf32> -> vector<32x128xf32>
    %7 = arith.addf %3, %6 : vector<32x128xf32>
    %c0_6 = arith.constant 0 : index
    %c0_7 = arith.constant 0 : index
    %8 = vector.load %arg7[%c0_6, %c0_7] : memref<32x128xf32, #tpu.memory_space<vmem>>, vector<32x128xf32>
    tpu.vector_store %arg7[%c0_6, %c0_7], %7 {strides = array<i32>} : memref<32x128xf32, #tpu.memory_space<vmem>>, vector<32x128xf32>,
    %c0_i32_8 = arith.constant 0 : i32
    %9 = arith.cmpi eq, %arg2, %c0_i32_8 : i32
    %10 = arith.extui %9 : i1 to i32
    %c0_i32_9 = arith.constant 0 : i32
    %11 = arith.cmpi ne, %10, %c0_i32_9 : i32
    scf.if %11 {
      %c0_10 = arith.constant 0 : index
      %c0_11 = arith.constant 0 : index
      %12 = vector.load %arg7[%c0_10, %c0_11] : memref<32x128xf32, #tpu.memory_space<vmem>>, vector<32x128xf32>
      %c0_12 = arith.constant 0 : index
      %c0_13 = arith.constant 0 : index
      %13 = vector.load %arg5[%c0_12, %c0_13] : memref<1x128xf32, #tpu.memory_space<vmem>>, vector<1x128xf32>
      %14 = vector.broadcast %13 : vector<1x128xf32> to vector<32x128xf32>
      %15 = arith.addf %12, %14 : vector<32x128xf32>
      %cst_14 = arith.constant 0.000000e+00 : f32
      %16 = vector.broadcast %cst_14 : f32 to vector<32x128xf32>
      %17 = arith.maximumf %15, %16 : vector<32x128xf32>
      %18 = arith.truncf %17 : vector<32x128xf32> to vector<32x128xbf16>
      %c0_15 = arith.constant 0 : index
      %c0_16 = arith.constant 0 : index
      %19 = vector.load %arg6[%c0_15, %c0_16] : memref<32x128xbf16, #tpu.memory_space<vmem>>, vector<32x128xbf16>
      tpu.vector_store %arg6[%c0_15, %c0_16], %18 {strides = array<i32>} : memref<32x128xbf16, #tpu.memory_space<vmem>>, vector<32x128xbf16>,
    } else {
    }
    return
  }
  func.func @transform_0(%arg0: i32, %arg1: i32, %arg2: i32) -> (i32, i32) {
    %c0_i32 = arith.constant 0 : i32
    return %arg0, %arg2 : i32, i32
  }
  func.func @transform_1(%arg0: i32, %arg1: i32, %arg2: i32) -> (i32, i32) {
    %c0_i32 = arith.constant 0 : i32
    return %arg2, %arg1 : i32, i32
  }
  func.func @transform_2(%arg0: i32, %arg1: i32, %arg2: i32) -> (i32, i32) {
    %c0_i32 = arith.constant 0 : i32
    %c0_i32_0 = arith.constant 0 : i32
    return %c0_i32, %arg1 : i32, i32
  }
  func.func @transform_3(%arg0: i32, %arg1: i32, %arg2: i32) -> (i32, i32) {
    %c0_i32 = arith.constant 0 : i32
    return %arg0, %arg1 : i32, i32
  }
}

module attributes {stable_mosaic.version = 11 : i64} {
  func.func @_mm_bias_kernel(%arg0: i32, %arg1: i32, %arg2: i32, %arg3: memref<32x640xbf16, #tpu.memory_space<vmem>>, %arg4: memref<640x128xbf16, #tpu.memory_space<vmem>>, %arg5: memref<1x128xf32, #tpu.memory_space<vmem>>, %arg6: memref<32x128xbf16, #tpu.memory_space<vmem>>, %arg7: memref<32x128xf32, #tpu.memory_space<vmem>>) attributes {dimension_semantics = [#tpu.dimension_semantics<parallel>, #tpu.dimension_semantics<parallel>, #tpu.dimension_semantics<arbitrary>], iteration_bounds = array<i64: 1, 1, 1>, scalar_prefetch = 0 : i64, scratch_operands = 1 : i64, tpu.core_type = #tpu.core_type<tc>, window_params = [{transform_indices = @transform_0, window_bounds = array<i64: 32, 640>}, {transform_indices = @transform_1, window_bounds = array<i64: 640, 128>}, {transform_indices = @transform_2, window_bounds = array<i64: 1, 128>}, {transform_indices = @transform_3, window_bounds = array<i64: 32, 128>}]} {
    %c0_i32 = arith.constant 0 : i32
    %0 = arith.cmpi eq, %arg2, %c0_i32 : i32
    %1 = arith.extui %0 : i1 to i32
    %c0_i32_0 = arith.constant 0 : i32
    %2 = arith.cmpi ne, %1, %c0_i32_0 : i32
    scf.if %2 {
      %cst_10 = arith.constant 0.000000e+00 : f32
      %12 = vector.broadcast %cst_10 : f32 to vector<32x128xf32>
      %c0_11 = arith.constant 0 : index
      %c0_12 = arith.constant 0 : index
      %13 = vector.load %arg7[%c0_11, %c0_12] : memref<32x128xf32, #tpu.memory_space<vmem>>, vector<32x128xf32>
      tpu.vector_store %arg7[%c0_11, %c0_12], %12 {strides = array<i32>} : memref<32x128xf32, #tpu.memory_space<vmem>>, vector<32x128xf32>,
    } else {
    }
    %c0 = arith.constant 0 : index
    %c0_1 = arith.constant 0 : index
    %3 = vector.load %arg7[%c0, %c0_1] : memref<32x128xf32, #tpu.memory_space<vmem>>, vector<32x128xf32>
    %c0_2 = arith.constant 0 : index
    %c0_3 = arith.constant 0 : index
    %4 = vector.load %arg3[%c0_2, %c0_3] : memref<32x640xbf16, #tpu.memory_space<vmem>>, vector<32x640xbf16>
    %c0_4 = arith.constant 0 : index
    %c0_5 = arith.constant 0 : index
    %5 = vector.load %arg4[%c0_4, %c0_5] : memref<640x128xbf16, #tpu.memory_space<vmem>>, vector<640x128xbf16>
    %cst = arith.constant dense<0.000000e+00> : vector<32x128xf32>
    %6 = tpu.matmul %4, %5, %cst {dimension_numbers = #tpu.dot_dimension_numbers<[1], [0], [0], [1], [0, 0, 1, 1], [], []>} : vector<32x640xbf16>, vector<640x128xbf16>, vector<32x128xf32> -> vector<32x128xf32>
    %7 = arith.addf %3, %6 : vector<32x128xf32>
    %c0_6 = arith.constant 0 : index
    %c0_7 = arith.constant 0 : index
    %8 = vector.load %arg7[%c0_6, %c0_7] : memref<32x128xf32, #tpu.memory_space<vmem>>, vector<32x128xf32>
    tpu.vector_store %arg7[%c0_6, %c0_7], %7 {strides = array<i32>} : memref<32x128xf32, #tpu.memory_space<vmem>>, vector<32x128xf32>,
    %c0_i32_8 = arith.constant 0 : i32
    %9 = arith.cmpi eq, %arg2, %c0_i32_8 : i32
    %10 = arith.extui %9 : i1 to i32
    %c0_i32_9 = arith.constant 0 : i32
    %11 = arith.cmpi ne, %10, %c0_i32_9 : i32
    scf.if %11 {
      %c0_10 = arith.constant 0 : index
      %c0_11 = arith.constant 0 : index
      %12 = vector.load %arg7[%c0_10, %c0_11] : memref<32x128xf32, #tpu.memory_space<vmem>>, vector<32x128xf32>
      %c0_12 = arith.constant 0 : index
      %c0_13 = arith.constant 0 : index
      %13 = vector.load %arg5[%c0_12, %c0_13] : memref<1x128xf32, #tpu.memory_space<vmem>>, vector<1x128xf32>
      %14 = vector.broadcast %13 : vector<1x128xf32> to vector<32x128xf32>
      %15 = arith.addf %12, %14 : vector<32x128xf32>
      %cst_14 = arith.constant 0.000000e+00 : f32
      %16 = vector.broadcast %cst_14 : f32 to vector<32x128xf32>
      %17 = arith.maximumf %15, %16 : vector<32x128xf32>
      %18 = arith.truncf %17 : vector<32x128xf32> to vector<32x128xbf16>
      %c0_15 = arith.constant 0 : index
      %c0_16 = arith.constant 0 : index
      %19 = vector.load %arg6[%c0_15, %c0_16] : memref<32x128xbf16, #tpu.memory_space<vmem>>, vector<32x128xbf16>
      tpu.vector_store %arg6[%c0_15, %c0_16], %18 {strides = array<i32>} : memref<32x128xbf16, #tpu.memory_space<vmem>>, vector<32x128xbf16>,
    } else {
    }
    return
  }
  func.func @transform_0(%arg0: i32, %arg1: i32, %arg2: i32) -> (i32, i32) {
    %c0_i32 = arith.constant 0 : i32
    return %arg0, %arg2 : i32, i32
  }
  func.func @transform_1(%arg0: i32, %arg1: i32, %arg2: i32) -> (i32, i32) {
    %c0_i32 = arith.constant 0 : i32
    return %arg2, %arg1 : i32, i32
  }
  func.func @transform_2(%arg0: i32, %arg1: i32, %arg2: i32) -> (i32, i32) {
    %c0_i32 = arith.constant 0 : i32
    %c0_i32_0 = arith.constant 0 : i32
    return %c0_i32, %arg1 : i32, i32
  }
  func.func @transform_3(%arg0: i32, %arg1: i32, %arg2: i32) -> (i32, i32) {
    %c0_i32 = arith.constant 0 : i32
    return %arg0, %arg1 : i32, i32
  }
}

module attributes {stable_mosaic.version = 11 : i64} {
  func.func @_mm_bias_res_relu_kernel(%arg0: i32, %arg1: i32, %arg2: i32, %arg3: memref<32x128xbf16, #tpu.memory_space<vmem>>, %arg4: memref<128x256xbf16, #tpu.memory_space<vmem>>, %arg5: memref<1x256xf32, #tpu.memory_space<vmem>>, %arg6: memref<32x256xbf16, #tpu.memory_space<vmem>>, %arg7: memref<32x256xbf16, #tpu.memory_space<vmem>>, %arg8: memref<32x256xf32, #tpu.memory_space<vmem>>) attributes {dimension_semantics = [#tpu.dimension_semantics<parallel>, #tpu.dimension_semantics<parallel>, #tpu.dimension_semantics<arbitrary>], iteration_bounds = array<i64: 1, 1, 1>, scalar_prefetch = 0 : i64, scratch_operands = 1 : i64, tpu.core_type = #tpu.core_type<tc>, window_params = [{transform_indices = @transform_0, window_bounds = array<i64: 32, 128>}, {transform_indices = @transform_1, window_bounds = array<i64: 128, 256>}, {transform_indices = @transform_2, window_bounds = array<i64: 1, 256>}, {transform_indices = @transform_3, window_bounds = array<i64: 32, 256>}, {transform_indices = @transform_4, window_bounds = array<i64: 32, 256>}]} {
    %c0_i32 = arith.constant 0 : i32
    %0 = arith.cmpi eq, %arg2, %c0_i32 : i32
    %1 = arith.extui %0 : i1 to i32
    %c0_i32_0 = arith.constant 0 : i32
    %2 = arith.cmpi ne, %1, %c0_i32_0 : i32
    scf.if %2 {
      %cst_10 = arith.constant 0.000000e+00 : f32
      %12 = vector.broadcast %cst_10 : f32 to vector<32x256xf32>
      %c0_11 = arith.constant 0 : index
      %c0_12 = arith.constant 0 : index
      %13 = vector.load %arg8[%c0_11, %c0_12] : memref<32x256xf32, #tpu.memory_space<vmem>>, vector<32x256xf32>
      tpu.vector_store %arg8[%c0_11, %c0_12], %12 {strides = array<i32>} : memref<32x256xf32, #tpu.memory_space<vmem>>, vector<32x256xf32>,
    } else {
    }
    %c0 = arith.constant 0 : index
    %c0_1 = arith.constant 0 : index
    %3 = vector.load %arg8[%c0, %c0_1] : memref<32x256xf32, #tpu.memory_space<vmem>>, vector<32x256xf32>
    %c0_2 = arith.constant 0 : index
    %c0_3 = arith.constant 0 : index
    %4 = vector.load %arg3[%c0_2, %c0_3] : memref<32x128xbf16, #tpu.memory_space<vmem>>, vector<32x128xbf16>
    %c0_4 = arith.constant 0 : index
    %c0_5 = arith.constant 0 : index
    %5 = vector.load %arg4[%c0_4, %c0_5] : memref<128x256xbf16, #tpu.memory_space<vmem>>, vector<128x256xbf16>
    %cst = arith.constant dense<0.000000e+00> : vector<32x256xf32>
    %6 = tpu.matmul %4, %5, %cst {dimension_numbers = #tpu.dot_dimension_numbers<[1], [0], [0], [1], [0, 0, 1, 1], [], []>} : vector<32x128xbf16>, vector<128x256xbf16>, vector<32x256xf32> -> vector<32x256xf32>
    %7 = arith.addf %3, %6 : vector<32x256xf32>
    %c0_6 = arith.constant 0 : index
    %c0_7 = arith.constant 0 : index
    %8 = vector.load %arg8[%c0_6, %c0_7] : memref<32x256xf32, #tpu.memory_space<vmem>>, vector<32x256xf32>
    tpu.vector_store %arg8[%c0_6, %c0_7], %7 {strides = array<i32>} : memref<32x256xf32, #tpu.memory_space<vmem>>, vector<32x256xf32>,
    %c0_i32_8 = arith.constant 0 : i32
    %9 = arith.cmpi eq, %arg2, %c0_i32_8 : i32
    %10 = arith.extui %9 : i1 to i32
    %c0_i32_9 = arith.constant 0 : i32
    %11 = arith.cmpi ne, %10, %c0_i32_9 : i32
    scf.if %11 {
      %c0_10 = arith.constant 0 : index
      %c0_11 = arith.constant 0 : index
      %12 = vector.load %arg6[%c0_10, %c0_11] : memref<32x256xbf16, #tpu.memory_space<vmem>>, vector<32x256xbf16>
      %13 = arith.extf %12 : vector<32x256xbf16> to vector<32x256xf32>
      %c0_12 = arith.constant 0 : index
      %c0_13 = arith.constant 0 : index
      %14 = vector.load %arg8[%c0_12, %c0_13] : memref<32x256xf32, #tpu.memory_space<vmem>>, vector<32x256xf32>
      %c0_14 = arith.constant 0 : index
      %c0_15 = arith.constant 0 : index
      %15 = vector.load %arg5[%c0_14, %c0_15] : memref<1x256xf32, #tpu.memory_space<vmem>>, vector<1x256xf32>
      %16 = vector.broadcast %15 : vector<1x256xf32> to vector<32x256xf32>
      %17 = arith.addf %14, %16 : vector<32x256xf32>
      %18 = arith.addf %17, %13 : vector<32x256xf32>
      %cst_16 = arith.constant 0.000000e+00 : f32
      %19 = vector.broadcast %cst_16 : f32 to vector<32x256xf32>
      %20 = arith.maximumf %18, %19 : vector<32x256xf32>
      %21 = arith.truncf %20 : vector<32x256xf32> to vector<32x256xbf16>
      %c0_17 = arith.constant 0 : index
      %c0_18 = arith.constant 0 : index
      %22 = vector.load %arg7[%c0_17, %c0_18] : memref<32x256xbf16, #tpu.memory_space<vmem>>, vector<32x256xbf16>
      tpu.vector_store %arg7[%c0_17, %c0_18], %21 {strides = array<i32>} : memref<32x256xbf16, #tpu.memory_space<vmem>>, vector<32x256xbf16>,
    } else {
    }
    return
  }
  func.func @transform_0(%arg0: i32, %arg1: i32, %arg2: i32) -> (i32, i32) {
    %c0_i32 = arith.constant 0 : i32
    return %arg0, %arg2 : i32, i32
  }
  func.func @transform_1(%arg0: i32, %arg1: i32, %arg2: i32) -> (i32, i32) {
    %c0_i32 = arith.constant 0 : i32
    return %arg2, %arg1 : i32, i32
  }
  func.func @transform_2(%arg0: i32, %arg1: i32, %arg2: i32) -> (i32, i32) {
    %c0_i32 = arith.constant 0 : i32
    %c0_i32_0 = arith.constant 0 : i32
    return %c0_i32, %arg1 : i32, i32
  }
  func.func @transform_3(%arg0: i32, %arg1: i32, %arg2: i32) -> (i32, i32) {
    %c0_i32 = arith.constant 0 : i32
    return %arg0, %arg1 : i32, i32
  }
  func.func @transform_4(%arg0: i32, %arg1: i32, %arg2: i32) -> (i32, i32) {
    %c0_i32 = arith.constant 0 : i32
    return %arg0, %arg1 : i32, i32
  }
}

module attributes {stable_mosaic.version = 11 : i64} {
  func.func @_mm_bias_kernel(%arg0: i32, %arg1: i32, %arg2: i32, %arg3: memref<32x128xbf16, #tpu.memory_space<vmem>>, %arg4: memref<128x256xbf16, #tpu.memory_space<vmem>>, %arg5: memref<1x256xf32, #tpu.memory_space<vmem>>, %arg6: memref<32x256xbf16, #tpu.memory_space<vmem>>, %arg7: memref<32x256xf32, #tpu.memory_space<vmem>>) attributes {dimension_semantics = [#tpu.dimension_semantics<parallel>, #tpu.dimension_semantics<parallel>, #tpu.dimension_semantics<arbitrary>], iteration_bounds = array<i64: 1, 1, 1>, scalar_prefetch = 0 : i64, scratch_operands = 1 : i64, tpu.core_type = #tpu.core_type<tc>, window_params = [{transform_indices = @transform_0, window_bounds = array<i64: 32, 128>}, {transform_indices = @transform_1, window_bounds = array<i64: 128, 256>}, {transform_indices = @transform_2, window_bounds = array<i64: 1, 256>}, {transform_indices = @transform_3, window_bounds = array<i64: 32, 256>}]} {
    %c0_i32 = arith.constant 0 : i32
    %0 = arith.cmpi eq, %arg2, %c0_i32 : i32
    %1 = arith.extui %0 : i1 to i32
    %c0_i32_0 = arith.constant 0 : i32
    %2 = arith.cmpi ne, %1, %c0_i32_0 : i32
    scf.if %2 {
      %cst_10 = arith.constant 0.000000e+00 : f32
      %12 = vector.broadcast %cst_10 : f32 to vector<32x256xf32>
      %c0_11 = arith.constant 0 : index
      %c0_12 = arith.constant 0 : index
      %13 = vector.load %arg7[%c0_11, %c0_12] : memref<32x256xf32, #tpu.memory_space<vmem>>, vector<32x256xf32>
      tpu.vector_store %arg7[%c0_11, %c0_12], %12 {strides = array<i32>} : memref<32x256xf32, #tpu.memory_space<vmem>>, vector<32x256xf32>,
    } else {
    }
    %c0 = arith.constant 0 : index
    %c0_1 = arith.constant 0 : index
    %3 = vector.load %arg7[%c0, %c0_1] : memref<32x256xf32, #tpu.memory_space<vmem>>, vector<32x256xf32>
    %c0_2 = arith.constant 0 : index
    %c0_3 = arith.constant 0 : index
    %4 = vector.load %arg3[%c0_2, %c0_3] : memref<32x128xbf16, #tpu.memory_space<vmem>>, vector<32x128xbf16>
    %c0_4 = arith.constant 0 : index
    %c0_5 = arith.constant 0 : index
    %5 = vector.load %arg4[%c0_4, %c0_5] : memref<128x256xbf16, #tpu.memory_space<vmem>>, vector<128x256xbf16>
    %cst = arith.constant dense<0.000000e+00> : vector<32x256xf32>
    %6 = tpu.matmul %4, %5, %cst {dimension_numbers = #tpu.dot_dimension_numbers<[1], [0], [0], [1], [0, 0, 1, 1], [], []>} : vector<32x128xbf16>, vector<128x256xbf16>, vector<32x256xf32> -> vector<32x256xf32>
    %7 = arith.addf %3, %6 : vector<32x256xf32>
    %c0_6 = arith.constant 0 : index
    %c0_7 = arith.constant 0 : index
    %8 = vector.load %arg7[%c0_6, %c0_7] : memref<32x256xf32, #tpu.memory_space<vmem>>, vector<32x256xf32>
    tpu.vector_store %arg7[%c0_6, %c0_7], %7 {strides = array<i32>} : memref<32x256xf32, #tpu.memory_space<vmem>>, vector<32x256xf32>,
    %c0_i32_8 = arith.constant 0 : i32
    %9 = arith.cmpi eq, %arg2, %c0_i32_8 : i32
    %10 = arith.extui %9 : i1 to i32
    %c0_i32_9 = arith.constant 0 : i32
    %11 = arith.cmpi ne, %10, %c0_i32_9 : i32
    scf.if %11 {
      %c0_10 = arith.constant 0 : index
      %c0_11 = arith.constant 0 : index
      %12 = vector.load %arg7[%c0_10, %c0_11] : memref<32x256xf32, #tpu.memory_space<vmem>>, vector<32x256xf32>
      %c0_12 = arith.constant 0 : index
      %c0_13 = arith.constant 0 : index
      %13 = vector.load %arg5[%c0_12, %c0_13] : memref<1x256xf32, #tpu.memory_space<vmem>>, vector<1x256xf32>
      %14 = vector.broadcast %13 : vector<1x256xf32> to vector<32x256xf32>
      %15 = arith.addf %12, %14 : vector<32x256xf32>
      %16 = arith.truncf %15 : vector<32x256xf32> to vector<32x256xbf16>
      %c0_14 = arith.constant 0 : index
      %c0_15 = arith.constant 0 : index
      %17 = vector.load %arg6[%c0_14, %c0_15] : memref<32x256xbf16, #tpu.memory_space<vmem>>, vector<32x256xbf16>
      tpu.vector_store %arg6[%c0_14, %c0_15], %16 {strides = array<i32>} : memref<32x256xbf16, #tpu.memory_space<vmem>>, vector<32x256xbf16>,
    } else {
    }
    return
  }
  func.func @transform_0(%arg0: i32, %arg1: i32, %arg2: i32) -> (i32, i32) {
    %c0_i32 = arith.constant 0 : i32
    return %arg0, %arg2 : i32, i32
  }
  func.func @transform_1(%arg0: i32, %arg1: i32, %arg2: i32) -> (i32, i32) {
    %c0_i32 = arith.constant 0 : i32
    return %arg2, %arg1 : i32, i32
  }
  func.func @transform_2(%arg0: i32, %arg1: i32, %arg2: i32) -> (i32, i32) {
    %c0_i32 = arith.constant 0 : i32
    %c0_i32_0 = arith.constant 0 : i32
    return %c0_i32, %arg1 : i32, i32
  }
  func.func @transform_3(%arg0: i32, %arg1: i32, %arg2: i32) -> (i32, i32) {
    %c0_i32 = arith.constant 0 : i32
    return %arg0, %arg1 : i32, i32
  }
}

module attributes {stable_mosaic.version = 11 : i64} {
  func.func @_mm_bias_kernel(%arg0: i32, %arg1: i32, %arg2: i32, %arg3: memref<32x256xbf16, #tpu.memory_space<vmem>>, %arg4: memref<256x128xbf16, #tpu.memory_space<vmem>>, %arg5: memref<1x128xf32, #tpu.memory_space<vmem>>, %arg6: memref<32x128xbf16, #tpu.memory_space<vmem>>, %arg7: memref<32x128xf32, #tpu.memory_space<vmem>>) attributes {dimension_semantics = [#tpu.dimension_semantics<parallel>, #tpu.dimension_semantics<parallel>, #tpu.dimension_semantics<arbitrary>], iteration_bounds = array<i64: 1, 1, 1>, scalar_prefetch = 0 : i64, scratch_operands = 1 : i64, tpu.core_type = #tpu.core_type<tc>, window_params = [{transform_indices = @transform_0, window_bounds = array<i64: 32, 256>}, {transform_indices = @transform_1, window_bounds = array<i64: 256, 128>}, {transform_indices = @transform_2, window_bounds = array<i64: 1, 128>}, {transform_indices = @transform_3, window_bounds = array<i64: 32, 128>}]} {
    %c0_i32 = arith.constant 0 : i32
    %0 = arith.cmpi eq, %arg2, %c0_i32 : i32
    %1 = arith.extui %0 : i1 to i32
    %c0_i32_0 = arith.constant 0 : i32
    %2 = arith.cmpi ne, %1, %c0_i32_0 : i32
    scf.if %2 {
      %cst_10 = arith.constant 0.000000e+00 : f32
      %12 = vector.broadcast %cst_10 : f32 to vector<32x128xf32>
      %c0_11 = arith.constant 0 : index
      %c0_12 = arith.constant 0 : index
      %13 = vector.load %arg7[%c0_11, %c0_12] : memref<32x128xf32, #tpu.memory_space<vmem>>, vector<32x128xf32>
      tpu.vector_store %arg7[%c0_11, %c0_12], %12 {strides = array<i32>} : memref<32x128xf32, #tpu.memory_space<vmem>>, vector<32x128xf32>,
    } else {
    }
    %c0 = arith.constant 0 : index
    %c0_1 = arith.constant 0 : index
    %3 = vector.load %arg7[%c0, %c0_1] : memref<32x128xf32, #tpu.memory_space<vmem>>, vector<32x128xf32>
    %c0_2 = arith.constant 0 : index
    %c0_3 = arith.constant 0 : index
    %4 = vector.load %arg3[%c0_2, %c0_3] : memref<32x256xbf16, #tpu.memory_space<vmem>>, vector<32x256xbf16>
    %c0_4 = arith.constant 0 : index
    %c0_5 = arith.constant 0 : index
    %5 = vector.load %arg4[%c0_4, %c0_5] : memref<256x128xbf16, #tpu.memory_space<vmem>>, vector<256x128xbf16>
    %cst = arith.constant dense<0.000000e+00> : vector<32x128xf32>
    %6 = tpu.matmul %4, %5, %cst {dimension_numbers = #tpu.dot_dimension_numbers<[1], [0], [0], [1], [0, 0, 1, 1], [], []>} : vector<32x256xbf16>, vector<256x128xbf16>, vector<32x128xf32> -> vector<32x128xf32>
    %7 = arith.addf %3, %6 : vector<32x128xf32>
    %c0_6 = arith.constant 0 : index
    %c0_7 = arith.constant 0 : index
    %8 = vector.load %arg7[%c0_6, %c0_7] : memref<32x128xf32, #tpu.memory_space<vmem>>, vector<32x128xf32>
    tpu.vector_store %arg7[%c0_6, %c0_7], %7 {strides = array<i32>} : memref<32x128xf32, #tpu.memory_space<vmem>>, vector<32x128xf32>,
    %c0_i32_8 = arith.constant 0 : i32
    %9 = arith.cmpi eq, %arg2, %c0_i32_8 : i32
    %10 = arith.extui %9 : i1 to i32
    %c0_i32_9 = arith.constant 0 : i32
    %11 = arith.cmpi ne, %10, %c0_i32_9 : i32
    scf.if %11 {
      %c0_10 = arith.constant 0 : index
      %c0_11 = arith.constant 0 : index
      %12 = vector.load %arg7[%c0_10, %c0_11] : memref<32x128xf32, #tpu.memory_space<vmem>>, vector<32x128xf32>
      %c0_12 = arith.constant 0 : index
      %c0_13 = arith.constant 0 : index
      %13 = vector.load %arg5[%c0_12, %c0_13] : memref<1x128xf32, #tpu.memory_space<vmem>>, vector<1x128xf32>
      %14 = vector.broadcast %13 : vector<1x128xf32> to vector<32x128xf32>
      %15 = arith.addf %12, %14 : vector<32x128xf32>
      %cst_14 = arith.constant 0.000000e+00 : f32
      %16 = vector.broadcast %cst_14 : f32 to vector<32x128xf32>
      %17 = arith.maximumf %15, %16 : vector<32x128xf32>
      %18 = arith.truncf %17 : vector<32x128xf32> to vector<32x128xbf16>
      %c0_15 = arith.constant 0 : index
      %c0_16 = arith.constant 0 : index
      %19 = vector.load %arg6[%c0_15, %c0_16] : memref<32x128xbf16, #tpu.memory_space<vmem>>, vector<32x128xbf16>
      tpu.vector_store %arg6[%c0_15, %c0_16], %18 {strides = array<i32>} : memref<32x128xbf16, #tpu.memory_space<vmem>>, vector<32x128xbf16>,
    } else {
    }
    return
  }
  func.func @transform_0(%arg0: i32, %arg1: i32, %arg2: i32) -> (i32, i32) {
    %c0_i32 = arith.constant 0 : i32
    return %arg0, %arg2 : i32, i32
  }
  func.func @transform_1(%arg0: i32, %arg1: i32, %arg2: i32) -> (i32, i32) {
    %c0_i32 = arith.constant 0 : i32
    return %arg2, %arg1 : i32, i32
  }
  func.func @transform_2(%arg0: i32, %arg1: i32, %arg2: i32) -> (i32, i32) {
    %c0_i32 = arith.constant 0 : i32
    %c0_i32_0 = arith.constant 0 : i32
    return %c0_i32, %arg1 : i32, i32
  }
  func.func @transform_3(%arg0: i32, %arg1: i32, %arg2: i32) -> (i32, i32) {
    %c0_i32 = arith.constant 0 : i32
    return %arg0, %arg1 : i32, i32
  }
}

module attributes {stable_mosaic.version = 11 : i64} {
  func.func @_mm_bias_kernel(%arg0: i32, %arg1: i32, %arg2: i32, %arg3: memref<8x1152xbf16, #tpu.memory_space<vmem>>, %arg4: memref<1152x128xbf16, #tpu.memory_space<vmem>>, %arg5: memref<1x128xf32, #tpu.memory_space<vmem>>, %arg6: memref<8x128xbf16, #tpu.memory_space<vmem>>, %arg7: memref<8x128xf32, #tpu.memory_space<vmem>>) attributes {dimension_semantics = [#tpu.dimension_semantics<parallel>, #tpu.dimension_semantics<parallel>, #tpu.dimension_semantics<arbitrary>], iteration_bounds = array<i64: 1, 1, 1>, scalar_prefetch = 0 : i64, scratch_operands = 1 : i64, tpu.core_type = #tpu.core_type<tc>, window_params = [{transform_indices = @transform_0, window_bounds = array<i64: 8, 1152>}, {transform_indices = @transform_1, window_bounds = array<i64: 1152, 128>}, {transform_indices = @transform_2, window_bounds = array<i64: 1, 128>}, {transform_indices = @transform_3, window_bounds = array<i64: 8, 128>}]} {
    %c0_i32 = arith.constant 0 : i32
    %0 = arith.cmpi eq, %arg2, %c0_i32 : i32
    %1 = arith.extui %0 : i1 to i32
    %c0_i32_0 = arith.constant 0 : i32
    %2 = arith.cmpi ne, %1, %c0_i32_0 : i32
    scf.if %2 {
      %cst_10 = arith.constant 0.000000e+00 : f32
      %12 = vector.broadcast %cst_10 : f32 to vector<8x128xf32>
      %c0_11 = arith.constant 0 : index
      %c0_12 = arith.constant 0 : index
      %13 = vector.load %arg7[%c0_11, %c0_12] : memref<8x128xf32, #tpu.memory_space<vmem>>, vector<8x128xf32>
      tpu.vector_store %arg7[%c0_11, %c0_12], %12 {strides = array<i32>} : memref<8x128xf32, #tpu.memory_space<vmem>>, vector<8x128xf32>,
    } else {
    }
    %c0 = arith.constant 0 : index
    %c0_1 = arith.constant 0 : index
    %3 = vector.load %arg7[%c0, %c0_1] : memref<8x128xf32, #tpu.memory_space<vmem>>, vector<8x128xf32>
    %c0_2 = arith.constant 0 : index
    %c0_3 = arith.constant 0 : index
    %4 = vector.load %arg3[%c0_2, %c0_3] : memref<8x1152xbf16, #tpu.memory_space<vmem>>, vector<8x1152xbf16>
    %c0_4 = arith.constant 0 : index
    %c0_5 = arith.constant 0 : index
    %5 = vector.load %arg4[%c0_4, %c0_5] : memref<1152x128xbf16, #tpu.memory_space<vmem>>, vector<1152x128xbf16>
    %cst = arith.constant dense<0.000000e+00> : vector<8x128xf32>
    %6 = tpu.matmul %4, %5, %cst {dimension_numbers = #tpu.dot_dimension_numbers<[1], [0], [0], [1], [0, 0, 1, 1], [], []>} : vector<8x1152xbf16>, vector<1152x128xbf16>, vector<8x128xf32> -> vector<8x128xf32>
    %7 = arith.addf %3, %6 : vector<8x128xf32>
    %c0_6 = arith.constant 0 : index
    %c0_7 = arith.constant 0 : index
    %8 = vector.load %arg7[%c0_6, %c0_7] : memref<8x128xf32, #tpu.memory_space<vmem>>, vector<8x128xf32>
    tpu.vector_store %arg7[%c0_6, %c0_7], %7 {strides = array<i32>} : memref<8x128xf32, #tpu.memory_space<vmem>>, vector<8x128xf32>,
    %c0_i32_8 = arith.constant 0 : i32
    %9 = arith.cmpi eq, %arg2, %c0_i32_8 : i32
    %10 = arith.extui %9 : i1 to i32
    %c0_i32_9 = arith.constant 0 : i32
    %11 = arith.cmpi ne, %10, %c0_i32_9 : i32
    scf.if %11 {
      %c0_10 = arith.constant 0 : index
      %c0_11 = arith.constant 0 : index
      %12 = vector.load %arg7[%c0_10, %c0_11] : memref<8x128xf32, #tpu.memory_space<vmem>>, vector<8x128xf32>
      %c0_12 = arith.constant 0 : index
      %c0_13 = arith.constant 0 : index
      %13 = vector.load %arg5[%c0_12, %c0_13] : memref<1x128xf32, #tpu.memory_space<vmem>>, vector<1x128xf32>
      %14 = vector.broadcast %13 : vector<1x128xf32> to vector<8x128xf32>
      %15 = arith.addf %12, %14 : vector<8x128xf32>
      %cst_14 = arith.constant 0.000000e+00 : f32
      %16 = vector.broadcast %cst_14 : f32 to vector<8x128xf32>
      %17 = arith.maximumf %15, %16 : vector<8x128xf32>
      %18 = arith.truncf %17 : vector<8x128xf32> to vector<8x128xbf16>
      %c0_15 = arith.constant 0 : index
      %c0_16 = arith.constant 0 : index
      %19 = vector.load %arg6[%c0_15, %c0_16] : memref<8x128xbf16, #tpu.memory_space<vmem>>, vector<8x128xbf16>
      tpu.vector_store %arg6[%c0_15, %c0_16], %18 {strides = array<i32>} : memref<8x128xbf16, #tpu.memory_space<vmem>>, vector<8x128xbf16>,
    } else {
    }
    return
  }
  func.func @transform_0(%arg0: i32, %arg1: i32, %arg2: i32) -> (i32, i32) {
    %c0_i32 = arith.constant 0 : i32
    return %arg0, %arg2 : i32, i32
  }
  func.func @transform_1(%arg0: i32, %arg1: i32, %arg2: i32) -> (i32, i32) {
    %c0_i32 = arith.constant 0 : i32
    return %arg2, %arg1 : i32, i32
  }
  func.func @transform_2(%arg0: i32, %arg1: i32, %arg2: i32) -> (i32, i32) {
    %c0_i32 = arith.constant 0 : i32
    %c0_i32_0 = arith.constant 0 : i32
    return %c0_i32, %arg1 : i32, i32
  }
  func.func @transform_3(%arg0: i32, %arg1: i32, %arg2: i32) -> (i32, i32) {
    %c0_i32 = arith.constant 0 : i32
    return %arg0, %arg1 : i32, i32
  }
}

module attributes {stable_mosaic.version = 11 : i64} {
  func.func @_mm_bias_kernel(%arg0: i32, %arg1: i32, %arg2: i32, %arg3: memref<8x256xbf16, #tpu.memory_space<vmem>>, %arg4: memref<256x256xbf16, #tpu.memory_space<vmem>>, %arg5: memref<1x256xf32, #tpu.memory_space<vmem>>, %arg6: memref<8x256xbf16, #tpu.memory_space<vmem>>, %arg7: memref<8x256xf32, #tpu.memory_space<vmem>>) attributes {dimension_semantics = [#tpu.dimension_semantics<parallel>, #tpu.dimension_semantics<parallel>, #tpu.dimension_semantics<arbitrary>], iteration_bounds = array<i64: 1, 2, 1>, scalar_prefetch = 0 : i64, scratch_operands = 1 : i64, tpu.core_type = #tpu.core_type<tc>, window_params = [{transform_indices = @transform_0, window_bounds = array<i64: 8, 256>}, {transform_indices = @transform_1, window_bounds = array<i64: 256, 256>}, {transform_indices = @transform_2, window_bounds = array<i64: 1, 256>}, {transform_indices = @transform_3, window_bounds = array<i64: 8, 256>}]} {
    %c0_i32 = arith.constant 0 : i32
    %0 = arith.cmpi eq, %arg2, %c0_i32 : i32
    %1 = arith.extui %0 : i1 to i32
    %c0_i32_0 = arith.constant 0 : i32
    %2 = arith.cmpi ne, %1, %c0_i32_0 : i32
    scf.if %2 {
      %cst_10 = arith.constant 0.000000e+00 : f32
      %12 = vector.broadcast %cst_10 : f32 to vector<8x256xf32>
      %c0_11 = arith.constant 0 : index
      %c0_12 = arith.constant 0 : index
      %13 = vector.load %arg7[%c0_11, %c0_12] : memref<8x256xf32, #tpu.memory_space<vmem>>, vector<8x256xf32>
      tpu.vector_store %arg7[%c0_11, %c0_12], %12 {strides = array<i32>} : memref<8x256xf32, #tpu.memory_space<vmem>>, vector<8x256xf32>,
    } else {
    }
    %c0 = arith.constant 0 : index
    %c0_1 = arith.constant 0 : index
    %3 = vector.load %arg7[%c0, %c0_1] : memref<8x256xf32, #tpu.memory_space<vmem>>, vector<8x256xf32>
    %c0_2 = arith.constant 0 : index
    %c0_3 = arith.constant 0 : index
    %4 = vector.load %arg3[%c0_2, %c0_3] : memref<8x256xbf16, #tpu.memory_space<vmem>>, vector<8x256xbf16>
    %c0_4 = arith.constant 0 : index
    %c0_5 = arith.constant 0 : index
    %5 = vector.load %arg4[%c0_4, %c0_5] : memref<256x256xbf16, #tpu.memory_space<vmem>>, vector<256x256xbf16>
    %cst = arith.constant dense<0.000000e+00> : vector<8x256xf32>
    %6 = tpu.matmul %4, %5, %cst {dimension_numbers = #tpu.dot_dimension_numbers<[1], [0], [0], [1], [0, 0, 1, 1], [], []>} : vector<8x256xbf16>, vector<256x256xbf16>, vector<8x256xf32> -> vector<8x256xf32>
    %7 = arith.addf %3, %6 : vector<8x256xf32>
    %c0_6 = arith.constant 0 : index
    %c0_7 = arith.constant 0 : index
    %8 = vector.load %arg7[%c0_6, %c0_7] : memref<8x256xf32, #tpu.memory_space<vmem>>, vector<8x256xf32>
    tpu.vector_store %arg7[%c0_6, %c0_7], %7 {strides = array<i32>} : memref<8x256xf32, #tpu.memory_space<vmem>>, vector<8x256xf32>,
    %c0_i32_8 = arith.constant 0 : i32
    %9 = arith.cmpi eq, %arg2, %c0_i32_8 : i32
    %10 = arith.extui %9 : i1 to i32
    %c0_i32_9 = arith.constant 0 : i32
    %11 = arith.cmpi ne, %10, %c0_i32_9 : i32
    scf.if %11 {
      %c0_10 = arith.constant 0 : index
      %c0_11 = arith.constant 0 : index
      %12 = vector.load %arg7[%c0_10, %c0_11] : memref<8x256xf32, #tpu.memory_space<vmem>>, vector<8x256xf32>
      %c0_12 = arith.constant 0 : index
      %c0_13 = arith.constant 0 : index
      %13 = vector.load %arg5[%c0_12, %c0_13] : memref<1x256xf32, #tpu.memory_space<vmem>>, vector<1x256xf32>
      %14 = vector.broadcast %13 : vector<1x256xf32> to vector<8x256xf32>
      %15 = arith.addf %12, %14 : vector<8x256xf32>
      %16 = arith.truncf %15 : vector<8x256xf32> to vector<8x256xbf16>
      %c0_14 = arith.constant 0 : index
      %c0_15 = arith.constant 0 : index
      %17 = vector.load %arg6[%c0_14, %c0_15] : memref<8x256xbf16, #tpu.memory_space<vmem>>, vector<8x256xbf16>
      tpu.vector_store %arg6[%c0_14, %c0_15], %16 {strides = array<i32>} : memref<8x256xbf16, #tpu.memory_space<vmem>>, vector<8x256xbf16>,
    } else {
    }
    return
  }
  func.func @transform_0(%arg0: i32, %arg1: i32, %arg2: i32) -> (i32, i32) {
    %c0_i32 = arith.constant 0 : i32
    return %arg0, %arg2 : i32, i32
  }
  func.func @transform_1(%arg0: i32, %arg1: i32, %arg2: i32) -> (i32, i32) {
    %c0_i32 = arith.constant 0 : i32
    return %arg2, %arg1 : i32, i32
  }
  func.func @transform_2(%arg0: i32, %arg1: i32, %arg2: i32) -> (i32, i32) {
    %c0_i32 = arith.constant 0 : i32
    %c0_i32_0 = arith.constant 0 : i32
    return %c0_i32, %arg1 : i32, i32
  }
  func.func @transform_3(%arg0: i32, %arg1: i32, %arg2: i32) -> (i32, i32) {
    %c0_i32 = arith.constant 0 : i32
    return %arg0, %arg1 : i32, i32
  }
}

module attributes {stable_mosaic.version = 11 : i64} {
  func.func @_avgpool_fc_kernel(%arg0: memref<2x4x512xbf16, #tpu.memory_space<vmem>>, %arg1: memref<1x512xf32, #tpu.memory_space<vmem>>, %arg2: memref<1x1xf32, #tpu.memory_space<vmem>>, %arg3: memref<2x1xf32, #tpu.memory_space<vmem>>) attributes {dimension_semantics = [], scalar_prefetch = 0 : i64, scratch_operands = 0 : i64, tpu.core_type = #tpu.core_type<tc>} {
    %c0 = arith.constant 0 : index
    %c0_0 = arith.constant 0 : index
    %c0_1 = arith.constant 0 : index
    %0 = vector.load %arg0[%c0, %c0_0, %c0_1] : memref<2x4x512xbf16, #tpu.memory_space<vmem>>, vector<2x4x512xbf16>
    %1 = arith.extf %0 : vector<2x4x512xbf16> to vector<2x4x512xf32>
    %cst = arith.constant dense<0.000000e+00> : vector<2x512xf32>
    %2 = vector.multi_reduction <add>, %1, %cst [1] : vector<2x4x512xf32> to vector<2x512xf32>
    %cst_2 = arith.constant 4.000000e+00 : f32
    %3 = vector.broadcast %cst_2 : f32 to vector<2x512xf32>
    %4 = arith.divf %2, %3 : vector<2x512xf32>
    %c0_3 = arith.constant 0 : index
    %c0_4 = arith.constant 0 : index
    %5 = vector.load %arg1[%c0_3, %c0_4] : memref<1x512xf32, #tpu.memory_space<vmem>>, vector<1x512xf32>
    %6 = vector.broadcast %5 : vector<1x512xf32> to vector<2x512xf32>
    %7 = arith.mulf %4, %6 : vector<2x512xf32>
    %cst_5 = arith.constant dense<0.000000e+00> : vector<2xf32>
    %8 = vector.multi_reduction <add>, %7, %cst_5 [1] : vector<2x512xf32> to vector<2xf32>
    %9 = vector.shape_cast %8 : vector<2xf32> to vector<2x1xf32>
    %c0_6 = arith.constant 0 : index
    %c0_7 = arith.constant 0 : index
    %10 = vector.load %arg2[%c0_6, %c0_7] : memref<1x1xf32, #tpu.memory_space<vmem>>, vector<1x1xf32>
    %11 = vector.broadcast %10 : vector<1x1xf32> to vector<2x1xf32>
    %12 = arith.addf %9, %11 : vector<2x1xf32>
    %c0_8 = arith.constant 0 : index
    %c0_9 = arith.constant 0 : index
    %13 = vector.load %arg3[%c0_8, %c0_9] : memref<2x1xf32, #tpu.memory_space<vmem>>, vector<2x1xf32>
    tpu.vector_store %arg3[%c0_8, %c0_9], %12 {strides = array<i32>} : memref<2x1xf32, #tpu.memory_space<vmem>>, vector<2x1xf32>,
    return
  }
}

module attributes {stable_mosaic.version = 11 : i64} {
  func.func @_mm_bias_res_relu_kernel(%arg0: i32, %arg1: i32, %arg2: i32, %arg3: memref<8x128xbf16, #tpu.memory_space<vmem>>, %arg4: memref<128x256xbf16, #tpu.memory_space<vmem>>, %arg5: memref<1x256xf32, #tpu.memory_space<vmem>>, %arg6: memref<8x256xbf16, #tpu.memory_space<vmem>>, %arg7: memref<8x256xbf16, #tpu.memory_space<vmem>>, %arg8: memref<8x256xf32, #tpu.memory_space<vmem>>) attributes {dimension_semantics = [#tpu.dimension_semantics<parallel>, #tpu.dimension_semantics<parallel>, #tpu.dimension_semantics<arbitrary>], iteration_bounds = array<i64: 1, 2, 1>, scalar_prefetch = 0 : i64, scratch_operands = 1 : i64, tpu.core_type = #tpu.core_type<tc>, window_params = [{transform_indices = @transform_0, window_bounds = array<i64: 8, 128>}, {transform_indices = @transform_1, window_bounds = array<i64: 128, 256>}, {transform_indices = @transform_2, window_bounds = array<i64: 1, 256>}, {transform_indices = @transform_3, window_bounds = array<i64: 8, 256>}, {transform_indices = @transform_4, window_bounds = array<i64: 8, 256>}]} {
    %c0_i32 = arith.constant 0 : i32
    %0 = arith.cmpi eq, %arg2, %c0_i32 : i32
    %1 = arith.extui %0 : i1 to i32
    %c0_i32_0 = arith.constant 0 : i32
    %2 = arith.cmpi ne, %1, %c0_i32_0 : i32
    scf.if %2 {
      %cst_10 = arith.constant 0.000000e+00 : f32
      %12 = vector.broadcast %cst_10 : f32 to vector<8x256xf32>
      %c0_11 = arith.constant 0 : index
      %c0_12 = arith.constant 0 : index
      %13 = vector.load %arg8[%c0_11, %c0_12] : memref<8x256xf32, #tpu.memory_space<vmem>>, vector<8x256xf32>
      tpu.vector_store %arg8[%c0_11, %c0_12], %12 {strides = array<i32>} : memref<8x256xf32, #tpu.memory_space<vmem>>, vector<8x256xf32>,
    } else {
    }
    %c0 = arith.constant 0 : index
    %c0_1 = arith.constant 0 : index
    %3 = vector.load %arg8[%c0, %c0_1] : memref<8x256xf32, #tpu.memory_space<vmem>>, vector<8x256xf32>
    %c0_2 = arith.constant 0 : index
    %c0_3 = arith.constant 0 : index
    %4 = vector.load %arg3[%c0_2, %c0_3] : memref<8x128xbf16, #tpu.memory_space<vmem>>, vector<8x128xbf16>
    %c0_4 = arith.constant 0 : index
    %c0_5 = arith.constant 0 : index
    %5 = vector.load %arg4[%c0_4, %c0_5] : memref<128x256xbf16, #tpu.memory_space<vmem>>, vector<128x256xbf16>
    %cst = arith.constant dense<0.000000e+00> : vector<8x256xf32>
    %6 = tpu.matmul %4, %5, %cst {dimension_numbers = #tpu.dot_dimension_numbers<[1], [0], [0], [1], [0, 0, 1, 1], [], []>} : vector<8x128xbf16>, vector<128x256xbf16>, vector<8x256xf32> -> vector<8x256xf32>
    %7 = arith.addf %3, %6 : vector<8x256xf32>
    %c0_6 = arith.constant 0 : index
    %c0_7 = arith.constant 0 : index
    %8 = vector.load %arg8[%c0_6, %c0_7] : memref<8x256xf32, #tpu.memory_space<vmem>>, vector<8x256xf32>
    tpu.vector_store %arg8[%c0_6, %c0_7], %7 {strides = array<i32>} : memref<8x256xf32, #tpu.memory_space<vmem>>, vector<8x256xf32>,
    %c0_i32_8 = arith.constant 0 : i32
    %9 = arith.cmpi eq, %arg2, %c0_i32_8 : i32
    %10 = arith.extui %9 : i1 to i32
    %c0_i32_9 = arith.constant 0 : i32
    %11 = arith.cmpi ne, %10, %c0_i32_9 : i32
    scf.if %11 {
      %c0_10 = arith.constant 0 : index
      %c0_11 = arith.constant 0 : index
      %12 = vector.load %arg6[%c0_10, %c0_11] : memref<8x256xbf16, #tpu.memory_space<vmem>>, vector<8x256xbf16>
      %13 = arith.extf %12 : vector<8x256xbf16> to vector<8x256xf32>
      %c0_12 = arith.constant 0 : index
      %c0_13 = arith.constant 0 : index
      %14 = vector.load %arg8[%c0_12, %c0_13] : memref<8x256xf32, #tpu.memory_space<vmem>>, vector<8x256xf32>
      %c0_14 = arith.constant 0 : index
      %c0_15 = arith.constant 0 : index
      %15 = vector.load %arg5[%c0_14, %c0_15] : memref<1x256xf32, #tpu.memory_space<vmem>>, vector<1x256xf32>
      %16 = vector.broadcast %15 : vector<1x256xf32> to vector<8x256xf32>
      %17 = arith.addf %14, %16 : vector<8x256xf32>
      %18 = arith.addf %17, %13 : vector<8x256xf32>
      %cst_16 = arith.constant 0.000000e+00 : f32
      %19 = vector.broadcast %cst_16 : f32 to vector<8x256xf32>
      %20 = arith.maximumf %18, %19 : vector<8x256xf32>
      %21 = arith.truncf %20 : vector<8x256xf32> to vector<8x256xbf16>
      %c0_17 = arith.constant 0 : index
      %c0_18 = arith.constant 0 : index
      %22 = vector.load %arg7[%c0_17, %c0_18] : memref<8x256xbf16, #tpu.memory_space<vmem>>, vector<8x256xbf16>
      tpu.vector_store %arg7[%c0_17, %c0_18], %21 {strides = array<i32>} : memref<8x256xbf16, #tpu.memory_space<vmem>>, vector<8x256xbf16>,
    } else {
    }
    return
  }
  func.func @transform_0(%arg0: i32, %arg1: i32, %arg2: i32) -> (i32, i32) {
    %c0_i32 = arith.constant 0 : i32
    return %arg0, %arg2 : i32, i32
  }
  func.func @transform_1(%arg0: i32, %arg1: i32, %arg2: i32) -> (i32, i32) {
    %c0_i32 = arith.constant 0 : i32
    return %arg2, %arg1 : i32, i32
  }
  func.func @transform_2(%arg0: i32, %arg1: i32, %arg2: i32) -> (i32, i32) {
    %c0_i32 = arith.constant 0 : i32
    %c0_i32_0 = arith.constant 0 : i32
    return %c0_i32, %arg1 : i32, i32
  }
  func.func @transform_3(%arg0: i32, %arg1: i32, %arg2: i32) -> (i32, i32) {
    %c0_i32 = arith.constant 0 : i32
    return %arg0, %arg1 : i32, i32
  }
  func.func @transform_4(%arg0: i32, %arg1: i32, %arg2: i32) -> (i32, i32) {
    %c0_i32 = arith.constant 0 : i32
    return %arg0, %arg1 : i32, i32
  }
}

</mosaic_0001>

<llo_original>
// kernel: resnet_forward.12
$region0: #{resnet_forward.12}
  #allocation0 [shape = 'u32[]', space=smem, size = 0x4, offset = 0x4, fixed_abs, tag = 'smem constant byte address 0x4 - core index']
  #allocation1 [shape = 'u32[72,128]{1,0:T(1,128)}', space=vmem, size = 0x9000, scoped, tag = 'internal scratch']
  %s0 = inlined_call_operand.vmem [shape: bf16[2,5,5,64], index: 0, kind: input, shape index: {}]
  %s1 = inlined_call_operand.vmem [shape: bf16[2,5,5,64], index: 1, kind: input, shape index: {}]
  %s2 = inlined_call_operand.vmem [shape: bf16[2,5,5,64], index: 2, kind: input, shape index: {}]
  %s3 = inlined_call_operand.vmem [shape: bf16[2,5,5,64], index: 3, kind: input, shape index: {}]
  %s4 = inlined_call_operand.vmem [shape: bf16[2,4,4,64], index: 4, kind: output, shape index: {}]
  %s5 = sld [smem:[#allocation0]]
  $region49: #{resnet_forward.12} parent=0
    _
  %s7 = ssub.s32 1, %s5
  %s8 = scalar_select 0, %s7, %s5
  loop: start=0, step=1, limit=4
  $region2: #{resnet_forward.12} parent=0 // loop_pre_header
    _
  $region3: #{resnet_forward.12} parent=0 // loop_header
    %s10 = sphi 0, %s14
    %p11 = scmp.ge.s32.totalorder %s10, 4
    %s20 = sphi 0, %s22
    %s23 = sphi 0, %s20
    %s24 = sphi 0, %s23
    %s40 = sphi 0, %s24
    %s46 = sphi 0, %s48
    %s49 = sphi 0, %s46
    %s50 = sphi 0, %s49
    %s66 = sphi 0, %s50
    %s72 = sphi 0, %s74
    %s75 = sphi 0, %s72
    %s76 = sphi 0, %s75
    %s92 = sphi 0, %s76
    %s98 = sphi 0, %s100
    %s101 = sphi 0, %s98
    %s102 = sphi 0, %s101
    %s118 = sphi 0, %s102
    %s124 = sphi 0, %s126
    %s127 = sphi 0, %s124
    %s128 = sphi 0, %s127
    %s144 = sphi 0, %s128
  $region4: #{resnet_forward.12} parent=0 // loop_header_branch
    %13 = sbr.rel (%p11) target = $region8
  $region5: #{resnet_forward.12} parent=0 // loop_body
    %s15 = ssub.s32 %s10, 1
    %s16 = ssub.s32 %s10, 2
    %s17 = sadd.s32 %s10, 1
    %s18 = ssub.s32 %s10, %s17
    %p19 = scmp.eq.s32.totalorder %s18, 0
    %s21 = sadd.s32 %s20, 1
    %s22 = scalar_select %p19, %s20, %s21
    %p25 = pneg %p19
    %p26 = scmp.eq.s32.totalorder %s10, 1
    %p27 = por %p25, %p26
    %p28 = scmp.ne.s32.totalorder %s20, %s23
    %p29 = scmp.eq.s32.totalorder %s10, 0
    %p30 = por %p28, %p29
    %p31 = scmp.ne.s32.totalorder %s20, %s23
    %p32 = scmp.eq.s32.totalorder %s15, 1
    %p33 = por %p31, %p32
    %p34 = scmp.ne.s32.totalorder %s23, %s24
    %p35 = scmp.eq.s32.totalorder %s15, 0
    %p36 = por %p34, %p35
    %p37 = scmp.ne.s32.totalorder %s23, %s24
    %p38 = scmp.eq.s32.totalorder %s16, 1
    %p39 = por %p37, %p38
    %p41 = scmp.ne.s32.totalorder %s24, %s40
    %p42 = scmp.eq.s32.totalorder %s16, 0
    %p43 = por %p41, %p42
    %s44 = ssub.s32 %s10, %s17
    %p45 = scmp.eq.s32.totalorder %s44, 0
    %s47 = sadd.s32 %s46, 1
    %s48 = scalar_select %p45, %s46, %s47
    %p51 = pneg %p45
    %p52 = scmp.eq.s32.totalorder %s10, 1
    %p53 = por %p51, %p52
    %p54 = scmp.ne.s32.totalorder %s46, %s49
    %p55 = scmp.eq.s32.totalorder %s10, 0
    %p56 = por %p54, %p55
    %p57 = scmp.ne.s32.totalorder %s46, %s49
    %p58 = scmp.eq.s32.totalorder %s15, 1
    %p59 = por %p57, %p58
    %p60 = scmp.ne.s32.totalorder %s49, %s50
    %p61 = scmp.eq.s32.totalorder %s15, 0
    %p62 = por %p60, %p61
    %p63 = scmp.ne.s32.totalorder %s49, %s50
    %p64 = scmp.eq.s32.totalorder %s16, 1
    %p65 = por %p63, %p64
    %p67 = scmp.ne.s32.totalorder %s50, %s66
    %p68 = scmp.eq.s32.totalorder %s16, 0
    %p69 = por %p67, %p68
    %s70 = ssub.s32 %s10, %s17
    %p71 = scmp.eq.s32.totalorder %s70, 0
    %s73 = sadd.s32 %s72, 1
    %s74 = scalar_select %p71, %s72, %s73
    %p77 = pneg %p71
    %p78 = scmp.eq.s32.totalorder %s10, 1
    %p79 = por %p77, %p78
    %p80 = scmp.ne.s32.totalorder %s72, %s75
    %p81 = scmp.eq.s32.totalorder %s10, 0
    %p82 = por %p80, %p81
    %p83 = scmp.ne.s32.totalorder %s72, %s75
    %p84 = scmp.eq.s32.totalorder %s15, 1
    %p85 = por %p83, %p84
    %p86 = scmp.ne.s32.totalorder %s75, %s76
    %p87 = scmp.eq.s32.totalorder %s15, 0
    %p88 = por %p86, %p87
    %p89 = scmp.ne.s32.totalorder %s75, %s76
    %p90 = scmp.eq.s32.totalorder %s16, 1
    %p91 = por %p89, %p90
    %p93 = scmp.ne.s32.totalorder %s76, %s92
    %p94 = scmp.eq.s32.totalorder %s16, 0
    %p95 = por %p93, %p94
    %s96 = ssub.s32 %s10, %s17
    %p97 = scmp.eq.s32.totalorder %s96, 0
    %s99 = sadd.s32 %s98, 1
    %s100 = scalar_select %p97, %s98, %s99
    %p103 = pneg %p97
    %p104 = scmp.eq.s32.totalorder %s10, 1
    %p105 = por %p103, %p104
    %p106 = scmp.ne.s32.totalorder %s98, %s101
    %p107 = scmp.eq.s32.totalorder %s10, 0
    %p108 = por %p106, %p107
    %p109 = scmp.ne.s32.totalorder %s98, %s101
    %p110 = scmp.eq.s32.totalorder %s15, 1
    %p111 = por %p109, %p110
    %p112 = scmp.ne.s32.totalorder %s101, %s102
    %p113 = scmp.eq.s32.totalorder %s15, 0
    %p114 = por %p112, %p113
    %p115 = scmp.ne.s32.totalorder %s101, %s102
    %p116 = scmp.eq.s32.totalorder %s16, 1
    %p117 = por %p115, %p116
    %p119 = scmp.ne.s32.totalorder %s102, %s118
    %p120 = scmp.eq.s32.totalorder %s16, 0
    %p121 = por %p119, %p120
    %s122 = ssub.s32 %s10, %s17
    %p123 = scmp.eq.s32.totalorder %s122, 0
    %s125 = sadd.s32 %s124, 1
    %s126 = scalar_select %p123, %s124, %s125
    %p129 = pneg %p123
    %p130 = scmp.eq.s32.totalorder %s10, 1
    %p131 = por %p129, %p130
    %p132 = scmp.ne.s32.totalorder %s124, %s127
    %p133 = scmp.eq.s32.totalorder %s10, 0
    %p134 = por %p132, %p133
    %p135 = scmp.ne.s32.totalorder %s124, %s127
    %p136 = scmp.eq.s32.totalorder %s15, 1
    %p137 = por %p135, %p136
    %p138 = scmp.ne.s32.totalorder %s127, %s128
    %p139 = scmp.eq.s32.totalorder %s15, 0
    %p140 = por %p138, %p139
    %p141 = scmp.ne.s32.totalorder %s127, %s128
    %p142 = scmp.eq.s32.totalorder %s16, 1
    %p143 = por %p141, %p142
    %p145 = scmp.ne.s32.totalorder %s128, %s144
    %p146 = scmp.eq.s32.totalorder %s16, 0
    %p147 = por %p145, %p146
    %p148 = scmp.le.s32.totalorder 1, %s10
    %p149 = scmp.lt.s32.totalorder %s10, 3
    %p150 = pnand %p148, %p149
    %p151 = pneg %p150
    // Predicated region
    $region9: #{resnet_forward.12} parent=5 // pred_check
      _
    $region10: #{resnet_forward.12} parent=5 // pred_check_branch
      %153 = sbr.rel (%p150) target = $region12
    $region11: #{resnet_forward.12} parent=5 // pred_region
      %s154 = ssub.s32 %s10, 1
    $region12: #{resnet_forward.12} parent=5 // pred_fallthru
      _
    %p155 = scmp.lt.s32.totalorder %s10, 2
    // Predicated region
    $region13: #{resnet_forward.12} parent=5 // pred_check
      %p156 = pneg %p155
    $region14: #{resnet_forward.12} parent=5 // pred_check_branch
      %158 = sbr.rel (%p156) target = $region16
    $region15: #{resnet_forward.12} parent=5 // pred_region
      // Predicated region
      $region17: #{resnet_forward.12} parent=15 // pred_check
        %p159 = pneg %p30
      $region18: #{resnet_forward.12} parent=15 // pred_check_branch
        %161 = sbr.rel (%p159) target = $region20
      $region19: #{resnet_forward.12} parent=15 // pred_region
        %p162 = scmp.lt.s32.totalorder %s10, 1
        %s163 = scalar_select %p162, %s10, 1
        %s164 = smul.addr %s163, 5
        %s165 = smul.addr %s164, 4
        %s166 = scalar_lea.vmem %s0, %s165
      $region20: #{resnet_forward.12} parent=15 // pred_fallthru
        _
      // Predicated region
      $region21: #{resnet_forward.12} parent=15 // pred_check
        %p167 = pneg %p56
      $region22: #{resnet_forward.12} parent=15 // pred_check_branch
        %169 = sbr.rel (%p167) target = $region24
      $region23: #{resnet_forward.12} parent=15 // pred_region
        %p170 = scmp.lt.s32.totalorder %s10, 1
        %s171 = scalar_select %p170, %s10, 1
        %s172 = smul.addr %s171, 5
        %s173 = smul.addr %s172, 4
        %s174 = scalar_lea.vmem %s1, %s173
      $region24: #{resnet_forward.12} parent=15 // pred_fallthru
        _
      // Predicated region
      $region25: #{resnet_forward.12} parent=15 // pred_check
        %p175 = pneg %p82
      $region26: #{resnet_forward.12} parent=15 // pred_check_branch
        %177 = sbr.rel (%p175) target = $region28
      $region27: #{resnet_forward.12} parent=15 // pred_region
        %p178 = scmp.lt.s32.totalorder %s10, 1
        %s179 = scalar_select %p178, %s10, 1
        %s180 = smul.addr %s179, 5
        %s181 = smul.addr %s180, 4
        %s182 = scalar_lea.vmem %s2, %s181
      $region28: #{resnet_forward.12} parent=15 // pred_fallthru
        _
      // Predicated region
      $region29: #{resnet_forward.12} parent=15 // pred_check
        %p183 = pneg %p108
      $region30: #{resnet_forward.12} parent=15 // pred_check_branch
        %185 = sbr.rel (%p183) target = $region32
      $region31: #{resnet_forward.12} parent=15 // pred_region
        %p186 = scmp.lt.s32.totalorder %s10, 1
        %s187 = scalar_select %p186, %s10, 1
        %s188 = smul.addr %s187, 5
        %s189 = smul.addr %s188, 4
        %s190 = scalar_lea.vmem %s3, %s189
      $region32: #{resnet_forward.12} parent=15 // pred_fallthru
        _
    $region16: #{resnet_forward.12} parent=5 // pred_fallthru
      _
    %p191 = scmp.le.s32.totalorder 1, %s10
    %p192 = scmp.lt.s32.totalorder %s10, 3
    %p193 = pnand %p191, %p192
    %p194 = pneg %p193
    // Predicated region
    $region33: #{resnet_forward.12} parent=5 // pred_check
      _
    $region34: #{resnet_forward.12} parent=5 // pred_check_branch
      %196 = sbr.rel (%p193) target = $region36
    $region35: #{resnet_forward.12} parent=5 // pred_region
      %s197 = ssub.s32 %s10, 1
      %p198 = scmp.lt.s32.totalorder %s15, 1
      %s199 = scalar_select %p198, %s15, 1
      %s200 = smul.addr %s199, 5
      %s201 = smul.addr %s200, 4
      %s202 = scalar_lea.vmem %s0, %s201
      %p203 = pneg %p36
      %p204 = pneg %p33
      %p205 = scmp.lt.s32.totalorder %s15, 1
      %s206 = scalar_select %p205, %s15, 1
      %s207 = smul.addr %s206, 5
      %s208 = smul.addr %s207, 4
      %s209 = scalar_lea.vmem %s1, %s208
      %p210 = pneg %p62
      %p211 = pneg %p59
      %p212 = scmp.lt.s32.totalorder %s15, 1
      %s213 = scalar_select %p212, %s15, 1
      %s214 = smul.addr %s213, 5
      %s215 = smul.addr %s214, 4
      %s216 = scalar_lea.vmem %s2, %s215
      %p217 = pneg %p88
      %p218 = pneg %p85
      %p219 = scmp.lt.s32.totalorder %s15, 1
      %s220 = scalar_select %p219, %s15, 1
      %s221 = smul.addr %s220, 5
      %s222 = smul.addr %s221, 4
      %s223 = scalar_lea.vmem %s3, %s222
      %p224 = pneg %p114
      %p225 = pneg %p111
      %p226 = pneg %p140
      %p227 = pneg %p137
      %p228 = scmp.lt.s32.totalorder %s15, 1
      %s229 = scalar_select %p228, %s15, 1
      %s230 = smul.addr %s229, 4
      %s231 = smul.addr %s230, 2
      %s232 = scalar_lea.vmem %s4, %s231
      %p233 = scmp.lt.s32.totalorder %s15, 1
      %s234 = scalar_select %p233, %s15, 1
      %s235 = smul.addr %s234, 5
      %s236 = smul.addr %s235, 4
      %s237 = scalar_lea.vmem %s0, %s236
      %p238 = scmp.lt.s32.totalorder %s15, 1
      %s239 = scalar_select %p238, %s15, 1
      %s240 = smul.addr %s239, 5
      %s241 = smul.addr %s240, 4
      %s242 = scalar_lea.vmem %s1, %s241
      %p243 = scmp.lt.s32.totalorder %s15, 1
      %s244 = scalar_select %p243, %s15, 1
      %s245 = smul.addr %s244, 5
      %s246 = smul.addr %s245, 4
      %s247 = scalar_lea.vmem %s2, %s246
      %p248 = scmp.lt.s32.totalorder %s15, 1
      %s249 = scalar_select %p248, %s15, 1
      %s250 = smul.addr %s249, 5
      %s251 = smul.addr %s250, 4
      %s252 = scalar_lea.vmem %s3, %s251
      %p253 = scmp.lt.s32.totalorder %s15, 1
      %s254 = scalar_select %p253, %s15, 1
      %s255 = smul.addr %s254, 4
      %s256 = smul.addr %s255, 2
      %s257 = scalar_lea.vmem %s4, %s256
      %v258 = vld [vmem:[%s237] sm:$0x7]
      %v259 = vld [vmem:[%s237 + $0x4] sm:$0x7]
      %v260 = vld [vmem:[%s237 + $0x8] sm:$0x7]
      %v261 = vld [vmem:[%s237 + $0xc] sm:$0x7]
      %v262 = vld [vmem:[%s237 + $0x10] sm:$0x7]
      %v263 = vld [vmem:[%s242] sm:$0x7]
      %v264 = vld [vmem:[%s242 + $0x4] sm:$0x7]
      %v265 = vld [vmem:[%s242 + $0x8] sm:$0x7]
      %v266 = vld [vmem:[%s242 + $0xc] sm:$0x7]
      %v267 = vld [vmem:[%s242 + $0x10] sm:$0x7]
      %v268 = vld [vmem:[%s247] sm:$0x7]
      %v269 = vld [vmem:[%s247 + $0x4] sm:$0x7]
      %v270 = vld [vmem:[%s247 + $0x8] sm:$0x7]
      %v271 = vld [vmem:[%s247 + $0xc] sm:$0x7]
      %v272 = vld [vmem:[%s252] sm:$0x7]
      %v273 = vld [vmem:[%s252 + $0x4] sm:$0x7]
      %v274 = vld [vmem:[%s252 + $0x8] sm:$0x7]
      %v275 = vld [vmem:[%s252 + $0xc] sm:$0x7]
      %v276 = vunpack.c.l.bf16 %v258
      %v277 = vunpack.c.l.bf16 %v259
      %v278 = vunpack.c.l.bf16 %v260
      %v279 = vunpack.c.l.bf16 %v261
      %v284 = vrot.slane %v276, 1
      %v285 = vrot.slane %v277, 1
      %v286 = vrot.slane %v278, 1
      %v287 = vrot.slane %v279, 1
      %v292 = vmax.f32 %v276, %v284
      %v293 = vmax.f32 %v277, %v285
      %v294 = vmax.f32 %v278, %v286
      %v295 = vmax.f32 %v279, %v287
      %v296 = vpack.c.bf16 %v292, %v292
      %v297 = vpack.c.bf16 %v293, %v293
      %v298 = vpack.c.bf16 %v294, %v294
      %v299 = vpack.c.bf16 %v295, %v295
      %v300 = vunpack.c.l.bf16 %v296
      %v301 = vunpack.c.l.bf16 %v297
      %v302 = vunpack.c.l.bf16 %v298
      %v303 = vunpack.c.l.bf16 %v299
      %v304 = vunpack.c.l.bf16 %v262
      %v305 = vmax.f32 %v300, %v277
      %v306 = vmax.f32 %v301, %v278
      %v307 = vmax.f32 %v302, %v279
      %v308 = vmax.f32 %v303, %v304
      %v309 = vpack.c.bf16 %v305, %v305
      %v310 = vpack.c.bf16 %v306, %v306
      %v311 = vpack.c.bf16 %v307, %v307
      %v312 = vpack.c.bf16 %v308, %v308
      %v313 = vunpack.c.l.bf16 %v309
      %v314 = vunpack.c.l.bf16 %v310
      %v315 = vunpack.c.l.bf16 %v311
      %v316 = vunpack.c.l.bf16 %v312
      %v318 = vrot.slane %v304, 1
      %v320 = vmax.f32 %v313, %v285
      %v321 = vmax.f32 %v314, %v286
      %v322 = vmax.f32 %v315, %v287
      %v323 = vmax.f32 %v316, %v318
      %v324 = vpack.c.bf16 %v320, %v320
      %v325 = vpack.c.bf16 %v321, %v321
      %v326 = vpack.c.bf16 %v322, %v322
      %v327 = vpack.c.bf16 %v323, %v323
      %v328 = vunpack.c.l.bf16 %v324
      %v329 = vunpack.c.l.bf16 %v325
      %v330 = vunpack.c.l.bf16 %v326
      %v331 = vunpack.c.l.bf16 %v327
      %v332 = vunpack.c.l.bf16 %v263
      %v333 = vunpack.c.l.bf16 %v264
      %v334 = vunpack.c.l.bf16 %v265
      %v335 = vunpack.c.l.bf16 %v266
      %v336 = vmax.f32 %v328, %v332
      %v337 = vmax.f32 %v329, %v333
      %v338 = vmax.f32 %v330, %v334
      %v339 = vmax.f32 %v331, %v335
      %v340 = vpack.c.bf16 %v336, %v336
      %v341 = vpack.c.bf16 %v337, %v337
      %v342 = vpack.c.bf16 %v338, %v338
      %v343 = vpack.c.bf16 %v339, %v339
      %v344 = vunpack.c.l.bf16 %v340
      %v345 = vunpack.c.l.bf16 %v341
      %v346 = vunpack.c.l.bf16 %v342
      %v347 = vunpack.c.l.bf16 %v343
      %v348 = vunpack.c.l.bf16 %v267
      %v349 = vmax.f32 %v344, %v333
      %v350 = vmax.f32 %v345, %v334
      %v351 = vmax.f32 %v346, %v335
      %v352 = vmax.f32 %v347, %v348
      %v353 = vpack.c.bf16 %v349, %v349
      %v354 = vpack.c.bf16 %v350, %v350
      %v355 = vpack.c.bf16 %v351, %v351
      %v356 = vpack.c.bf16 %v352, %v352
      %v357 = vunpack.c.l.bf16 %v353
      %v358 = vunpack.c.l.bf16 %v354
      %v359 = vunpack.c.l.bf16 %v355
      %v360 = vunpack.c.l.bf16 %v356
      %v361 = vunpack.c.l.bf16 %v268
      %v362 = vunpack.c.l.bf16 %v269
      %v363 = vunpack.c.l.bf16 %v270
      %v364 = vunpack.c.l.bf16 %v271
      %v365 = vmax.f32 %v357, %v361
      %v366 = vmax.f32 %v358, %v362
      %v367 = vmax.f32 %v359, %v363
      %v368 = vmax.f32 %v360, %v364
      %v369 = vpack.c.bf16 %v365, %v365
      %v370 = vpack.c.bf16 %v366, %v366
      %v371 = vpack.c.bf16 %v367, %v367
      %v372 = vpack.c.bf16 %v368, %v368
      %v373 = vunpack.c.l.bf16 %v369
      %v374 = vunpack.c.l.bf16 %v370
      %v375 = vunpack.c.l.bf16 %v371
      %v376 = vunpack.c.l.bf16 %v372
      %v381 = vrot.slane %v361, 1
      %v382 = vrot.slane %v362, 1
      %v383 = vrot.slane %v363, 1
      %v384 = vrot.slane %v364, 1
      %v389 = vmax.f32 %v373, %v381
      %v390 = vmax.f32 %v374, %v382
      %v391 = vmax.f32 %v375, %v383
      %v392 = vmax.f32 %v376, %v384
      %v393 = vpack.c.bf16 %v389, %v389
      %v394 = vpack.c.bf16 %v390, %v390
      %v395 = vpack.c.bf16 %v391, %v391
      %v396 = vpack.c.bf16 %v392, %v392
      %v397 = vunpack.c.l.bf16 %v393
      %v398 = vunpack.c.l.bf16 %v394
      %v399 = vunpack.c.l.bf16 %v395
      %v400 = vunpack.c.l.bf16 %v396
      %v401 = vunpack.c.l.bf16 %v272
      %v402 = vunpack.c.l.bf16 %v273
      %v403 = vunpack.c.l.bf16 %v274
      %v404 = vunpack.c.l.bf16 %v275
      %v405 = vmax.f32 %v397, %v401
      %v406 = vmax.f32 %v398, %v402
      %v407 = vmax.f32 %v399, %v403
      %v408 = vmax.f32 %v400, %v404
      %v409 = vpack.c.bf16 %v405, %v405
      %v410 = vpack.c.bf16 %v406, %v406
      %v411 = vpack.c.bf16 %v407, %v407
      %v412 = vpack.c.bf16 %v408, %v408
      %vm413 = vcmask 517120
      %414 = vst.msk [vmem:[%s257] sm:$0x3] %vm413, %v409
      %415 = vst.msk [vmem:[%s257 + $0x2] sm:$0x3] %vm413, %v410
      %416 = vst.msk [vmem:[%s257 + $0x4] sm:$0x3] %vm413, %v411
      %417 = vst.msk [vmem:[%s257 + $0x6] sm:$0x3] %vm413, %v412
      %p418 = scmp.lt.s32.totalorder %s15, 1
      %s419 = scalar_select %p418, %s15, 1
      %s420 = smul.addr %s419, 4
      %s421 = smul.addr %s420, 2
      %s422 = scalar_lea.vmem %s4, %s421
      // Predicated region
      $region37: #{resnet_forward.12} parent=35 // pred_check
        %p423 = pneg %p137
      $region38: #{resnet_forward.12} parent=35 // pred_check_branch
        %425 = sbr.rel (%p423) target = $region40
      $region39: #{resnet_forward.12} parent=35 // pred_region
        _
      $region40: #{resnet_forward.12} parent=35 // pred_fallthru
        _
    $region36: #{resnet_forward.12} parent=5 // pred_fallthru
      _
    %p426 = scmp.le.s32.totalorder 2, %s10
    // Predicated region
    $region41: #{resnet_forward.12} parent=5 // pred_check
      %p427 = pneg %p426
    $region42: #{resnet_forward.12} parent=5 // pred_check_branch
      %429 = sbr.rel (%p427) target = $region44
    $region43: #{resnet_forward.12} parent=5 // pred_region
      %s430 = ssub.s32 %s10, 2
      // Predicated region
      $region45: #{resnet_forward.12} parent=43 // pred_check
        %p431 = pneg %p143
      $region46: #{resnet_forward.12} parent=43 // pred_check_branch
        %433 = sbr.rel (%p431) target = $region48
      $region47: #{resnet_forward.12} parent=43 // pred_region
        %p434 = scmp.lt.s32.totalorder %s16, 1
        %s435 = scalar_select %p434, %s16, 1
        %s436 = smul.addr %s435, 4
        %s437 = smul.addr %s436, 2
        %s438 = scalar_lea.vmem %s4, %s437
      $region48: #{resnet_forward.12} parent=43 // pred_fallthru
        _
    $region44: #{resnet_forward.12} parent=5 // pred_fallthru
      _
  $region6: #{resnet_forward.12} parent=0 // loop_footer
    %s14 = sadd.s32 1, %s10
  $region7: #{resnet_forward.12} parent=0 // loop_footer_branch
    %9 = sbr.rel target = $region3
  $region8: #{resnet_forward.12} parent=0 // loop_exit
    _

// kernel: resnet_forward.11
$region0: #{resnet_forward.11}
  #allocation0 [shape = 'u32[]', space=smem, size = 0x4, offset = 0x4, fixed_abs, tag = 'smem constant byte address 0x4 - core index']
  #allocation1 [shape = 'u32[72,128]{1,0:T(1,128)}', space=vmem, size = 0x9000, scoped, tag = 'internal scratch']
  #allocation2 [shape = 'f32[128,128]{1,0:T(8,128)}', space=vmem, size = 0x10000, scoped, tag = 'scratch operand']
  %s0 = inlined_call_operand.vmem [shape: bf16[128,256], index: 0, kind: input, shape index: {}]
  %s1 = inlined_call_operand.vmem [shape: bf16[256,128], index: 1, kind: input, shape index: {}]
  %s2 = inlined_call_operand.vmem [shape: f32[1,128], index: 2, kind: input, shape index: {}]
  %s3 = inlined_call_operand.vmem [shape: bf16[128,128], index: 3, kind: output, shape index: {}]
  %s4 = sld [smem:[#allocation0]]
  $region30: #{resnet_forward.11} parent=0
    _
  %s6 = ssub.s32 1, %s4
  %s7 = scalar_select 0, %s6, %s4
  // Predicated region
  $region2: #{resnet_forward.11} parent=0 // pred_check
    _
  $region3: #{resnet_forward.11} parent=0 // pred_check_branch
    %9 = sbr.rel (0) target = $region5
  $region4: #{resnet_forward.11} parent=0 // pred_region
    _
  $region5: #{resnet_forward.11} parent=0 // pred_fallthru
    _
  // Predicated region
  $region6: #{resnet_forward.11} parent=0 // pred_check
    _
  $region7: #{resnet_forward.11} parent=0 // pred_check_branch
    %11 = sbr.rel (0) target = $region9
  $region8: #{resnet_forward.11} parent=0 // pred_region
    _
  $region9: #{resnet_forward.11} parent=0 // pred_fallthru
    _
  // Predicated region
  $region10: #{resnet_forward.11} parent=0 // pred_check
    _
  $region11: #{resnet_forward.11} parent=0 // pred_check_branch
    %13 = sbr.rel (0) target = $region13
  $region12: #{resnet_forward.11} parent=0 // pred_region
    _
  $region13: #{resnet_forward.11} parent=0 // pred_fallthru
    _
  %p14 = scmp.eq.s32.totalorder 0, 0
  // Predicated region
  $region14: #{resnet_forward.11} parent=0 // pred_check
    %p15 = pneg %p14
  $region15: #{resnet_forward.11} parent=0 // pred_check_branch
    %17 = sbr.rel (%p15) target = $region17
  $region16: #{resnet_forward.11} parent=0 // pred_region
    %18 = vst [vmem:[#allocation2] sm:$0xff] 0.0
    %19 = vst [vmem:[#allocation2 + $0x8] sm:$0xff] 0.0
    %20 = vst [vmem:[#allocation2 + $0x10] sm:$0xff] 0.0
    %21 = vst [vmem:[#allocation2 + $0x18] sm:$0xff] 0.0
    %22 = vst [vmem:[#allocation2 + $0x20] sm:$0xff] 0.0
    %23 = vst [vmem:[#allocation2 + $0x28] sm:$0xff] 0.0
    %24 = vst [vmem:[#allocation2 + $0x30] sm:$0xff] 0.0
    %25 = vst [vmem:[#allocation2 + $0x38] sm:$0xff] 0.0
    %26 = vst [vmem:[#allocation2 + $0x40] sm:$0xff] 0.0
    %27 = vst [vmem:[#allocation2 + $0x48] sm:$0xff] 0.0
    %28 = vst [vmem:[#allocation2 + $0x50] sm:$0xff] 0.0
    %29 = vst [vmem:[#allocation2 + $0x58] sm:$0xff] 0.0
    %30 = vst [vmem:[#allocation2 + $0x60] sm:$0xff] 0.0
    %31 = vst [vmem:[#allocation2 + $0x68] sm:$0xff] 0.0
    %32 = vst [vmem:[#allocation2 + $0x70] sm:$0xff] 0.0
    %33 = vst [vmem:[#allocation2 + $0x78] sm:$0xff] 0.0
  $region17: #{resnet_forward.11} parent=0 // pred_fallthru
    _
  %v34 = vld [vmem:[#allocation2] sm:$0xff]
  %v35 = vld [vmem:[#allocation2 + $0x8] sm:$0xff]
  %v36 = vld [vmem:[#allocation2 + $0x10] sm:$0xff]
  %v37 = vld [vmem:[#allocation2 + $0x18] sm:$0xff]
  %v38 = vld [vmem:[#allocation2 + $0x20] sm:$0xff]
  %v39 = vld [vmem:[#allocation2 + $0x28] sm:$0xff]
  %v40 = vld [vmem:[#allocation2 + $0x30] sm:$0xff]
  %v41 = vld [vmem:[#allocation2 + $0x38] sm:$0xff]
  %v42 = vld [vmem:[#allocation2 + $0x40] sm:$0xff]
  %v43 = vld [vmem:[#allocation2 + $0x48] sm:$0xff]
  %v44 = vld [vmem:[#allocation2 + $0x50] sm:$0xff]
  %v45 = vld [vmem:[#allocation2 + $0x58] sm:$0xff]
  %v46 = vld [vmem:[#allocation2 + $0x60] sm:$0xff]
  %v47 = vld [vmem:[#allocation2 + $0x68] sm:$0xff]
  %v48 = vld [vmem:[#allocation2 + $0x70] sm:$0xff]
  %v49 = vld [vmem:[#allocation2 + $0x78] sm:$0xff]
  %v50 = vld [vmem:[%s0] sm:$0xff]
  %v51 = vld [vmem:[%s0 + $0x8] sm:$0xff]
  %v52 = vld [vmem:[%s0 + $0x10] sm:$0xff]
  %v53 = vld [vmem:[%s0 + $0x18] sm:$0xff]
  %v54 = vld [vmem:[%s0 + $0x20] sm:$0xff]
  %v55 = vld [vmem:[%s0 + $0x28] sm:$0xff]
  %v56 = vld [vmem:[%s0 + $0x30] sm:$0xff]
  %v57 = vld [vmem:[%s0 + $0x38] sm:$0xff]
  %v58 = vld [vmem:[%s0 + $0x40] sm:$0xff]
  %v59 = vld [vmem:[%s0 + $0x48] sm:$0xff]
  %v60 = vld [vmem:[%s0 + $0x50] sm:$0xff]
  %v61 = vld [vmem:[%s0 + $0x58] sm:$0xff]
  %v62 = vld [vmem:[%s0 + $0x60] sm:$0xff]
  %v63 = vld [vmem:[%s0 + $0x68] sm:$0xff]
  %v64 = vld [vmem:[%s0 + $0x70] sm:$0xff]
  %v65 = vld [vmem:[%s0 + $0x78] sm:$0xff]
  %v66 = vld [vmem:[%s1] sm:$0xf]
  %v67 = vld [vmem:[%s1 + $0x4] sm:$0xf]
  %v68 = vld [vmem:[%s1 + $0x8] sm:$0xf]
  %v69 = vld [vmem:[%s1 + $0xc] sm:$0xf]
  %v70 = vld [vmem:[%s1 + $0x10] sm:$0xf]
  %v71 = vld [vmem:[%s1 + $0x14] sm:$0xf]
  %v72 = vld [vmem:[%s1 + $0x18] sm:$0xf]
  %v73 = vld [vmem:[%s1 + $0x1c] sm:$0xf]
  %v74 = vld [vmem:[%s1 + $0x20] sm:$0xf]
  %v75 = vld [vmem:[%s1 + $0x24] sm:$0xf]
  %v76 = vld [vmem:[%s1 + $0x28] sm:$0xf]
  %v77 = vld [vmem:[%s1 + $0x2c] sm:$0xf]
  %v78 = vld [vmem:[%s1 + $0x30] sm:$0xf]
  %v79 = vld [vmem:[%s1 + $0x34] sm:$0xf]
  %v80 = vld [vmem:[%s1 + $0x38] sm:$0xf]
  %v81 = vld [vmem:[%s1 + $0x3c] sm:$0xf]
  %v82 = vld [vmem:[%s1 + $0x40] sm:$0xf]
  %v83 = vld [vmem:[%s1 + $0x44] sm:$0xf]
  %v84 = vld [vmem:[%s1 + $0x48] sm:$0xf]
  %v85 = vld [vmem:[%s1 + $0x4c] sm:$0xf]
  %v86 = vld [vmem:[%s1 + $0x50] sm:$0xf]
  %v87 = vld [vmem:[%s1 + $0x54] sm:$0xf]
  %v88 = vld [vmem:[%s1 + $0x58] sm:$0xf]
  %v89 = vld [vmem:[%s1 + $0x5c] sm:$0xf]
  %v90 = vld [vmem:[%s1 + $0x60] sm:$0xf]
  %v91 = vld [vmem:[%s1 + $0x64] sm:$0xf]
  %v92 = vld [vmem:[%s1 + $0x68] sm:$0xf]
  %v93 = vld [vmem:[%s1 + $0x6c] sm:$0xf]
  %v94 = vld [vmem:[%s1 + $0x70] sm:$0xf]
  %v95 = vld [vmem:[%s1 + $0x74] sm:$0xf]
  %v96 = vld [vmem:[%s1 + $0x78] sm:$0xf]
  %v97 = vld [vmem:[%s1 + $0x7c] sm:$0xf]
  %v114 = vunpack.c.l.b16 %v50
  %v115 = vunpack.c.h.b16 %v50
  %v116 = vunpack.c.l.b16 %v51
  %v117 = vunpack.c.h.b16 %v51
  %v118 = vunpack.c.l.b16 %v52
  %v119 = vunpack.c.h.b16 %v52
  %v120 = vunpack.c.l.b16 %v53
  %v121 = vunpack.c.h.b16 %v53
  %v122 = vunpack.c.l.b16 %v54
  %v123 = vunpack.c.h.b16 %v54
  %v124 = vunpack.c.l.b16 %v55
  %v125 = vunpack.c.h.b16 %v55
  %v126 = vunpack.c.l.b16 %v56
  %v127 = vunpack.c.h.b16 %v56
  %v128 = vunpack.c.l.b16 %v57
  %v129 = vunpack.c.h.b16 %v57
  %v130 = vunpack.c.l.b16 %v58
  %v131 = vunpack.c.h.b16 %v58
  %v132 = vunpack.c.l.b16 %v59
  %v133 = vunpack.c.h.b16 %v59
  %v134 = vunpack.c.l.b16 %v60
  %v135 = vunpack.c.h.b16 %v60
  %v136 = vunpack.c.l.b16 %v61
  %v137 = vunpack.c.h.b16 %v61
  %v138 = vunpack.c.l.b16 %v62
  %v139 = vunpack.c.h.b16 %v62
  %v140 = vunpack.c.l.b16 %v63
  %v141 = vunpack.c.h.b16 %v63
  %v142 = vunpack.c.l.b16 %v64
  %v143 = vunpack.c.h.b16 %v64
  %v144 = vunpack.c.l.b16 %v65
  %v145 = vunpack.c.h.b16 %v65
  %v146 = vpack.c.b16 %v116, %v114
  %v147 = vpack.c.b16 %v117, %v115
  %v148 = vpack.c.b16 %v120, %v118
  %v149 = vpack.c.b16 %v121, %v119
  %v150 = vpack.c.b16 %v124, %v122
  %v151 = vpack.c.b16 %v125, %v123
  %v152 = vpack.c.b16 %v128, %v126
  %v153 = vpack.c.b16 %v129, %v127
  %v154 = vpack.c.b16 %v132, %v130
  %v155 = vpack.c.b16 %v133, %v131
  %v156 = vpack.c.b16 %v136, %v134
  %v157 = vpack.c.b16 %v137, %v135
  %v158 = vpack.c.b16 %v140, %v138
  %v159 = vpack.c.b16 %v141, %v139
  %v160 = vpack.c.b16 %v144, %v142
  %v161 = vpack.c.b16 %v145, %v143
  %v210 = vunpack.c.l.b16 %v66
  %v211 = vunpack.c.l.b16 %v67
  %v212 = vunpack.c.l.b16 %v68
  %v213 = vunpack.c.l.b16 %v69
  %v214 = vunpack.c.l.b16 %v70
  %v215 = vunpack.c.l.b16 %v71
  %v216 = vunpack.c.l.b16 %v72
  %v217 = vunpack.c.l.b16 %v73
  %v218 = vunpack.c.l.b16 %v74
  %v219 = vunpack.c.l.b16 %v75
  %v220 = vunpack.c.l.b16 %v76
  %v221 = vunpack.c.l.b16 %v77
  %v222 = vunpack.c.l.b16 %v78
  %v223 = vunpack.c.l.b16 %v79
  %v224 = vunpack.c.l.b16 %v80
  %v225 = vunpack.c.l.b16 %v81
  %v226 = vunpack.c.l.b16 %v82
  %v227 = vunpack.c.l.b16 %v83
  %v228 = vunpack.c.l.b16 %v84
  %v229 = vunpack.c.l.b16 %v85
  %v230 = vunpack.c.l.b16 %v86
  %v231 = vunpack.c.l.b16 %v87
  %v232 = vunpack.c.l.b16 %v88
  %v233 = vunpack.c.l.b16 %v89
  %v234 = vunpack.c.l.b16 %v90
  %v235 = vunpack.c.l.b16 %v91
  %v236 = vunpack.c.l.b16 %v92
  %v237 = vunpack.c.l.b16 %v93
  %v238 = vunpack.c.l.b16 %v94
  %v239 = vunpack.c.l.b16 %v95
  %v240 = vunpack.c.l.b16 %v96
  %v241 = vunpack.c.l.b16 %v97
  %v242 = vpack.c.b16 %v211, %v210
  %v243 = vpack.c.b16 %v213, %v212
  %v244 = vpack.c.b16 %v215, %v214
  %v245 = vpack.c.b16 %v217, %v216
  %v246 = vpack.c.b16 %v219, %v218
  %v247 = vpack.c.b16 %v221, %v220
  %v248 = vpack.c.b16 %v223, %v222
  %v249 = vpack.c.b16 %v225, %v224
  %v250 = vpack.c.b16 %v227, %v226
  %v251 = vpack.c.b16 %v229, %v228
  %v252 = vpack.c.b16 %v231, %v230
  %v253 = vpack.c.b16 %v233, %v232
  %v254 = vpack.c.b16 %v235, %v234
  %v255 = vpack.c.b16 %v237, %v236
  %v256 = vpack.c.b16 %v239, %v238
  %v257 = vpack.c.b16 %v241, %v240
  %274 = vmatpush.bf16.msra.mxu0 %v249
  %275 = vmatpush.bf16.msra.mxu0 %v248
  %276 = vmatpush.bf16.msra.mxu0 %v247
  %277 = vmatpush.bf16.msra.mxu0 %v246
  %278 = vmatpush.bf16.msra.mxu0 %v245
  %279 = vmatpush.bf16.msra.mxu0 %v244
  %280 = vmatpush.bf16.msra.mxu0 %v243
  %281 = vmatpush.bf16.msra.mxu0 %v242
  %282 = vmatmul.bf16.gmra.mxu0 %v146
  %v283 = vpop.f32.mrf.mxu0
  %v284 = vadd.f32 0.0, %v283
  %v285 = vpop.f32.mrf.mxu0
  %v286 = vadd.f32 0.0, %v285
  %287 = vmatmul.bf16.gmra.mxu0 %v148
  %v288 = vpop.f32.mrf.mxu0
  %v289 = vadd.f32 0.0, %v288
  %v290 = vpop.f32.mrf.mxu0
  %v291 = vadd.f32 0.0, %v290
  %292 = vmatmul.bf16.gmra.mxu0 %v150
  %v293 = vpop.f32.mrf.mxu0
  %v294 = vadd.f32 0.0, %v293
  %v295 = vpop.f32.mrf.mxu0
  %v296 = vadd.f32 0.0, %v295
  %297 = vmatmul.bf16.gmra.mxu0 %v152
  %v298 = vpop.f32.mrf.mxu0
  %v299 = vadd.f32 0.0, %v298
  %v300 = vpop.f32.mrf.mxu0
  %v301 = vadd.f32 0.0, %v300
  %302 = vmatmul.bf16.gmra.mxu0 %v154
  %v303 = vpop.f32.mrf.mxu0
  %v304 = vadd.f32 0.0, %v303
  %v305 = vpop.f32.mrf.mxu0
  %v306 = vadd.f32 0.0, %v305
  %307 = vmatmul.bf16.gmra.mxu0 %v156
  %v308 = vpop.f32.mrf.mxu0
  %v309 = vadd.f32 0.0, %v308
  %v310 = vpop.f32.mrf.mxu0
  %v311 = vadd.f32 0.0, %v310
  %312 = vmatmul.bf16.gmra.mxu0 %v158
  %v313 = vpop.f32.mrf.mxu0
  %v314 = vadd.f32 0.0, %v313
  %v315 = vpop.f32.mrf.mxu0
  %v316 = vadd.f32 0.0, %v315
  %317 = vmatmul.bf16.gmra.mxu0 %v160
  %v318 = vpop.f32.mrf.mxu0
  %v319 = vadd.f32 0.0, %v318
  %v320 = vpop.f32.mrf.mxu0
  %v321 = vadd.f32 0.0, %v320
  %322 = vdwg.mxu0
  %323 = vmatpush.bf16.msra.mxu0 %v257
  %324 = vmatpush.bf16.msra.mxu0 %v256
  %325 = vmatpush.bf16.msra.mxu0 %v255
  %326 = vmatpush.bf16.msra.mxu0 %v254
  %327 = vmatpush.bf16.msra.mxu0 %v253
  %328 = vmatpush.bf16.msra.mxu0 %v252
  %329 = vmatpush.bf16.msra.mxu0 %v251
  %330 = vmatpush.bf16.msra.mxu0 %v250
  %331 = vmatmul.bf16.gmra.mxu0 %v147
  %v332 = vpop.f32.mrf.mxu0
  %v333 = vadd.f32 %v284, %v332
  %v334 = vpop.f32.mrf.mxu0
  %v335 = vadd.f32 %v286, %v334
  %336 = vmatmul.bf16.gmra.mxu0 %v149
  %v337 = vpop.f32.mrf.mxu0
  %v338 = vadd.f32 %v289, %v337
  %v339 = vpop.f32.mrf.mxu0
  %v340 = vadd.f32 %v291, %v339
  %341 = vmatmul.bf16.gmra.mxu0 %v151
  %v342 = vpop.f32.mrf.mxu0
  %v343 = vadd.f32 %v294, %v342
  %v344 = vpop.f32.mrf.mxu0
  %v345 = vadd.f32 %v296, %v344
  %346 = vmatmul.bf16.gmra.mxu0 %v153
  %v347 = vpop.f32.mrf.mxu0
  %v348 = vadd.f32 %v299, %v347
  %v349 = vpop.f32.mrf.mxu0
  %v350 = vadd.f32 %v301, %v349
  %351 = vmatmul.bf16.gmra.mxu0 %v155
  %v352 = vpop.f32.mrf.mxu0
  %v353 = vadd.f32 %v304, %v352
  %v354 = vpop.f32.mrf.mxu0
  %v355 = vadd.f32 %v306, %v354
  %356 = vmatmul.bf16.gmra.mxu0 %v157
  %v357 = vpop.f32.mrf.mxu0
  %v358 = vadd.f32 %v309, %v357
  %v359 = vpop.f32.mrf.mxu0
  %v360 = vadd.f32 %v311, %v359
  %361 = vmatmul.bf16.gmra.mxu0 %v159
  %v362 = vpop.f32.mrf.mxu0
  %v363 = vadd.f32 %v314, %v362
  %v364 = vpop.f32.mrf.mxu0
  %v365 = vadd.f32 %v316, %v364
  %366 = vmatmul.bf16.gmra.mxu0 %v161
  %v367 = vpop.f32.mrf.mxu0
  %v368 = vadd.f32 %v319, %v367
  %v369 = vpop.f32.mrf.mxu0
  %v370 = vadd.f32 %v321, %v369
  %371 = vdwg.mxu0
  %v372 = vadd.f32 %v34, %v333
  %v373 = vadd.f32 %v35, %v335
  %v374 = vadd.f32 %v36, %v338
  %v375 = vadd.f32 %v37, %v340
  %v376 = vadd.f32 %v38, %v343
  %v377 = vadd.f32 %v39, %v345
  %v378 = vadd.f32 %v40, %v348
  %v379 = vadd.f32 %v41, %v350
  %v380 = vadd.f32 %v42, %v353
  %v381 = vadd.f32 %v43, %v355
  %v382 = vadd.f32 %v44, %v358
  %v383 = vadd.f32 %v45, %v360
  %v384 = vadd.f32 %v46, %v363
  %v385 = vadd.f32 %v47, %v365
  %v386 = vadd.f32 %v48, %v368
  %v387 = vadd.f32 %v49, %v370
  %388 = vst [vmem:[#allocation2] sm:$0xff] %v372
  %389 = vst [vmem:[#allocation2 + $0x8] sm:$0xff] %v373
  %390 = vst [vmem:[#allocation2 + $0x10] sm:$0xff] %v374
  %391 = vst [vmem:[#allocation2 + $0x18] sm:$0xff] %v375
  %392 = vst [vmem:[#allocation2 + $0x20] sm:$0xff] %v376
  %393 = vst [vmem:[#allocation2 + $0x28] sm:$0xff] %v377
  %394 = vst [vmem:[#allocation2 + $0x30] sm:$0xff] %v378
  %395 = vst [vmem:[#allocation2 + $0x38] sm:$0xff] %v379
  %396 = vst [vmem:[#allocation2 + $0x40] sm:$0xff] %v380
  %397 = vst [vmem:[#allocation2 + $0x48] sm:$0xff] %v381
  %398 = vst [vmem:[#allocation2 + $0x50] sm:$0xff] %v382
  %399 = vst [vmem:[#allocation2 + $0x58] sm:$0xff] %v383
  %400 = vst [vmem:[#allocation2 + $0x60] sm:$0xff] %v384
  %401 = vst [vmem:[#allocation2 + $0x68] sm:$0xff] %v385
  %402 = vst [vmem:[#allocation2 + $0x70] sm:$0xff] %v386
  %403 = vst [vmem:[#allocation2 + $0x78] sm:$0xff] %v387
  // Predicated region
  $region18: #{resnet_forward.11} parent=0 // pred_check
    %p404 = pneg %p14
  $region19: #{resnet_forward.11} parent=0 // pred_check_branch
    %406 = sbr.rel (%p404) target = $region21
  $region20: #{resnet_forward.11} parent=0 // pred_region
    %v407 = vld [vmem:[#allocation2] sm:$0xff]
    %v408 = vld [vmem:[#allocation2 + $0x8] sm:$0xff]
    %v409 = vld [vmem:[#allocation2 + $0x10] sm:$0xff]
    %v410 = vld [vmem:[#allocation2 + $0x18] sm:$0xff]
    %v411 = vld [vmem:[#allocation2 + $0x20] sm:$0xff]
    %v412 = vld [vmem:[#allocation2 + $0x28] sm:$0xff]
    %v413 = vld [vmem:[#allocation2 + $0x30] sm:$0xff]
    %v414 = vld [vmem:[#allocation2 + $0x38] sm:$0xff]
    %v415 = vld [vmem:[#allocation2 + $0x40] sm:$0xff]
    %v416 = vld [vmem:[#allocation2 + $0x48] sm:$0xff]
    %v417 = vld [vmem:[#allocation2 + $0x50] sm:$0xff]
    %v418 = vld [vmem:[#allocation2 + $0x58] sm:$0xff]
    %v419 = vld [vmem:[#allocation2 + $0x60] sm:$0xff]
    %v420 = vld [vmem:[#allocation2 + $0x68] sm:$0xff]
    %v421 = vld [vmem:[#allocation2 + $0x70] sm:$0xff]
    %v422 = vld [vmem:[#allocation2 + $0x78] sm:$0xff]
    %v423 = vld [vmem:[%s2] sm:$0x1]
    %v425 = vperm.slane %v423, 0
    %v427 = vadd.f32 %v407, %v425
    %v428 = vadd.f32 %v408, %v425
    %v429 = vadd.f32 %v409, %v425
    %v430 = vadd.f32 %v410, %v425
    %v431 = vadd.f32 %v411, %v425
    %v432 = vadd.f32 %v412, %v425
    %v433 = vadd.f32 %v413, %v425
    %v434 = vadd.f32 %v414, %v425
    %v435 = vadd.f32 %v415, %v425
    %v436 = vadd.f32 %v416, %v425
    %v437 = vadd.f32 %v417, %v425
    %v438 = vadd.f32 %v418, %v425
    %v439 = vadd.f32 %v419, %v425
    %v440 = vadd.f32 %v420, %v425
    %v441 = vadd.f32 %v421, %v425
    %v442 = vadd.f32 %v422, %v425
    %v443 = vmax.f32 %v427, 0.0
    %v444 = vmax.f32 %v428, 0.0
    %v445 = vmax.f32 %v429, 0.0
    %v446 = vmax.f32 %v430, 0.0
    %v447 = vmax.f32 %v431, 0.0
    %v448 = vmax.f32 %v432, 0.0
    %v449 = vmax.f32 %v433, 0.0
    %v450 = vmax.f32 %v434, 0.0
    %v451 = vmax.f32 %v435, 0.0
    %v452 = vmax.f32 %v436, 0.0
    %v453 = vmax.f32 %v437, 0.0
    %v454 = vmax.f32 %v438, 0.0
    %v455 = vmax.f32 %v439, 0.0
    %v456 = vmax.f32 %v440, 0.0
    %v457 = vmax.f32 %v441, 0.0
    %v458 = vmax.f32 %v442, 0.0
    %v459 = vpack.c.bf16 %v443, %v443
    %v460 = vpack.c.bf16 %v444, %v444
    %v461 = vpack.c.bf16 %v445, %v445
    %v462 = vpack.c.bf16 %v446, %v446
    %v463 = vpack.c.bf16 %v447, %v447
    %v464 = vpack.c.bf16 %v448, %v448
    %v465 = vpack.c.bf16 %v449, %v449
    %v466 = vpack.c.bf16 %v450, %v450
    %v467 = vpack.c.bf16 %v451, %v451
    %v468 = vpack.c.bf16 %v452, %v452
    %v469 = vpack.c.bf16 %v453, %v453
    %v470 = vpack.c.bf16 %v454, %v454
    %v471 = vpack.c.bf16 %v455, %v455
    %v472 = vpack.c.bf16 %v456, %v456
    %v473 = vpack.c.bf16 %v457, %v457
    %v474 = vpack.c.bf16 %v458, %v458
    %475 = vst [vmem:[%s3] sm:$0xf] %v459
    %476 = vst [vmem:[%s3 + $0x4] sm:$0xf] %v460
    %477 = vst [vmem:[%s3 + $0x8] sm:$0xf] %v461
    %478 = vst [vmem:[%s3 + $0xc] sm:$0xf] %v462
    %479 = vst [vmem:[%s3 + $0x10] sm:$0xf] %v463
    %480 = vst [vmem:[%s3 + $0x14] sm:$0xf] %v464
    %481 = vst [vmem:[%s3 + $0x18] sm:$0xf] %v465
    %482 = vst [vmem:[%s3 + $0x1c] sm:$0xf] %v466
    %483 = vst [vmem:[%s3 + $0x20] sm:$0xf] %v467
    %484 = vst [vmem:[%s3 + $0x24] sm:$0xf] %v468
    %485 = vst [vmem:[%s3 + $0x28] sm:$0xf] %v469
    %486 = vst [vmem:[%s3 + $0x2c] sm:$0xf] %v470
    %487 = vst [vmem:[%s3 + $0x30] sm:$0xf] %v471
    %488 = vst [vmem:[%s3 + $0x34] sm:$0xf] %v472
    %489 = vst [vmem:[%s3 + $0x38] sm:$0xf] %v473
    %490 = vst [vmem:[%s3 + $0x3c] sm:$0xf] %v474
  $region21: #{resnet_forward.11} parent=0 // pred_fallthru
    _
  // Predicated region
  $region22: #{resnet_forward.11} parent=0 // pred_check
    _
  $region23: #{resnet_forward.11} parent=0 // pred_check_branch
    %492 = sbr.rel (0) target = $region25
  $region24: #{resnet_forward.11} parent=0 // pred_region
    _
  $region25: #{resnet_forward.11} parent=0 // pred_fallthru
    _
  // Predicated region
  $region26: #{resnet_forward.11} parent=0 // pred_check
    _
  $region27: #{resnet_forward.11} parent=0 // pred_check_branch
    %494 = sbr.rel (0) target = $region29
  $region28: #{resnet_forward.11} parent=0 // pred_region
    _
  $region29: #{resnet_forward.11} parent=0 // pred_fallthru
    _

// kernel: resnet_forward.13
$region0: #{resnet_forward.13}
  #allocation0 [shape = 'u32[]', space=smem, size = 0x4, offset = 0x4, fixed_abs, tag = 'smem constant byte address 0x4 - core index']
  #allocation1 [shape = 'u32[72,128]{1,0:T(1,128)}', space=vmem, size = 0x9000, scoped, tag = 'internal scratch']
  #allocation2 [shape = 'f32[32,128]{1,0:T(8,128)}', space=vmem, size = 0x4000, scoped, tag = 'scratch operand']
  %s0 = inlined_call_operand.vmem [shape: bf16[32,128], index: 0, kind: input, shape index: {}]
  %s1 = inlined_call_operand.vmem [shape: bf16[128,128], index: 1, kind: input, shape index: {}]
  %s2 = inlined_call_operand.vmem [shape: f32[1,128], index: 2, kind: input, shape index: {}]
  %s3 = inlined_call_operand.vmem [shape: bf16[32,128], index: 3, kind: output, shape index: {}]
  %s4 = sld [smem:[#allocation0]]
  $region30: #{resnet_forward.13} parent=0
    _
  %s6 = ssub.s32 1, %s4
  %s7 = scalar_select 0, %s6, %s4
  // Predicated region
  $region2: #{resnet_forward.13} parent=0 // pred_check
    _
  $region3: #{resnet_forward.13} parent=0 // pred_check_branch
    %9 = sbr.rel (0) target = $region5
  $region4: #{resnet_forward.13} parent=0 // pred_region
    _
  $region5: #{resnet_forward.13} parent=0 // pred_fallthru
    _
  // Predicated region
  $region6: #{resnet_forward.13} parent=0 // pred_check
    _
  $region7: #{resnet_forward.13} parent=0 // pred_check_branch
    %11 = sbr.rel (0) target = $region9
  $region8: #{resnet_forward.13} parent=0 // pred_region
    _
  $region9: #{resnet_forward.13} parent=0 // pred_fallthru
    _
  // Predicated region
  $region10: #{resnet_forward.13} parent=0 // pred_check
    _
  $region11: #{resnet_forward.13} parent=0 // pred_check_branch
    %13 = sbr.rel (0) target = $region13
  $region12: #{resnet_forward.13} parent=0 // pred_region
    _
  $region13: #{resnet_forward.13} parent=0 // pred_fallthru
    _
  %p14 = scmp.eq.s32.totalorder 0, 0
  // Predicated region
  $region14: #{resnet_forward.13} parent=0 // pred_check
    %p15 = pneg %p14
  $region15: #{resnet_forward.13} parent=0 // pred_check_branch
    %17 = sbr.rel (%p15) target = $region17
  $region16: #{resnet_forward.13} parent=0 // pred_region
    %18 = vst [vmem:[#allocation2] sm:$0xff] 0.0
    %19 = vst [vmem:[#allocation2 + $0x8] sm:$0xff] 0.0
    %20 = vst [vmem:[#allocation2 + $0x10] sm:$0xff] 0.0
    %21 = vst [vmem:[#allocation2 + $0x18] sm:$0xff] 0.0
  $region17: #{resnet_forward.13} parent=0 // pred_fallthru
    _
  %v22 = vld [vmem:[#allocation2] sm:$0xff]
  %v23 = vld [vmem:[#allocation2 + $0x8] sm:$0xff]
  %v24 = vld [vmem:[#allocation2 + $0x10] sm:$0xff]
  %v25 = vld [vmem:[#allocation2 + $0x18] sm:$0xff]
  %v26 = vld [vmem:[%s0] sm:$0xf]
  %v27 = vld [vmem:[%s0 + $0x4] sm:$0xf]
  %v28 = vld [vmem:[%s0 + $0x8] sm:$0xf]
  %v29 = vld [vmem:[%s0 + $0xc] sm:$0xf]
  %v30 = vld [vmem:[%s1] sm:$0xf]
  %v31 = vld [vmem:[%s1 + $0x4] sm:$0xf]
  %v32 = vld [vmem:[%s1 + $0x8] sm:$0xf]
  %v33 = vld [vmem:[%s1 + $0xc] sm:$0xf]
  %v34 = vld [vmem:[%s1 + $0x10] sm:$0xf]
  %v35 = vld [vmem:[%s1 + $0x14] sm:$0xf]
  %v36 = vld [vmem:[%s1 + $0x18] sm:$0xf]
  %v37 = vld [vmem:[%s1 + $0x1c] sm:$0xf]
  %v38 = vld [vmem:[%s1 + $0x20] sm:$0xf]
  %v39 = vld [vmem:[%s1 + $0x24] sm:$0xf]
  %v40 = vld [vmem:[%s1 + $0x28] sm:$0xf]
  %v41 = vld [vmem:[%s1 + $0x2c] sm:$0xf]
  %v42 = vld [vmem:[%s1 + $0x30] sm:$0xf]
  %v43 = vld [vmem:[%s1 + $0x34] sm:$0xf]
  %v44 = vld [vmem:[%s1 + $0x38] sm:$0xf]
  %v45 = vld [vmem:[%s1 + $0x3c] sm:$0xf]
  %v50 = vunpack.c.l.b16 %v26
  %v51 = vunpack.c.l.b16 %v27
  %v52 = vunpack.c.l.b16 %v28
  %v53 = vunpack.c.l.b16 %v29
  %v54 = vpack.c.b16 %v51, %v50
  %v55 = vpack.c.b16 %v53, %v52
  %v74 = vunpack.c.l.b16 %v30
  %v75 = vunpack.c.l.b16 %v31
  %v76 = vunpack.c.l.b16 %v32
  %v77 = vunpack.c.l.b16 %v33
  %v78 = vunpack.c.l.b16 %v34
  %v79 = vunpack.c.l.b16 %v35
  %v80 = vunpack.c.l.b16 %v36
  %v81 = vunpack.c.l.b16 %v37
  %v82 = vunpack.c.l.b16 %v38
  %v83 = vunpack.c.l.b16 %v39
  %v84 = vunpack.c.l.b16 %v40
  %v85 = vunpack.c.l.b16 %v41
  %v86 = vunpack.c.l.b16 %v42
  %v87 = vunpack.c.l.b16 %v43
  %v88 = vunpack.c.l.b16 %v44
  %v89 = vunpack.c.l.b16 %v45
  %v90 = vpack.c.b16 %v75, %v74
  %v91 = vpack.c.b16 %v77, %v76
  %v92 = vpack.c.b16 %v79, %v78
  %v93 = vpack.c.b16 %v81, %v80
  %v94 = vpack.c.b16 %v83, %v82
  %v95 = vpack.c.b16 %v85, %v84
  %v96 = vpack.c.b16 %v87, %v86
  %v97 = vpack.c.b16 %v89, %v88
  %106 = vmatpush.bf16.msra.mxu0 %v97
  %107 = vmatpush.bf16.msra.mxu0 %v96
  %108 = vmatpush.bf16.msra.mxu0 %v95
  %109 = vmatpush.bf16.msra.mxu0 %v94
  %110 = vmatpush.bf16.msra.mxu0 %v93
  %111 = vmatpush.bf16.msra.mxu0 %v92
  %112 = vmatpush.bf16.msra.mxu0 %v91
  %113 = vmatpush.bf16.msra.mxu0 %v90
  %114 = vmatmul.bf16.gmra.mxu0 %v54
  %v115 = vpop.f32.mrf.mxu0
  %v116 = vadd.f32 0.0, %v115
  %v117 = vpop.f32.mrf.mxu0
  %v118 = vadd.f32 0.0, %v117
  %119 = vmatmul.bf16.gmra.mxu0 %v55
  %v120 = vpop.f32.mrf.mxu0
  %v121 = vadd.f32 0.0, %v120
  %v122 = vpop.f32.mrf.mxu0
  %v123 = vadd.f32 0.0, %v122
  %124 = vdwg.mxu0
  %v125 = vadd.f32 %v22, %v116
  %v126 = vadd.f32 %v23, %v118
  %v127 = vadd.f32 %v24, %v121
  %v128 = vadd.f32 %v25, %v123
  %129 = vst [vmem:[#allocation2] sm:$0xff] %v125
  %130 = vst [vmem:[#allocation2 + $0x8] sm:$0xff] %v126
  %131 = vst [vmem:[#allocation2 + $0x10] sm:$0xff] %v127
  %132 = vst [vmem:[#allocation2 + $0x18] sm:$0xff] %v128
  // Predicated region
  $region18: #{resnet_forward.13} parent=0 // pred_check
    %p133 = pneg %p14
  $region19: #{resnet_forward.13} parent=0 // pred_check_branch
    %135 = sbr.rel (%p133) target = $region21
  $region20: #{resnet_forward.13} parent=0 // pred_region
    %v136 = vld [vmem:[#allocation2] sm:$0xff]
    %v137 = vld [vmem:[#allocation2 + $0x8] sm:$0xff]
    %v138 = vld [vmem:[#allocation2 + $0x10] sm:$0xff]
    %v139 = vld [vmem:[#allocation2 + $0x18] sm:$0xff]
    %v140 = vld [vmem:[%s2] sm:$0x1]
    %v142 = vperm.slane %v140, 0
    %v144 = vadd.f32 %v136, %v142
    %v145 = vadd.f32 %v137, %v142
    %v146 = vadd.f32 %v138, %v142
    %v147 = vadd.f32 %v139, %v142
    %v148 = vmax.f32 %v144, 0.0
    %v149 = vmax.f32 %v145, 0.0
    %v150 = vmax.f32 %v146, 0.0
    %v151 = vmax.f32 %v147, 0.0
    %v152 = vpack.c.bf16 %v148, %v148
    %v153 = vpack.c.bf16 %v149, %v149
    %v154 = vpack.c.bf16 %v150, %v150
    %v155 = vpack.c.bf16 %v151, %v151
    %156 = vst [vmem:[%s3] sm:$0xf] %v152
    %157 = vst [vmem:[%s3 + $0x4] sm:$0xf] %v153
    %158 = vst [vmem:[%s3 + $0x8] sm:$0xf] %v154
    %159 = vst [vmem:[%s3 + $0xc] sm:$0xf] %v155
  $region21: #{resnet_forward.13} parent=0 // pred_fallthru
    _
  // Predicated region
  $region22: #{resnet_forward.13} parent=0 // pred_check
    _
  $region23: #{resnet_forward.13} parent=0 // pred_check_branch
    %161 = sbr.rel (0) target = $region25
  $region24: #{resnet_forward.13} parent=0 // pred_region
    _
  $region25: #{resnet_forward.13} parent=0 // pred_fallthru
    _
  // Predicated region
  $region26: #{resnet_forward.13} parent=0 // pred_check
    _
  $region27: #{resnet_forward.13} parent=0 // pred_check_branch
    %163 = sbr.rel (0) target = $region29
  $region28: #{resnet_forward.13} parent=0 // pred_region
    _
  $region29: #{resnet_forward.13} parent=0 // pred_fallthru
    _

// kernel: resnet_forward.14
$region0: #{resnet_forward.14}
  #allocation0 [shape = 'u32[]', space=smem, size = 0x4, offset = 0x4, fixed_abs, tag = 'smem constant byte address 0x4 - core index']
  #allocation1 [shape = 'u32[72,128]{1,0:T(1,128)}', space=vmem, size = 0x9000, scoped, tag = 'internal scratch']
  #allocation2 [shape = 'f32[32,128]{1,0:T(8,128)}', space=vmem, size = 0x4000, scoped, tag = 'scratch operand']
  %s0 = inlined_call_operand.vmem [shape: bf16[32,640], index: 0, kind: input, shape index: {}]
  %s1 = inlined_call_operand.vmem [shape: bf16[640,128], index: 1, kind: input, shape index: {}]
  %s2 = inlined_call_operand.vmem [shape: f32[1,128], index: 2, kind: input, shape index: {}]
  %s3 = inlined_call_operand.vmem [shape: bf16[32,128], index: 3, kind: output, shape index: {}]
  %s4 = sld [smem:[#allocation0]]
  $region30: #{resnet_forward.14} parent=0
    _
  %s6 = ssub.s32 1, %s4
  %s7 = scalar_select 0, %s6, %s4
  // Predicated region
  $region2: #{resnet_forward.14} parent=0 // pred_check
    _
  $region3: #{resnet_forward.14} parent=0 // pred_check_branch
    %9 = sbr.rel (0) target = $region5
  $region4: #{resnet_forward.14} parent=0 // pred_region
    _
  $region5: #{resnet_forward.14} parent=0 // pred_fallthru
    _
  // Predicated region
  $region6: #{resnet_forward.14} parent=0 // pred_check
    _
  $region7: #{resnet_forward.14} parent=0 // pred_check_branch
    %11 = sbr.rel (0) target = $region9
  $region8: #{resnet_forward.14} parent=0 // pred_region
    _
  $region9: #{resnet_forward.14} parent=0 // pred_fallthru
    _
  // Predicated region
  $region10: #{resnet_forward.14} parent=0 // pred_check
    _
  $region11: #{resnet_forward.14} parent=0 // pred_check_branch
    %13 = sbr.rel (0) target = $region13
  $region12: #{resnet_forward.14} parent=0 // pred_region
    _
  $region13: #{resnet_forward.14} parent=0 // pred_fallthru
    _
  %p14 = scmp.eq.s32.totalorder 0, 0
  // Predicated region
  $region14: #{resnet_forward.14} parent=0 // pred_check
    %p15 = pneg %p14
  $region15: #{resnet_forward.14} parent=0 // pred_check_branch
    %17 = sbr.rel (%p15) target = $region17
  $region16: #{resnet_forward.14} parent=0 // pred_region
    %18 = vst [vmem:[#allocation2] sm:$0xff] 0.0
    %19 = vst [vmem:[#allocation2 + $0x8] sm:$0xff] 0.0
    %20 = vst [vmem:[#allocation2 + $0x10] sm:$0xff] 0.0
    %21 = vst [vmem:[#allocation2 + $0x18] sm:$0xff] 0.0
  $region17: #{resnet_forward.14} parent=0 // pred_fallthru
    _
  %v22 = vld [vmem:[#allocation2] sm:$0xff]
  %v23 = vld [vmem:[#allocation2 + $0x8] sm:$0xff]
  %v24 = vld [vmem:[#allocation2 + $0x10] sm:$0xff]
  %v25 = vld [vmem:[#allocation2 + $0x18] sm:$0xff]
  %v26 = vld [vmem:[%s0] sm:$0xff]
  %v27 = vld [vmem:[%s0 + $0x8] sm:$0xff]
  %v28 = vld [vmem:[%s0 + $0x10] sm:$0xf]
  %v29 = vld [vmem:[%s0 + $0x14] sm:$0xff]
  %v30 = vld [vmem:[%s0 + $0x1c] sm:$0xff]
  %v31 = vld [vmem:[%s0 + $0x24] sm:$0xf]
  %v32 = vld [vmem:[%s0 + $0x28] sm:$0xff]
  %v33 = vld [vmem:[%s0 + $0x30] sm:$0xff]
  %v34 = vld [vmem:[%s0 + $0x38] sm:$0xf]
  %v35 = vld [vmem:[%s0 + $0x3c] sm:$0xff]
  %v36 = vld [vmem:[%s0 + $0x44] sm:$0xff]
  %v37 = vld [vmem:[%s0 + $0x4c] sm:$0xf]
  %v38 = vld [vmem:[%s1] sm:$0xf]
  %v39 = vld [vmem:[%s1 + $0x4] sm:$0xf]
  %v40 = vld [vmem:[%s1 + $0x8] sm:$0xf]
  %v41 = vld [vmem:[%s1 + $0xc] sm:$0xf]
  %v42 = vld [vmem:[%s1 + $0x10] sm:$0xf]
  %v43 = vld [vmem:[%s1 + $0x14] sm:$0xf]
  %v44 = vld [vmem:[%s1 + $0x18] sm:$0xf]
  %v45 = vld [vmem:[%s1 + $0x1c] sm:$0xf]
  %v46 = vld [vmem:[%s1 + $0x20] sm:$0xf]
  %v47 = vld [vmem:[%s1 + $0x24] sm:$0xf]
  %v48 = vld [vmem:[%s1 + $0x28] sm:$0xf]
  %v49 = vld [vmem:[%s1 + $0x2c] sm:$0xf]
  %v50 = vld [vmem:[%s1 + $0x30] sm:$0xf]
  %v51 = vld [vmem:[%s1 + $0x34] sm:$0xf]
  %v52 = vld [vmem:[%s1 + $0x38] sm:$0xf]
  %v53 = vld [vmem:[%s1 + $0x3c] sm:$0xf]
  %v54 = vld [vmem:[%s1 + $0x40] sm:$0xf]
  %v55 = vld [vmem:[%s1 + $0x44] sm:$0xf]
  %v56 = vld [vmem:[%s1 + $0x48] sm:$0xf]
  %v57 = vld [vmem:[%s1 + $0x4c] sm:$0xf]
  %v58 = vld [vmem:[%s1 + $0x50] sm:$0xf]
  %v59 = vld [vmem:[%s1 + $0x54] sm:$0xf]
  %v60 = vld [vmem:[%s1 + $0x58] sm:$0xf]
  %v61 = vld [vmem:[%s1 + $0x5c] sm:$0xf]
  %v62 = vld [vmem:[%s1 + $0x60] sm:$0xf]
  %v63 = vld [vmem:[%s1 + $0x64] sm:$0xf]
  %v64 = vld [vmem:[%s1 + $0x68] sm:$0xf]
  %v65 = vld [vmem:[%s1 + $0x6c] sm:$0xf]
  %v66 = vld [vmem:[%s1 + $0x70] sm:$0xf]
  %v67 = vld [vmem:[%s1 + $0x74] sm:$0xf]
  %v68 = vld [vmem:[%s1 + $0x78] sm:$0xf]
  %v69 = vld [vmem:[%s1 + $0x7c] sm:$0xf]
  %v70 = vld [vmem:[%s1 + $0x80] sm:$0xf]
  %v71 = vld [vmem:[%s1 + $0x84] sm:$0xf]
  %v72 = vld [vmem:[%s1 + $0x88] sm:$0xf]
  %v73 = vld [vmem:[%s1 + $0x8c] sm:$0xf]
  %v74 = vld [vmem:[%s1 + $0x90] sm:$0xf]
  %v75 = vld [vmem:[%s1 + $0x94] sm:$0xf]
  %v76 = vld [vmem:[%s1 + $0x98] sm:$0xf]
  %v77 = vld [vmem:[%s1 + $0x9c] sm:$0xf]
  %v78 = vld [vmem:[%s1 + $0xa0] sm:$0xf]
  %v79 = vld [vmem:[%s1 + $0xa4] sm:$0xf]
  %v80 = vld [vmem:[%s1 + $0xa8] sm:$0xf]
  %v81 = vld [vmem:[%s1 + $0xac] sm:$0xf]
  %v82 = vld [vmem:[%s1 + $0xb0] sm:$0xf]
  %v83 = vld [vmem:[%s1 + $0xb4] sm:$0xf]
  %v84 = vld [vmem:[%s1 + $0xb8] sm:$0xf]
  %v85 = vld [vmem:[%s1 + $0xbc] sm:$0xf]
  %v86 = vld [vmem:[%s1 + $0xc0] sm:$0xf]
  %v87 = vld [vmem:[%s1 + $0xc4] sm:$0xf]
  %v88 = vld [vmem:[%s1 + $0xc8] sm:$0xf]
  %v89 = vld [vmem:[%s1 + $0xcc] sm:$0xf]
  %v90 = vld [vmem:[%s1 + $0xd0] sm:$0xf]
  %v91 = vld [vmem:[%s1 + $0xd4] sm:$0xf]
  %v92 = vld [vmem:[%s1 + $0xd8] sm:$0xf]
  %v93 = vld [vmem:[%s1 + $0xdc] sm:$0xf]
  %v94 = vld [vmem:[%s1 + $0xe0] sm:$0xf]
  %v95 = vld [vmem:[%s1 + $0xe4] sm:$0xf]
  %v96 = vld [vmem:[%s1 + $0xe8] sm:$0xf]
  %v97 = vld [vmem:[%s1 + $0xec] sm:$0xf]
  %v98 = vld [vmem:[%s1 + $0xf0] sm:$0xf]
  %v99 = vld [vmem:[%s1 + $0xf4] sm:$0xf]
  %v100 = vld [vmem:[%s1 + $0xf8] sm:$0xf]
  %v101 = vld [vmem:[%s1 + $0xfc] sm:$0xf]
  %v102 = vld [vmem:[%s1 + $0x100] sm:$0xf]
  %v103 = vld [vmem:[%s1 + $0x104] sm:$0xf]
  %v104 = vld [vmem:[%s1 + $0x108] sm:$0xf]
  %v105 = vld [vmem:[%s1 + $0x10c] sm:$0xf]
  %v106 = vld [vmem:[%s1 + $0x110] sm:$0xf]
  %v107 = vld [vmem:[%s1 + $0x114] sm:$0xf]
  %v108 = vld [vmem:[%s1 + $0x118] sm:$0xf]
  %v109 = vld [vmem:[%s1 + $0x11c] sm:$0xf]
  %v110 = vld [vmem:[%s1 + $0x120] sm:$0xf]
  %v111 = vld [vmem:[%s1 + $0x124] sm:$0xf]
  %v112 = vld [vmem:[%s1 + $0x128] sm:$0xf]
  %v113 = vld [vmem:[%s1 + $0x12c] sm:$0xf]
  %v114 = vld [vmem:[%s1 + $0x130] sm:$0xf]
  %v115 = vld [vmem:[%s1 + $0x134] sm:$0xf]
  %v116 = vld [vmem:[%s1 + $0x138] sm:$0xf]
  %v117 = vld [vmem:[%s1 + $0x13c] sm:$0xf]
  %v130 = vunpack.c.l.b16 %v26
  %v131 = vunpack.c.h.b16 %v26
  %v132 = vunpack.c.l.b16 %v27
  %v133 = vunpack.c.h.b16 %v27
  %v134 = vunpack.c.l.b16 %v28
  %v135 = vunpack.c.l.b16 %v29
  %v136 = vunpack.c.h.b16 %v29
  %v137 = vunpack.c.l.b16 %v30
  %v138 = vunpack.c.h.b16 %v30
  %v139 = vunpack.c.l.b16 %v31
  %v140 = vunpack.c.l.b16 %v32
  %v141 = vunpack.c.h.b16 %v32
  %v142 = vunpack.c.l.b16 %v33
  %v143 = vunpack.c.h.b16 %v33
  %v144 = vunpack.c.l.b16 %v34
  %v145 = vunpack.c.l.b16 %v35
  %v146 = vunpack.c.h.b16 %v35
  %v147 = vunpack.c.l.b16 %v36
  %v148 = vunpack.c.h.b16 %v36
  %v149 = vunpack.c.l.b16 %v37
  %v150 = vpack.c.b16 %v135, %v130
  %v151 = vpack.c.b16 %v136, %v131
  %v152 = vpack.c.b16 %v137, %v132
  %v153 = vpack.c.b16 %v138, %v133
  %v154 = vpack.c.b16 %v139, %v134
  %v155 = vpack.c.b16 %v145, %v140
  %v156 = vpack.c.b16 %v146, %v141
  %v157 = vpack.c.b16 %v147, %v142
  %v158 = vpack.c.b16 %v148, %v143
  %v159 = vpack.c.b16 %v149, %v144
  %v250 = vunpack.c.l.b16 %v38
  %v251 = vunpack.c.l.b16 %v39
  %v252 = vunpack.c.l.b16 %v40
  %v253 = vunpack.c.l.b16 %v41
  %v254 = vunpack.c.l.b16 %v42
  %v255 = vunpack.c.l.b16 %v43
  %v256 = vunpack.c.l.b16 %v44
  %v257 = vunpack.c.l.b16 %v45
  %v258 = vunpack.c.l.b16 %v46
  %v259 = vunpack.c.l.b16 %v47
  %v260 = vunpack.c.l.b16 %v48
  %v261 = vunpack.c.l.b16 %v49
  %v262 = vunpack.c.l.b16 %v50
  %v263 = vunpack.c.l.b16 %v51
  %v264 = vunpack.c.l.b16 %v52
  %v265 = vunpack.c.l.b16 %v53
  %v266 = vunpack.c.l.b16 %v54
  %v267 = vunpack.c.l.b16 %v55
  %v268 = vunpack.c.l.b16 %v56
  %v269 = vunpack.c.l.b16 %v57
  %v270 = vunpack.c.l.b16 %v58
  %v271 = vunpack.c.l.b16 %v59
  %v272 = vunpack.c.l.b16 %v60
  %v273 = vunpack.c.l.b16 %v61
  %v274 = vunpack.c.l.b16 %v62
  %v275 = vunpack.c.l.b16 %v63
  %v276 = vunpack.c.l.b16 %v64
  %v277 = vunpack.c.l.b16 %v65
  %v278 = vunpack.c.l.b16 %v66
  %v279 = vunpack.c.l.b16 %v67
  %v280 = vunpack.c.l.b16 %v68
  %v281 = vunpack.c.l.b16 %v69
  %v282 = vunpack.c.l.b16 %v70
  %v283 = vunpack.c.l.b16 %v71
  %v284 = vunpack.c.l.b16 %v72
  %v285 = vunpack.c.l.b16 %v73
  %v286 = vunpack.c.l.b16 %v74
  %v287 = vunpack.c.l.b16 %v75
  %v288 = vunpack.c.l.b16 %v76
  %v289 = vunpack.c.l.b16 %v77
  %v290 = vunpack.c.l.b16 %v78
  %v291 = vunpack.c.l.b16 %v79
  %v292 = vunpack.c.l.b16 %v80
  %v293 = vunpack.c.l.b16 %v81
  %v294 = vunpack.c.l.b16 %v82
  %v295 = vunpack.c.l.b16 %v83
  %v296 = vunpack.c.l.b16 %v84
  %v297 = vunpack.c.l.b16 %v85
  %v298 = vunpack.c.l.b16 %v86
  %v299 = vunpack.c.l.b16 %v87
  %v300 = vunpack.c.l.b16 %v88
  %v301 = vunpack.c.l.b16 %v89
  %v302 = vunpack.c.l.b16 %v90
  %v303 = vunpack.c.l.b16 %v91
  %v304 = vunpack.c.l.b16 %v92
  %v305 = vunpack.c.l.b16 %v93
  %v306 = vunpack.c.l.b16 %v94
  %v307 = vunpack.c.l.b16 %v95
  %v308 = vunpack.c.l.b16 %v96
  %v309 = vunpack.c.l.b16 %v97
  %v310 = vunpack.c.l.b16 %v98
  %v311 = vunpack.c.l.b16 %v99
  %v312 = vunpack.c.l.b16 %v100
  %v313 = vunpack.c.l.b16 %v101
  %v314 = vunpack.c.l.b16 %v102
  %v315 = vunpack.c.l.b16 %v103
  %v316 = vunpack.c.l.b16 %v104
  %v317 = vunpack.c.l.b16 %v105
  %v318 = vunpack.c.l.b16 %v106
  %v319 = vunpack.c.l.b16 %v107
  %v320 = vunpack.c.l.b16 %v108
  %v321 = vunpack.c.l.b16 %v109
  %v322 = vunpack.c.l.b16 %v110
  %v323 = vunpack.c.l.b16 %v111
  %v324 = vunpack.c.l.b16 %v112
  %v325 = vunpack.c.l.b16 %v113
  %v326 = vunpack.c.l.b16 %v114
  %v327 = vunpack.c.l.b16 %v115
  %v328 = vunpack.c.l.b16 %v116
  %v329 = vunpack.c.l.b16 %v117
  %v330 = vpack.c.b16 %v251, %v250
  %v331 = vpack.c.b16 %v253, %v252
  %v332 = vpack.c.b16 %v255, %v254
  %v333 = vpack.c.b16 %v257, %v256
  %v334 = vpack.c.b16 %v259, %v258
  %v335 = vpack.c.b16 %v261, %v260
  %v336 = vpack.c.b16 %v263, %v262
  %v337 = vpack.c.b16 %v265, %v264
  %v338 = vpack.c.b16 %v267, %v266
  %v339 = vpack.c.b16 %v269, %v268
  %v340 = vpack.c.b16 %v271, %v270
  %v341 = vpack.c.b16 %v273, %v272
  %v342 = vpack.c.b16 %v275, %v274
  %v343 = vpack.c.b16 %v277, %v276
  %v344 = vpack.c.b16 %v279, %v278
  %v345 = vpack.c.b16 %v281, %v280
  %v346 = vpack.c.b16 %v283, %v282
  %v347 = vpack.c.b16 %v285, %v284
  %v348 = vpack.c.b16 %v287, %v286
  %v349 = vpack.c.b16 %v289, %v288
  %v350 = vpack.c.b16 %v291, %v290
  %v351 = vpack.c.b16 %v293, %v292
  %v352 = vpack.c.b16 %v295, %v294
  %v353 = vpack.c.b16 %v297, %v296
  %v354 = vpack.c.b16 %v299, %v298
  %v355 = vpack.c.b16 %v301, %v300
  %v356 = vpack.c.b16 %v303, %v302
  %v357 = vpack.c.b16 %v305, %v304
  %v358 = vpack.c.b16 %v307, %v306
  %v359 = vpack.c.b16 %v309, %v308
  %v360 = vpack.c.b16 %v311, %v310
  %v361 = vpack.c.b16 %v313, %v312
  %v362 = vpack.c.b16 %v315, %v314
  %v363 = vpack.c.b16 %v317, %v316
  %v364 = vpack.c.b16 %v319, %v318
  %v365 = vpack.c.b16 %v321, %v320
  %v366 = vpack.c.b16 %v323, %v322
  %v367 = vpack.c.b16 %v325, %v324
  %v368 = vpack.c.b16 %v327, %v326
  %v369 = vpack.c.b16 %v329, %v328
  %410 = vmatpush.bf16.msra.mxu0 %v337
  %411 = vmatpush.bf16.msra.mxu0 %v336
  %412 = vmatpush.bf16.msra.mxu0 %v335
  %413 = vmatpush.bf16.msra.mxu0 %v334
  %414 = vmatpush.bf16.msra.mxu0 %v333
  %415 = vmatpush.bf16.msra.mxu0 %v332
  %416 = vmatpush.bf16.msra.mxu0 %v331
  %417 = vmatpush.bf16.msra.mxu0 %v330
  %418 = vmatmul.bf16.gmra.mxu0 %v150
  %v419 = vpop.f32.mrf.mxu0
  %v420 = vadd.f32 0.0, %v419
  %v421 = vpop.f32.mrf.mxu0
  %v422 = vadd.f32 0.0, %v421
  %423 = vmatmul.bf16.gmra.mxu0 %v155
  %v424 = vpop.f32.mrf.mxu0
  %v425 = vadd.f32 0.0, %v424
  %v426 = vpop.f32.mrf.mxu0
  %v427 = vadd.f32 0.0, %v426
  %428 = vdwg.mxu0
  %429 = vmatpush.bf16.msra.mxu0 %v345
  %430 = vmatpush.bf16.msra.mxu0 %v344
  %431 = vmatpush.bf16.msra.mxu0 %v343
  %432 = vmatpush.bf16.msra.mxu0 %v342
  %433 = vmatpush.bf16.msra.mxu0 %v341
  %434 = vmatpush.bf16.msra.mxu0 %v340
  %435 = vmatpush.bf16.msra.mxu0 %v339
  %436 = vmatpush.bf16.msra.mxu0 %v338
  %437 = vmatmul.bf16.gmra.mxu0 %v151
  %v438 = vpop.f32.mrf.mxu0
  %v439 = vadd.f32 %v420, %v438
  %v440 = vpop.f32.mrf.mxu0
  %v441 = vadd.f32 %v422, %v440
  %442 = vmatmul.bf16.gmra.mxu0 %v156
  %v443 = vpop.f32.mrf.mxu0
  %v444 = vadd.f32 %v425, %v443
  %v445 = vpop.f32.mrf.mxu0
  %v446 = vadd.f32 %v427, %v445
  %447 = vdwg.mxu0
  %448 = vmatpush.bf16.msra.mxu0 %v353
  %449 = vmatpush.bf16.msra.mxu0 %v352
  %450 = vmatpush.bf16.msra.mxu0 %v351
  %451 = vmatpush.bf16.msra.mxu0 %v350
  %452 = vmatpush.bf16.msra.mxu0 %v349
  %453 = vmatpush.bf16.msra.mxu0 %v348
  %454 = vmatpush.bf16.msra.mxu0 %v347
  %455 = vmatpush.bf16.msra.mxu0 %v346
  %456 = vmatmul.bf16.gmra.mxu0 %v152
  %v457 = vpop.f32.mrf.mxu0
  %v458 = vadd.f32 %v439, %v457
  %v459 = vpop.f32.mrf.mxu0
  %v460 = vadd.f32 %v441, %v459
  %461 = vmatmul.bf16.gmra.mxu0 %v157
  %v462 = vpop.f32.mrf.mxu0
  %v463 = vadd.f32 %v444, %v462
  %v464 = vpop.f32.mrf.mxu0
  %v465 = vadd.f32 %v446, %v464
  %466 = vdwg.mxu0
  %467 = vmatpush.bf16.msra.mxu0 %v361
  %468 = vmatpush.bf16.msra.mxu0 %v360
  %469 = vmatpush.bf16.msra.mxu0 %v359
  %470 = vmatpush.bf16.msra.mxu0 %v358
  %471 = vmatpush.bf16.msra.mxu0 %v357
  %472 = vmatpush.bf16.msra.mxu0 %v356
  %473 = vmatpush.bf16.msra.mxu0 %v355
  %474 = vmatpush.bf16.msra.mxu0 %v354
  %475 = vmatmul.bf16.gmra.mxu0 %v153
  %v476 = vpop.f32.mrf.mxu0
  %v477 = vadd.f32 %v458, %v476
  %v478 = vpop.f32.mrf.mxu0
  %v479 = vadd.f32 %v460, %v478
  %480 = vmatmul.bf16.gmra.mxu0 %v158
  %v481 = vpop.f32.mrf.mxu0
  %v482 = vadd.f32 %v463, %v481
  %v483 = vpop.f32.mrf.mxu0
  %v484 = vadd.f32 %v465, %v483
  %485 = vdwg.mxu0
  %486 = vmatpush.bf16.msra.mxu0 %v369
  %487 = vmatpush.bf16.msra.mxu0 %v368
  %488 = vmatpush.bf16.msra.mxu0 %v367
  %489 = vmatpush.bf16.msra.mxu0 %v366
  %490 = vmatpush.bf16.msra.mxu0 %v365
  %491 = vmatpush.bf16.msra.mxu0 %v364
  %492 = vmatpush.bf16.msra.mxu0 %v363
  %493 = vmatpush.bf16.msra.mxu0 %v362
  %494 = vmatmul.bf16.gmra.mxu0 %v154
  %v495 = vpop.f32.mrf.mxu0
  %v496 = vadd.f32 %v477, %v495
  %v497 = vpop.f32.mrf.mxu0
  %v498 = vadd.f32 %v479, %v497
  %499 = vmatmul.bf16.gmra.mxu0 %v159
  %v500 = vpop.f32.mrf.mxu0
  %v501 = vadd.f32 %v482, %v500
  %v502 = vpop.f32.mrf.mxu0
  %v503 = vadd.f32 %v484, %v502
  %504 = vdwg.mxu0
  %v505 = vadd.f32 %v22, %v496
  %v506 = vadd.f32 %v23, %v498
  %v507 = vadd.f32 %v24, %v501
  %v508 = vadd.f32 %v25, %v503
  %509 = vst [vmem:[#allocation2] sm:$0xff] %v505
  %510 = vst [vmem:[#allocation2 + $0x8] sm:$0xff] %v506
  %511 = vst [vmem:[#allocation2 + $0x10] sm:$0xff] %v507
  %512 = vst [vmem:[#allocation2 + $0x18] sm:$0xff] %v508
  // Predicated region
  $region18: #{resnet_forward.14} parent=0 // pred_check
    %p513 = pneg %p14
  $region19: #{resnet_forward.14} parent=0 // pred_check_branch
    %515 = sbr.rel (%p513) target = $region21
  $region20: #{resnet_forward.14} parent=0 // pred_region
    %v516 = vld [vmem:[#allocation2] sm:$0xff]
    %v517 = vld [vmem:[#allocation2 + $0x8] sm:$0xff]
    %v518 = vld [vmem:[#allocation2 + $0x10] sm:$0xff]
    %v519 = vld [vmem:[#allocation2 + $0x18] sm:$0xff]
    %v520 = vld [vmem:[%s2] sm:$0x1]
    %v522 = vperm.slane %v520, 0
    %v524 = vadd.f32 %v516, %v522
    %v525 = vadd.f32 %v517, %v522
    %v526 = vadd.f32 %v518, %v522
    %v527 = vadd.f32 %v519, %v522
    %v528 = vmax.f32 %v524, 0.0
    %v529 = vmax.f32 %v525, 0.0
    %v530 = vmax.f32 %v526, 0.0
    %v531 = vmax.f32 %v527, 0.0
    %v532 = vpack.c.bf16 %v528, %v528
    %v533 = vpack.c.bf16 %v529, %v529
    %v534 = vpack.c.bf16 %v530, %v530
    %v535 = vpack.c.bf16 %v531, %v531
    %536 = vst [vmem:[%s3] sm:$0xf] %v532
    %537 = vst [vmem:[%s3 + $0x4] sm:$0xf] %v533
    %538 = vst [vmem:[%s3 + $0x8] sm:$0xf] %v534
    %539 = vst [vmem:[%s3 + $0xc] sm:$0xf] %v535
  $region21: #{resnet_forward.14} parent=0 // pred_fallthru
    _
  // Predicated region
  $region22: #{resnet_forward.14} parent=0 // pred_check
    _
  $region23: #{resnet_forward.14} parent=0 // pred_check_branch
    %541 = sbr.rel (0) target = $region25
  $region24: #{resnet_forward.14} parent=0 // pred_region
    _
  $region25: #{resnet_forward.14} parent=0 // pred_fallthru
    _
  // Predicated region
  $region26: #{resnet_forward.14} parent=0 // pred_check
    _
  $region27: #{resnet_forward.14} parent=0 // pred_check_branch
    %543 = sbr.rel (0) target = $region29
  $region28: #{resnet_forward.14} parent=0 // pred_region
    _
  $region29: #{resnet_forward.14} parent=0 // pred_fallthru
    _

// kernel: resnet_forward.16
$region0: #{resnet_forward.16}
  #allocation0 [shape = 'u32[]', space=smem, size = 0x4, offset = 0x4, fixed_abs, tag = 'smem constant byte address 0x4 - core index']
  #allocation1 [shape = 'u32[72,128]{1,0:T(1,128)}', space=vmem, size = 0x9000, scoped, tag = 'internal scratch']
  #allocation2 [shape = 'f32[32,256]{1,0:T(8,128)}', space=vmem, size = 0x8000, scoped, tag = 'scratch operand']
  %s0 = inlined_call_operand.vmem [shape: bf16[32,128], index: 0, kind: input, shape index: {}]
  %s1 = inlined_call_operand.vmem [shape: bf16[128,256], index: 1, kind: input, shape index: {}]
  %s2 = inlined_call_operand.vmem [shape: f32[1,256], index: 2, kind: input, shape index: {}]
  %s3 = inlined_call_operand.vmem [shape: bf16[32,256], index: 3, kind: input, shape index: {}, may-alias: {3,4}]
  %s4 = inlined_call_operand.vmem [shape: bf16[32,256], index: 4, kind: output, shape index: {}, may-alias: {3,4}]
  %s5 = sld [smem:[#allocation0]]
  $region34: #{resnet_forward.16} parent=0
    _
  %s7 = ssub.s32 1, %s5
  %s8 = scalar_select 0, %s7, %s5
  // Predicated region
  $region2: #{resnet_forward.16} parent=0 // pred_check
    _
  $region3: #{resnet_forward.16} parent=0 // pred_check_branch
    %10 = sbr.rel (0) target = $region5
  $region4: #{resnet_forward.16} parent=0 // pred_region
    _
  $region5: #{resnet_forward.16} parent=0 // pred_fallthru
    _
  // Predicated region
  $region6: #{resnet_forward.16} parent=0 // pred_check
    _
  $region7: #{resnet_forward.16} parent=0 // pred_check_branch
    %12 = sbr.rel (0) target = $region9
  $region8: #{resnet_forward.16} parent=0 // pred_region
    _
  $region9: #{resnet_forward.16} parent=0 // pred_fallthru
    _
  // Predicated region
  $region10: #{resnet_forward.16} parent=0 // pred_check
    _
  $region11: #{resnet_forward.16} parent=0 // pred_check_branch
    %14 = sbr.rel (0) target = $region13
  $region12: #{resnet_forward.16} parent=0 // pred_region
    _
  $region13: #{resnet_forward.16} parent=0 // pred_fallthru
    _
  // Predicated region
  $region14: #{resnet_forward.16} parent=0 // pred_check
    _
  $region15: #{resnet_forward.16} parent=0 // pred_check_branch
    %16 = sbr.rel (0) target = $region17
  $region16: #{resnet_forward.16} parent=0 // pred_region
    _
  $region17: #{resnet_forward.16} parent=0 // pred_fallthru
    _
  %p17 = scmp.eq.s32.totalorder 0, 0
  // Predicated region
  $region18: #{resnet_forward.16} parent=0 // pred_check
    %p18 = pneg %p17
  $region19: #{resnet_forward.16} parent=0 // pred_check_branch
    %20 = sbr.rel (%p18) target = $region21
  $region20: #{resnet_forward.16} parent=0 // pred_region
    %21 = vst [vmem:[#allocation2] sm:$0xff] 0.0
    %22 = vst [vmem:[#allocation2 + $0x8] sm:$0xff] 0.0
    %23 = vst [vmem:[#allocation2 + $0x10] sm:$0xff] 0.0
    %24 = vst [vmem:[#allocation2 + $0x18] sm:$0xff] 0.0
    %25 = vst [vmem:[#allocation2 + $0x20] sm:$0xff] 0.0
    %26 = vst [vmem:[#allocation2 + $0x28] sm:$0xff] 0.0
    %27 = vst [vmem:[#allocation2 + $0x30] sm:$0xff] 0.0
    %28 = vst [vmem:[#allocation2 + $0x38] sm:$0xff] 0.0
  $region21: #{resnet_forward.16} parent=0 // pred_fallthru
    _
  %v29 = vld [vmem:[#allocation2] sm:$0xff]
  %v30 = vld [vmem:[#allocation2 + $0x8] sm:$0xff]
  %v31 = vld [vmem:[#allocation2 + $0x10] sm:$0xff]
  %v32 = vld [vmem:[#allocation2 + $0x18] sm:$0xff]
  %v33 = vld [vmem:[#allocation2 + $0x20] sm:$0xff]
  %v34 = vld [vmem:[#allocation2 + $0x28] sm:$0xff]
  %v35 = vld [vmem:[#allocation2 + $0x30] sm:$0xff]
  %v36 = vld [vmem:[#allocation2 + $0x38] sm:$0xff]
  %v37 = vld [vmem:[%s0] sm:$0xf]
  %v38 = vld [vmem:[%s0 + $0x4] sm:$0xf]
  %v39 = vld [vmem:[%s0 + $0x8] sm:$0xf]
  %v40 = vld [vmem:[%s0 + $0xc] sm:$0xf]
  %v41 = vld [vmem:[%s1] sm:$0xff]
  %v42 = vld [vmem:[%s1 + $0x8] sm:$0xff]
  %v43 = vld [vmem:[%s1 + $0x10] sm:$0xff]
  %v44 = vld [vmem:[%s1 + $0x18] sm:$0xff]
  %v45 = vld [vmem:[%s1 + $0x20] sm:$0xff]
  %v46 = vld [vmem:[%s1 + $0x28] sm:$0xff]
  %v47 = vld [vmem:[%s1 + $0x30] sm:$0xff]
  %v48 = vld [vmem:[%s1 + $0x38] sm:$0xff]
  %v49 = vld [vmem:[%s1 + $0x40] sm:$0xff]
  %v50 = vld [vmem:[%s1 + $0x48] sm:$0xff]
  %v51 = vld [vmem:[%s1 + $0x50] sm:$0xff]
  %v52 = vld [vmem:[%s1 + $0x58] sm:$0xff]
  %v53 = vld [vmem:[%s1 + $0x60] sm:$0xff]
  %v54 = vld [vmem:[%s1 + $0x68] sm:$0xff]
  %v55 = vld [vmem:[%s1 + $0x70] sm:$0xff]
  %v56 = vld [vmem:[%s1 + $0x78] sm:$0xff]
  %v61 = vunpack.c.l.b16 %v37
  %v62 = vunpack.c.l.b16 %v38
  %v63 = vunpack.c.l.b16 %v39
  %v64 = vunpack.c.l.b16 %v40
  %v65 = vpack.c.b16 %v62, %v61
  %v66 = vpack.c.b16 %v64, %v63
  %v85 = vunpack.c.l.b16 %v41
  %v86 = vunpack.c.h.b16 %v41
  %v87 = vunpack.c.l.b16 %v42
  %v88 = vunpack.c.h.b16 %v42
  %v89 = vunpack.c.l.b16 %v43
  %v90 = vunpack.c.h.b16 %v43
  %v91 = vunpack.c.l.b16 %v44
  %v92 = vunpack.c.h.b16 %v44
  %v93 = vunpack.c.l.b16 %v45
  %v94 = vunpack.c.h.b16 %v45
  %v95 = vunpack.c.l.b16 %v46
  %v96 = vunpack.c.h.b16 %v46
  %v97 = vunpack.c.l.b16 %v47
  %v98 = vunpack.c.h.b16 %v47
  %v99 = vunpack.c.l.b16 %v48
  %v100 = vunpack.c.h.b16 %v48
  %v101 = vunpack.c.l.b16 %v49
  %v102 = vunpack.c.h.b16 %v49
  %v103 = vunpack.c.l.b16 %v50
  %v104 = vunpack.c.h.b16 %v50
  %v105 = vunpack.c.l.b16 %v51
  %v106 = vunpack.c.h.b16 %v51
  %v107 = vunpack.c.l.b16 %v52
  %v108 = vunpack.c.h.b16 %v52
  %v109 = vunpack.c.l.b16 %v53
  %v110 = vunpack.c.h.b16 %v53
  %v111 = vunpack.c.l.b16 %v54
  %v112 = vunpack.c.h.b16 %v54
  %v113 = vunpack.c.l.b16 %v55
  %v114 = vunpack.c.h.b16 %v55
  %v115 = vunpack.c.l.b16 %v56
  %v116 = vunpack.c.h.b16 %v56
  %v117 = vpack.c.b16 %v87, %v85
  %v118 = vpack.c.b16 %v88, %v86
  %v119 = vpack.c.b16 %v91, %v89
  %v120 = vpack.c.b16 %v92, %v90
  %v121 = vpack.c.b16 %v95, %v93
  %v122 = vpack.c.b16 %v96, %v94
  %v123 = vpack.c.b16 %v99, %v97
  %v124 = vpack.c.b16 %v100, %v98
  %v125 = vpack.c.b16 %v103, %v101
  %v126 = vpack.c.b16 %v104, %v102
  %v127 = vpack.c.b16 %v107, %v105
  %v128 = vpack.c.b16 %v108, %v106
  %v129 = vpack.c.b16 %v111, %v109
  %v130 = vpack.c.b16 %v112, %v110
  %v131 = vpack.c.b16 %v115, %v113
  %v132 = vpack.c.b16 %v116, %v114
  %149 = vmatpush.bf16.msra.mxu0 %v131
  %150 = vmatpush.bf16.msra.mxu0 %v129
  %151 = vmatpush.bf16.msra.mxu0 %v127
  %152 = vmatpush.bf16.msra.mxu0 %v125
  %153 = vmatpush.bf16.msra.mxu0 %v123
  %154 = vmatpush.bf16.msra.mxu0 %v121
  %155 = vmatpush.bf16.msra.mxu0 %v119
  %156 = vmatpush.bf16.msra.mxu0 %v117
  %157 = vmatmul.bf16.gmra.mxu0 %v65
  %v158 = vpop.f32.mrf.mxu0
  %v159 = vadd.f32 0.0, %v158
  %v160 = vpop.f32.mrf.mxu0
  %v161 = vadd.f32 0.0, %v160
  %162 = vmatmul.bf16.gmra.mxu0 %v66
  %v163 = vpop.f32.mrf.mxu0
  %v164 = vadd.f32 0.0, %v163
  %v165 = vpop.f32.mrf.mxu0
  %v166 = vadd.f32 0.0, %v165
  %167 = vdwg.mxu0
  %168 = vmatpush.bf16.msra.mxu0 %v132
  %169 = vmatpush.bf16.msra.mxu0 %v130
  %170 = vmatpush.bf16.msra.mxu0 %v128
  %171 = vmatpush.bf16.msra.mxu0 %v126
  %172 = vmatpush.bf16.msra.mxu0 %v124
  %173 = vmatpush.bf16.msra.mxu0 %v122
  %174 = vmatpush.bf16.msra.mxu0 %v120
  %175 = vmatpush.bf16.msra.mxu0 %v118
  %176 = vmatmul.bf16.gmra.mxu0 %v65
  %v177 = vpop.f32.mrf.mxu0
  %v178 = vadd.f32 0.0, %v177
  %v179 = vpop.f32.mrf.mxu0
  %v180 = vadd.f32 0.0, %v179
  %181 = vmatmul.bf16.gmra.mxu0 %v66
  %v182 = vpop.f32.mrf.mxu0
  %v183 = vadd.f32 0.0, %v182
  %v184 = vpop.f32.mrf.mxu0
  %v185 = vadd.f32 0.0, %v184
  %186 = vdwg.mxu0
  %v187 = vadd.f32 %v29, %v159
  %v188 = vadd.f32 %v30, %v178
  %v189 = vadd.f32 %v31, %v161
  %v190 = vadd.f32 %v32, %v180
  %v191 = vadd.f32 %v33, %v164
  %v192 = vadd.f32 %v34, %v183
  %v193 = vadd.f32 %v35, %v166
  %v194 = vadd.f32 %v36, %v185
  %195 = vst [vmem:[#allocation2] sm:$0xff] %v187
  %196 = vst [vmem:[#allocation2 + $0x8] sm:$0xff] %v188
  %197 = vst [vmem:[#allocation2 + $0x10] sm:$0xff] %v189
  %198 = vst [vmem:[#allocation2 + $0x18] sm:$0xff] %v190
  %199 = vst [vmem:[#allocation2 + $0x20] sm:$0xff] %v191
  %200 = vst [vmem:[#allocation2 + $0x28] sm:$0xff] %v192
  %201 = vst [vmem:[#allocation2 + $0x30] sm:$0xff] %v193
  %202 = vst [vmem:[#allocation2 + $0x38] sm:$0xff] %v194
  // Predicated region
  $region22: #{resnet_forward.16} parent=0 // pred_check
    %p203 = pneg %p17
  $region23: #{resnet_forward.16} parent=0 // pred_check_branch
    %205 = sbr.rel (%p203) target = $region25
  $region24: #{resnet_forward.16} parent=0 // pred_region
    %v206 = vld [vmem:[%s3] sm:$0xff]
    %v207 = vld [vmem:[%s3 + $0x8] sm:$0xff]
    %v208 = vld [vmem:[%s3 + $0x10] sm:$0xff]
    %v209 = vld [vmem:[%s3 + $0x18] sm:$0xff]
    %v210 = vunpack.c.l.bf16 %v206
    %v211 = vunpack.c.h.bf16 %v206
    %v212 = vunpack.c.l.bf16 %v207
    %v213 = vunpack.c.h.bf16 %v207
    %v214 = vunpack.c.l.bf16 %v208
    %v215 = vunpack.c.h.bf16 %v208
    %v216 = vunpack.c.l.bf16 %v209
    %v217 = vunpack.c.h.bf16 %v209
    %v218 = vld [vmem:[#allocation2] sm:$0xff]
    %v219 = vld [vmem:[#allocation2 + $0x8] sm:$0xff]
    %v220 = vld [vmem:[#allocation2 + $0x10] sm:$0xff]
    %v221 = vld [vmem:[#allocation2 + $0x18] sm:$0xff]
    %v222 = vld [vmem:[#allocation2 + $0x20] sm:$0xff]
    %v223 = vld [vmem:[#allocation2 + $0x28] sm:$0xff]
    %v224 = vld [vmem:[#allocation2 + $0x30] sm:$0xff]
    %v225 = vld [vmem:[#allocation2 + $0x38] sm:$0xff]
    %v226 = vld [vmem:[%s2] sm:$0x3]
    %v228 = vperm.slane %v226, 0
    %v229 = vperm.slane %v226, 1
    %v232 = vadd.f32 %v218, %v228
    %v233 = vadd.f32 %v219, %v229
    %v234 = vadd.f32 %v220, %v228
    %v235 = vadd.f32 %v221, %v229
    %v236 = vadd.f32 %v222, %v228
    %v237 = vadd.f32 %v223, %v229
    %v238 = vadd.f32 %v224, %v228
    %v239 = vadd.f32 %v225, %v229
    %v240 = vadd.f32 %v232, %v210
    %v241 = vadd.f32 %v233, %v211
    %v242 = vadd.f32 %v234, %v212
    %v243 = vadd.f32 %v235, %v213
    %v244 = vadd.f32 %v236, %v214
    %v245 = vadd.f32 %v237, %v215
    %v246 = vadd.f32 %v238, %v216
    %v247 = vadd.f32 %v239, %v217
    %v248 = vmax.f32 %v240, 0.0
    %v249 = vmax.f32 %v241, 0.0
    %v250 = vmax.f32 %v242, 0.0
    %v251 = vmax.f32 %v243, 0.0
    %v252 = vmax.f32 %v244, 0.0
    %v253 = vmax.f32 %v245, 0.0
    %v254 = vmax.f32 %v246, 0.0
    %v255 = vmax.f32 %v247, 0.0
    %v256 = vpack.c.bf16 %v249, %v248
    %v257 = vpack.c.bf16 %v251, %v250
    %v258 = vpack.c.bf16 %v253, %v252
    %v259 = vpack.c.bf16 %v255, %v254
    %260 = vst [vmem:[%s4] sm:$0xff] %v256
    %261 = vst [vmem:[%s4 + $0x8] sm:$0xff] %v257
    %262 = vst [vmem:[%s4 + $0x10] sm:$0xff] %v258
    %263 = vst [vmem:[%s4 + $0x18] sm:$0xff] %v259
  $region25: #{resnet_forward.16} parent=0 // pred_fallthru
    _
  // Predicated region
  $region26: #{resnet_forward.16} parent=0 // pred_check
    _
  $region27: #{resnet_forward.16} parent=0 // pred_check_branch
    %265 = sbr.rel (0) target = $region29
  $region28: #{resnet_forward.16} parent=0 // pred_region
    _
  $region29: #{resnet_forward.16} parent=0 // pred_fallthru
    _
  // Predicated region
  $region30: #{resnet_forward.16} parent=0 // pred_check
    _
  $region31: #{resnet_forward.16} parent=0 // pred_check_branch
    %267 = sbr.rel (0) target = $region33
  $region32: #{resnet_forward.16} parent=0 // pred_region
    _
  $region33: #{resnet_forward.16} parent=0 // pred_fallthru
    _

// kernel: resnet_forward.15
$region0: #{resnet_forward.15}
  #allocation0 [shape = 'u32[]', space=smem, size = 0x4, offset = 0x4, fixed_abs, tag = 'smem constant byte address 0x4 - core index']
  #allocation1 [shape = 'u32[72,128]{1,0:T(1,128)}', space=vmem, size = 0x9000, scoped, tag = 'internal scratch']
  #allocation2 [shape = 'f32[32,256]{1,0:T(8,128)}', space=vmem, size = 0x8000, scoped, tag = 'scratch operand']
  %s0 = inlined_call_operand.vmem [shape: bf16[32,128], index: 0, kind: input, shape index: {}]
  %s1 = inlined_call_operand.vmem [shape: bf16[128,256], index: 1, kind: input, shape index: {}]
  %s2 = inlined_call_operand.vmem [shape: f32[1,256], index: 2, kind: input, shape index: {}]
  %s3 = inlined_call_operand.vmem [shape: bf16[32,256], index: 3, kind: output, shape index: {}]
  %s4 = sld [smem:[#allocation0]]
  $region30: #{resnet_forward.15} parent=0
    _
  %s6 = ssub.s32 1, %s4
  %s7 = scalar_select 0, %s6, %s4
  // Predicated region
  $region2: #{resnet_forward.15} parent=0 // pred_check
    _
  $region3: #{resnet_forward.15} parent=0 // pred_check_branch
    %9 = sbr.rel (0) target = $region5
  $region4: #{resnet_forward.15} parent=0 // pred_region
    _
  $region5: #{resnet_forward.15} parent=0 // pred_fallthru
    _
  // Predicated region
  $region6: #{resnet_forward.15} parent=0 // pred_check
    _
  $region7: #{resnet_forward.15} parent=0 // pred_check_branch
    %11 = sbr.rel (0) target = $region9
  $region8: #{resnet_forward.15} parent=0 // pred_region
    _
  $region9: #{resnet_forward.15} parent=0 // pred_fallthru
    _
  // Predicated region
  $region10: #{resnet_forward.15} parent=0 // pred_check
    _
  $region11: #{resnet_forward.15} parent=0 // pred_check_branch
    %13 = sbr.rel (0) target = $region13
  $region12: #{resnet_forward.15} parent=0 // pred_region
    _
  $region13: #{resnet_forward.15} parent=0 // pred_fallthru
    _
  %p14 = scmp.eq.s32.totalorder 0, 0
  // Predicated region
  $region14: #{resnet_forward.15} parent=0 // pred_check
    %p15 = pneg %p14
  $region15: #{resnet_forward.15} parent=0 // pred_check_branch
    %17 = sbr.rel (%p15) target = $region17
  $region16: #{resnet_forward.15} parent=0 // pred_region
    %18 = vst [vmem:[#allocation2] sm:$0xff] 0.0
    %19 = vst [vmem:[#allocation2 + $0x8] sm:$0xff] 0.0
    %20 = vst [vmem:[#allocation2 + $0x10] sm:$0xff] 0.0
    %21 = vst [vmem:[#allocation2 + $0x18] sm:$0xff] 0.0
    %22 = vst [vmem:[#allocation2 + $0x20] sm:$0xff] 0.0
    %23 = vst [vmem:[#allocation2 + $0x28] sm:$0xff] 0.0
    %24 = vst [vmem:[#allocation2 + $0x30] sm:$0xff] 0.0
    %25 = vst [vmem:[#allocation2 + $0x38] sm:$0xff] 0.0
  $region17: #{resnet_forward.15} parent=0 // pred_fallthru
    _
  %v26 = vld [vmem:[#allocation2] sm:$0xff]
  %v27 = vld [vmem:[#allocation2 + $0x8] sm:$0xff]
  %v28 = vld [vmem:[#allocation2 + $0x10] sm:$0xff]
  %v29 = vld [vmem:[#allocation2 + $0x18] sm:$0xff]
  %v30 = vld [vmem:[#allocation2 + $0x20] sm:$0xff]
  %v31 = vld [vmem:[#allocation2 + $0x28] sm:$0xff]
  %v32 = vld [vmem:[#allocation2 + $0x30] sm:$0xff]
  %v33 = vld [vmem:[#allocation2 + $0x38] sm:$0xff]
  %v34 = vld [vmem:[%s0] sm:$0xf]
  %v35 = vld [vmem:[%s0 + $0x4] sm:$0xf]
  %v36 = vld [vmem:[%s0 + $0x8] sm:$0xf]
  %v37 = vld [vmem:[%s0 + $0xc] sm:$0xf]
  %v38 = vld [vmem:[%s1] sm:$0xff]
  %v39 = vld [vmem:[%s1 + $0x8] sm:$0xff]
  %v40 = vld [vmem:[%s1 + $0x10] sm:$0xff]
  %v41 = vld [vmem:[%s1 + $0x18] sm:$0xff]
  %v42 = vld [vmem:[%s1 + $0x20] sm:$0xff]
  %v43 = vld [vmem:[%s1 + $0x28] sm:$0xff]
  %v44 = vld [vmem:[%s1 + $0x30] sm:$0xff]
  %v45 = vld [vmem:[%s1 + $0x38] sm:$0xff]
  %v46 = vld [vmem:[%s1 + $0x40] sm:$0xff]
  %v47 = vld [vmem:[%s1 + $0x48] sm:$0xff]
  %v48 = vld [vmem:[%s1 + $0x50] sm:$0xff]
  %v49 = vld [vmem:[%s1 + $0x58] sm:$0xff]
  %v50 = vld [vmem:[%s1 + $0x60] sm:$0xff]
  %v51 = vld [vmem:[%s1 + $0x68] sm:$0xff]
  %v52 = vld [vmem:[%s1 + $0x70] sm:$0xff]
  %v53 = vld [vmem:[%s1 + $0x78] sm:$0xff]
  %v58 = vunpack.c.l.b16 %v34
  %v59 = vunpack.c.l.b16 %v35
  %v60 = vunpack.c.l.b16 %v36
  %v61 = vunpack.c.l.b16 %v37
  %v62 = vpack.c.b16 %v59, %v58
  %v63 = vpack.c.b16 %v61, %v60
  %v82 = vunpack.c.l.b16 %v38
  %v83 = vunpack.c.h.b16 %v38
  %v84 = vunpack.c.l.b16 %v39
  %v85 = vunpack.c.h.b16 %v39
  %v86 = vunpack.c.l.b16 %v40
  %v87 = vunpack.c.h.b16 %v40
  %v88 = vunpack.c.l.b16 %v41
  %v89 = vunpack.c.h.b16 %v41
  %v90 = vunpack.c.l.b16 %v42
  %v91 = vunpack.c.h.b16 %v42
  %v92 = vunpack.c.l.b16 %v43
  %v93 = vunpack.c.h.b16 %v43
  %v94 = vunpack.c.l.b16 %v44
  %v95 = vunpack.c.h.b16 %v44
  %v96 = vunpack.c.l.b16 %v45
  %v97 = vunpack.c.h.b16 %v45
  %v98 = vunpack.c.l.b16 %v46
  %v99 = vunpack.c.h.b16 %v46
  %v100 = vunpack.c.l.b16 %v47
  %v101 = vunpack.c.h.b16 %v47
  %v102 = vunpack.c.l.b16 %v48
  %v103 = vunpack.c.h.b16 %v48
  %v104 = vunpack.c.l.b16 %v49
  %v105 = vunpack.c.h.b16 %v49
  %v106 = vunpack.c.l.b16 %v50
  %v107 = vunpack.c.h.b16 %v50
  %v108 = vunpack.c.l.b16 %v51
  %v109 = vunpack.c.h.b16 %v51
  %v110 = vunpack.c.l.b16 %v52
  %v111 = vunpack.c.h.b16 %v52
  %v112 = vunpack.c.l.b16 %v53
  %v113 = vunpack.c.h.b16 %v53
  %v114 = vpack.c.b16 %v84, %v82
  %v115 = vpack.c.b16 %v85, %v83
  %v116 = vpack.c.b16 %v88, %v86
  %v117 = vpack.c.b16 %v89, %v87
  %v118 = vpack.c.b16 %v92, %v90
  %v119 = vpack.c.b16 %v93, %v91
  %v120 = vpack.c.b16 %v96, %v94
  %v121 = vpack.c.b16 %v97, %v95
  %v122 = vpack.c.b16 %v100, %v98
  %v123 = vpack.c.b16 %v101, %v99
  %v124 = vpack.c.b16 %v104, %v102
  %v125 = vpack.c.b16 %v105, %v103
  %v126 = vpack.c.b16 %v108, %v106
  %v127 = vpack.c.b16 %v109, %v107
  %v128 = vpack.c.b16 %v112, %v110
  %v129 = vpack.c.b16 %v113, %v111
  %146 = vmatpush.bf16.msra.mxu0 %v128
  %147 = vmatpush.bf16.msra.mxu0 %v126
  %148 = vmatpush.bf16.msra.mxu0 %v124
  %149 = vmatpush.bf16.msra.mxu0 %v122
  %150 = vmatpush.bf16.msra.mxu0 %v120
  %151 = vmatpush.bf16.msra.mxu0 %v118
  %152 = vmatpush.bf16.msra.mxu0 %v116
  %153 = vmatpush.bf16.msra.mxu0 %v114
  %154 = vmatmul.bf16.gmra.mxu0 %v62
  %v155 = vpop.f32.mrf.mxu0
  %v156 = vadd.f32 0.0, %v155
  %v157 = vpop.f32.mrf.mxu0
  %v158 = vadd.f32 0.0, %v157
  %159 = vmatmul.bf16.gmra.mxu0 %v63
  %v160 = vpop.f32.mrf.mxu0
  %v161 = vadd.f32 0.0, %v160
  %v162 = vpop.f32.mrf.mxu0
  %v163 = vadd.f32 0.0, %v162
  %164 = vdwg.mxu0
  %165 = vmatpush.bf16.msra.mxu0 %v129
  %166 = vmatpush.bf16.msra.mxu0 %v127
  %167 = vmatpush.bf16.msra.mxu0 %v125
  %168 = vmatpush.bf16.msra.mxu0 %v123
  %169 = vmatpush.bf16.msra.mxu0 %v121
  %170 = vmatpush.bf16.msra.mxu0 %v119
  %171 = vmatpush.bf16.msra.mxu0 %v117
  %172 = vmatpush.bf16.msra.mxu0 %v115
  %173 = vmatmul.bf16.gmra.mxu0 %v62
  %v174 = vpop.f32.mrf.mxu0
  %v175 = vadd.f32 0.0, %v174
  %v176 = vpop.f32.mrf.mxu0
  %v177 = vadd.f32 0.0, %v176
  %178 = vmatmul.bf16.gmra.mxu0 %v63
  %v179 = vpop.f32.mrf.mxu0
  %v180 = vadd.f32 0.0, %v179
  %v181 = vpop.f32.mrf.mxu0
  %v182 = vadd.f32 0.0, %v181
  %183 = vdwg.mxu0
  %v184 = vadd.f32 %v26, %v156
  %v185 = vadd.f32 %v27, %v175
  %v186 = vadd.f32 %v28, %v158
  %v187 = vadd.f32 %v29, %v177
  %v188 = vadd.f32 %v30, %v161
  %v189 = vadd.f32 %v31, %v180
  %v190 = vadd.f32 %v32, %v163
  %v191 = vadd.f32 %v33, %v182
  %192 = vst [vmem:[#allocation2] sm:$0xff] %v184
  %193 = vst [vmem:[#allocation2 + $0x8] sm:$0xff] %v185
  %194 = vst [vmem:[#allocation2 + $0x10] sm:$0xff] %v186
  %195 = vst [vmem:[#allocation2 + $0x18] sm:$0xff] %v187
  %196 = vst [vmem:[#allocation2 + $0x20] sm:$0xff] %v188
  %197 = vst [vmem:[#allocation2 + $0x28] sm:$0xff] %v189
  %198 = vst [vmem:[#allocation2 + $0x30] sm:$0xff] %v190
  %199 = vst [vmem:[#allocation2 + $0x38] sm:$0xff] %v191
  // Predicated region
  $region18: #{resnet_forward.15} parent=0 // pred_check
    %p200 = pneg %p14
  $region19: #{resnet_forward.15} parent=0 // pred_check_branch
    %202 = sbr.rel (%p200) target = $region21
  $region20: #{resnet_forward.15} parent=0 // pred_region
    %v203 = vld [vmem:[#allocation2] sm:$0xff]
    %v204 = vld [vmem:[#allocation2 + $0x8] sm:$0xff]
    %v205 = vld [vmem:[#allocation2 + $0x10] sm:$0xff]
    %v206 = vld [vmem:[#allocation2 + $0x18] sm:$0xff]
    %v207 = vld [vmem:[#allocation2 + $0x20] sm:$0xff]
    %v208 = vld [vmem:[#allocation2 + $0x28] sm:$0xff]
    %v209 = vld [vmem:[#allocation2 + $0x30] sm:$0xff]
    %v210 = vld [vmem:[#allocation2 + $0x38] sm:$0xff]
    %v211 = vld [vmem:[%s2] sm:$0x3]
    %v213 = vperm.slane %v211, 0
    %v214 = vperm.slane %v211, 1
    %v217 = vadd.f32 %v203, %v213
    %v218 = vadd.f32 %v204, %v214
    %v219 = vadd.f32 %v205, %v213
    %v220 = vadd.f32 %v206, %v214
    %v221 = vadd.f32 %v207, %v213
    %v222 = vadd.f32 %v208, %v214
    %v223 = vadd.f32 %v209, %v213
    %v224 = vadd.f32 %v210, %v214
    %v225 = vpack.c.bf16 %v218, %v217
    %v226 = vpack.c.bf16 %v220, %v219
    %v227 = vpack.c.bf16 %v222, %v221
    %v228 = vpack.c.bf16 %v224, %v223
    %229 = vst [vmem:[%s3] sm:$0xff] %v225
    %230 = vst [vmem:[%s3 + $0x8] sm:$0xff] %v226
    %231 = vst [vmem:[%s3 + $0x10] sm:$0xff] %v227
    %232 = vst [vmem:[%s3 + $0x18] sm:$0xff] %v228
  $region21: #{resnet_forward.15} parent=0 // pred_fallthru
    _
  // Predicated region
  $region22: #{resnet_forward.15} parent=0 // pred_check
    _
  $region23: #{resnet_forward.15} parent=0 // pred_check_branch
    %234 = sbr.rel (0) target = $region25
  $region24: #{resnet_forward.15} parent=0 // pred_region
    _
  $region25: #{resnet_forward.15} parent=0 // pred_fallthru
    _
  // Predicated region
  $region26: #{resnet_forward.15} parent=0 // pred_check
    _
  $region27: #{resnet_forward.15} parent=0 // pred_check_branch
    %236 = sbr.rel (0) target = $region29
  $region28: #{resnet_forward.15} parent=0 // pred_region
    _
  $region29: #{resnet_forward.15} parent=0 // pred_fallthru
    _

// kernel: resnet_forward.17
$region0: #{resnet_forward.17}
  #allocation0 [shape = 'u32[]', space=smem, size = 0x4, offset = 0x4, fixed_abs, tag = 'smem constant byte address 0x4 - core index']
  #allocation1 [shape = 'u32[72,128]{1,0:T(1,128)}', space=vmem, size = 0x9000, scoped, tag = 'internal scratch']
  #allocation2 [shape = 'f32[32,128]{1,0:T(8,128)}', space=vmem, size = 0x4000, scoped, tag = 'scratch operand']
  %s0 = inlined_call_operand.vmem [shape: bf16[32,256], index: 0, kind: input, shape index: {}]
  %s1 = inlined_call_operand.vmem [shape: bf16[256,128], index: 1, kind: input, shape index: {}]
  %s2 = inlined_call_operand.vmem [shape: f32[1,128], index: 2, kind: input, shape index: {}]
  %s3 = inlined_call_operand.vmem [shape: bf16[32,128], index: 3, kind: output, shape index: {}]
  %s4 = sld [smem:[#allocation0]]
  $region30: #{resnet_forward.17} parent=0
    _
  %s6 = ssub.s32 1, %s4
  %s7 = scalar_select 0, %s6, %s4
  // Predicated region
  $region2: #{resnet_forward.17} parent=0 // pred_check
    _
  $region3: #{resnet_forward.17} parent=0 // pred_check_branch
    %9 = sbr.rel (0) target = $region5
  $region4: #{resnet_forward.17} parent=0 // pred_region
    _
  $region5: #{resnet_forward.17} parent=0 // pred_fallthru
    _
  // Predicated region
  $region6: #{resnet_forward.17} parent=0 // pred_check
    _
  $region7: #{resnet_forward.17} parent=0 // pred_check_branch
    %11 = sbr.rel (0) target = $region9
  $region8: #{resnet_forward.17} parent=0 // pred_region
    _
  $region9: #{resnet_forward.17} parent=0 // pred_fallthru
    _
  // Predicated region
  $region10: #{resnet_forward.17} parent=0 // pred_check
    _
  $region11: #{resnet_forward.17} parent=0 // pred_check_branch
    %13 = sbr.rel (0) target = $region13
  $region12: #{resnet_forward.17} parent=0 // pred_region
    _
  $region13: #{resnet_forward.17} parent=0 // pred_fallthru
    _
  %p14 = scmp.eq.s32.totalorder 0, 0
  // Predicated region
  $region14: #{resnet_forward.17} parent=0 // pred_check
    %p15 = pneg %p14
  $region15: #{resnet_forward.17} parent=0 // pred_check_branch
    %17 = sbr.rel (%p15) target = $region17
  $region16: #{resnet_forward.17} parent=0 // pred_region
    %18 = vst [vmem:[#allocation2] sm:$0xff] 0.0
    %19 = vst [vmem:[#allocation2 + $0x8] sm:$0xff] 0.0
    %20 = vst [vmem:[#allocation2 + $0x10] sm:$0xff] 0.0
    %21 = vst [vmem:[#allocation2 + $0x18] sm:$0xff] 0.0
  $region17: #{resnet_forward.17} parent=0 // pred_fallthru
    _
  %v22 = vld [vmem:[#allocation2] sm:$0xff]
  %v23 = vld [vmem:[#allocation2 + $0x8] sm:$0xff]
  %v24 = vld [vmem:[#allocation2 + $0x10] sm:$0xff]
  %v25 = vld [vmem:[#allocation2 + $0x18] sm:$0xff]
  %v26 = vld [vmem:[%s0] sm:$0xff]
  %v27 = vld [vmem:[%s0 + $0x8] sm:$0xff]
  %v28 = vld [vmem:[%s0 + $0x10] sm:$0xff]
  %v29 = vld [vmem:[%s0 + $0x18] sm:$0xff]
  %v30 = vld [vmem:[%s1] sm:$0xf]
  %v31 = vld [vmem:[%s1 + $0x4] sm:$0xf]
  %v32 = vld [vmem:[%s1 + $0x8] sm:$0xf]
  %v33 = vld [vmem:[%s1 + $0xc] sm:$0xf]
  %v34 = vld [vmem:[%s1 + $0x10] sm:$0xf]
  %v35 = vld [vmem:[%s1 + $0x14] sm:$0xf]
  %v36 = vld [vmem:[%s1 + $0x18] sm:$0xf]
  %v37 = vld [vmem:[%s1 + $0x1c] sm:$0xf]
  %v38 = vld [vmem:[%s1 + $0x20] sm:$0xf]
  %v39 = vld [vmem:[%s1 + $0x24] sm:$0xf]
  %v40 = vld [vmem:[%s1 + $0x28] sm:$0xf]
  %v41 = vld [vmem:[%s1 + $0x2c] sm:$0xf]
  %v42 = vld [vmem:[%s1 + $0x30] sm:$0xf]
  %v43 = vld [vmem:[%s1 + $0x34] sm:$0xf]
  %v44 = vld [vmem:[%s1 + $0x38] sm:$0xf]
  %v45 = vld [vmem:[%s1 + $0x3c] sm:$0xf]
  %v46 = vld [vmem:[%s1 + $0x40] sm:$0xf]
  %v47 = vld [vmem:[%s1 + $0x44] sm:$0xf]
  %v48 = vld [vmem:[%s1 + $0x48] sm:$0xf]
  %v49 = vld [vmem:[%s1 + $0x4c] sm:$0xf]
  %v50 = vld [vmem:[%s1 + $0x50] sm:$0xf]
  %v51 = vld [vmem:[%s1 + $0x54] sm:$0xf]
  %v52 = vld [vmem:[%s1 + $0x58] sm:$0xf]
  %v53 = vld [vmem:[%s1 + $0x5c] sm:$0xf]
  %v54 = vld [vmem:[%s1 + $0x60] sm:$0xf]
  %v55 = vld [vmem:[%s1 + $0x64] sm:$0xf]
  %v56 = vld [vmem:[%s1 + $0x68] sm:$0xf]
  %v57 = vld [vmem:[%s1 + $0x6c] sm:$0xf]
  %v58 = vld [vmem:[%s1 + $0x70] sm:$0xf]
  %v59 = vld [vmem:[%s1 + $0x74] sm:$0xf]
  %v60 = vld [vmem:[%s1 + $0x78] sm:$0xf]
  %v61 = vld [vmem:[%s1 + $0x7c] sm:$0xf]
  %v66 = vunpack.c.l.b16 %v26
  %v67 = vunpack.c.h.b16 %v26
  %v68 = vunpack.c.l.b16 %v27
  %v69 = vunpack.c.h.b16 %v27
  %v70 = vunpack.c.l.b16 %v28
  %v71 = vunpack.c.h.b16 %v28
  %v72 = vunpack.c.l.b16 %v29
  %v73 = vunpack.c.h.b16 %v29
  %v74 = vpack.c.b16 %v68, %v66
  %v75 = vpack.c.b16 %v69, %v67
  %v76 = vpack.c.b16 %v72, %v70
  %v77 = vpack.c.b16 %v73, %v71
  %v114 = vunpack.c.l.b16 %v30
  %v115 = vunpack.c.l.b16 %v31
  %v116 = vunpack.c.l.b16 %v32
  %v117 = vunpack.c.l.b16 %v33
  %v118 = vunpack.c.l.b16 %v34
  %v119 = vunpack.c.l.b16 %v35
  %v120 = vunpack.c.l.b16 %v36
  %v121 = vunpack.c.l.b16 %v37
  %v122 = vunpack.c.l.b16 %v38
  %v123 = vunpack.c.l.b16 %v39
  %v124 = vunpack.c.l.b16 %v40
  %v125 = vunpack.c.l.b16 %v41
  %v126 = vunpack.c.l.b16 %v42
  %v127 = vunpack.c.l.b16 %v43
  %v128 = vunpack.c.l.b16 %v44
  %v129 = vunpack.c.l.b16 %v45
  %v130 = vunpack.c.l.b16 %v46
  %v131 = vunpack.c.l.b16 %v47
  %v132 = vunpack.c.l.b16 %v48
  %v133 = vunpack.c.l.b16 %v49
  %v134 = vunpack.c.l.b16 %v50
  %v135 = vunpack.c.l.b16 %v51
  %v136 = vunpack.c.l.b16 %v52
  %v137 = vunpack.c.l.b16 %v53
  %v138 = vunpack.c.l.b16 %v54
  %v139 = vunpack.c.l.b16 %v55
  %v140 = vunpack.c.l.b16 %v56
  %v141 = vunpack.c.l.b16 %v57
  %v142 = vunpack.c.l.b16 %v58
  %v143 = vunpack.c.l.b16 %v59
  %v144 = vunpack.c.l.b16 %v60
  %v145 = vunpack.c.l.b16 %v61
  %v146 = vpack.c.b16 %v115, %v114
  %v147 = vpack.c.b16 %v117, %v116
  %v148 = vpack.c.b16 %v119, %v118
  %v149 = vpack.c.b16 %v121, %v120
  %v150 = vpack.c.b16 %v123, %v122
  %v151 = vpack.c.b16 %v125, %v124
  %v152 = vpack.c.b16 %v127, %v126
  %v153 = vpack.c.b16 %v129, %v128
  %v154 = vpack.c.b16 %v131, %v130
  %v155 = vpack.c.b16 %v133, %v132
  %v156 = vpack.c.b16 %v135, %v134
  %v157 = vpack.c.b16 %v137, %v136
  %v158 = vpack.c.b16 %v139, %v138
  %v159 = vpack.c.b16 %v141, %v140
  %v160 = vpack.c.b16 %v143, %v142
  %v161 = vpack.c.b16 %v145, %v144
  %178 = vmatpush.bf16.msra.mxu0 %v153
  %179 = vmatpush.bf16.msra.mxu0 %v152
  %180 = vmatpush.bf16.msra.mxu0 %v151
  %181 = vmatpush.bf16.msra.mxu0 %v150
  %182 = vmatpush.bf16.msra.mxu0 %v149
  %183 = vmatpush.bf16.msra.mxu0 %v148
  %184 = vmatpush.bf16.msra.mxu0 %v147
  %185 = vmatpush.bf16.msra.mxu0 %v146
  %186 = vmatmul.bf16.gmra.mxu0 %v74
  %v187 = vpop.f32.mrf.mxu0
  %v188 = vadd.f32 0.0, %v187
  %v189 = vpop.f32.mrf.mxu0
  %v190 = vadd.f32 0.0, %v189
  %191 = vmatmul.bf16.gmra.mxu0 %v76
  %v192 = vpop.f32.mrf.mxu0
  %v193 = vadd.f32 0.0, %v192
  %v194 = vpop.f32.mrf.mxu0
  %v195 = vadd.f32 0.0, %v194
  %196 = vdwg.mxu0
  %197 = vmatpush.bf16.msra.mxu0 %v161
  %198 = vmatpush.bf16.msra.mxu0 %v160
  %199 = vmatpush.bf16.msra.mxu0 %v159
  %200 = vmatpush.bf16.msra.mxu0 %v158
  %201 = vmatpush.bf16.msra.mxu0 %v157
  %202 = vmatpush.bf16.msra.mxu0 %v156
  %203 = vmatpush.bf16.msra.mxu0 %v155
  %204 = vmatpush.bf16.msra.mxu0 %v154
  %205 = vmatmul.bf16.gmra.mxu0 %v75
  %v206 = vpop.f32.mrf.mxu0
  %v207 = vadd.f32 %v188, %v206
  %v208 = vpop.f32.mrf.mxu0
  %v209 = vadd.f32 %v190, %v208
  %210 = vmatmul.bf16.gmra.mxu0 %v77
  %v211 = vpop.f32.mrf.mxu0
  %v212 = vadd.f32 %v193, %v211
  %v213 = vpop.f32.mrf.mxu0
  %v214 = vadd.f32 %v195, %v213
  %215 = vdwg.mxu0
  %v216 = vadd.f32 %v22, %v207
  %v217 = vadd.f32 %v23, %v209
  %v218 = vadd.f32 %v24, %v212
  %v219 = vadd.f32 %v25, %v214
  %220 = vst [vmem:[#allocation2] sm:$0xff] %v216
  %221 = vst [vmem:[#allocation2 + $0x8] sm:$0xff] %v217
  %222 = vst [vmem:[#allocation2 + $0x10] sm:$0xff] %v218
  %223 = vst [vmem:[#allocation2 + $0x18] sm:$0xff] %v219
  // Predicated region
  $region18: #{resnet_forward.17} parent=0 // pred_check
    %p224 = pneg %p14
  $region19: #{resnet_forward.17} parent=0 // pred_check_branch
    %226 = sbr.rel (%p224) target = $region21
  $region20: #{resnet_forward.17} parent=0 // pred_region
    %v227 = vld [vmem:[#allocation2] sm:$0xff]
    %v228 = vld [vmem:[#allocation2 + $0x8] sm:$0xff]
    %v229 = vld [vmem:[#allocation2 + $0x10] sm:$0xff]
    %v230 = vld [vmem:[#allocation2 + $0x18] sm:$0xff]
    %v231 = vld [vmem:[%s2] sm:$0x1]
    %v233 = vperm.slane %v231, 0
    %v235 = vadd.f32 %v227, %v233
    %v236 = vadd.f32 %v228, %v233
    %v237 = vadd.f32 %v229, %v233
    %v238 = vadd.f32 %v230, %v233
    %v239 = vmax.f32 %v235, 0.0
    %v240 = vmax.f32 %v236, 0.0
    %v241 = vmax.f32 %v237, 0.0
    %v242 = vmax.f32 %v238, 0.0
    %v243 = vpack.c.bf16 %v239, %v239
    %v244 = vpack.c.bf16 %v240, %v240
    %v245 = vpack.c.bf16 %v241, %v241
    %v246 = vpack.c.bf16 %v242, %v242
    %247 = vst [vmem:[%s3] sm:$0xf] %v243
    %248 = vst [vmem:[%s3 + $0x4] sm:$0xf] %v244
    %249 = vst [vmem:[%s3 + $0x8] sm:$0xf] %v245
    %250 = vst [vmem:[%s3 + $0xc] sm:$0xf] %v246
  $region21: #{resnet_forward.17} parent=0 // pred_fallthru
    _
  // Predicated region
  $region22: #{resnet_forward.17} parent=0 // pred_check
    _
  $region23: #{resnet_forward.17} parent=0 // pred_check_branch
    %252 = sbr.rel (0) target = $region25
  $region24: #{resnet_forward.17} parent=0 // pred_region
    _
  $region25: #{resnet_forward.17} parent=0 // pred_fallthru
    _
  // Predicated region
  $region26: #{resnet_forward.17} parent=0 // pred_check
    _
  $region27: #{resnet_forward.17} parent=0 // pred_check_branch
    %254 = sbr.rel (0) target = $region29
  $region28: #{resnet_forward.17} parent=0 // pred_region
    _
  $region29: #{resnet_forward.17} parent=0 // pred_fallthru
    _

// kernel: resnet_forward.18
$region0: #{resnet_forward.18}
  #allocation0 [shape = 'u32[]', space=smem, size = 0x4, offset = 0x4, fixed_abs, tag = 'smem constant byte address 0x4 - core index']
  #allocation1 [shape = 'u32[72,128]{1,0:T(1,128)}', space=vmem, size = 0x9000, scoped, tag = 'internal scratch']
  #allocation2 [shape = 'f32[8,128]{1,0:T(8,128)}', space=vmem, size = 0x1000, scoped, tag = 'scratch operand']
  %s0 = inlined_call_operand.vmem [shape: bf16[8,1152], index: 0, kind: input, shape index: {}]
  %s1 = inlined_call_operand.vmem [shape: bf16[1152,128], index: 1, kind: input, shape index: {}]
  %s2 = inlined_call_operand.vmem [shape: f32[1,128], index: 2, kind: input, shape index: {}]
  %s3 = inlined_call_operand.vmem [shape: bf16[8,128], index: 3, kind: output, shape index: {}]
  %s4 = sld [smem:[#allocation0]]
  $region30: #{resnet_forward.18} parent=0
    _
  %s6 = ssub.s32 1, %s4
  %s7 = scalar_select 0, %s6, %s4
  // Predicated region
  $region2: #{resnet_forward.18} parent=0 // pred_check
    _
  $region3: #{resnet_forward.18} parent=0 // pred_check_branch
    %9 = sbr.rel (0) target = $region5
  $region4: #{resnet_forward.18} parent=0 // pred_region
    _
  $region5: #{resnet_forward.18} parent=0 // pred_fallthru
    _
  // Predicated region
  $region6: #{resnet_forward.18} parent=0 // pred_check
    _
  $region7: #{resnet_forward.18} parent=0 // pred_check_branch
    %11 = sbr.rel (0) target = $region9
  $region8: #{resnet_forward.18} parent=0 // pred_region
    _
  $region9: #{resnet_forward.18} parent=0 // pred_fallthru
    _
  // Predicated region
  $region10: #{resnet_forward.18} parent=0 // pred_check
    _
  $region11: #{resnet_forward.18} parent=0 // pred_check_branch
    %13 = sbr.rel (0) target = $region13
  $region12: #{resnet_forward.18} parent=0 // pred_region
    _
  $region13: #{resnet_forward.18} parent=0 // pred_fallthru
    _
  %p14 = scmp.eq.s32.totalorder 0, 0
  // Predicated region
  $region14: #{resnet_forward.18} parent=0 // pred_check
    %p15 = pneg %p14
  $region15: #{resnet_forward.18} parent=0 // pred_check_branch
    %17 = sbr.rel (%p15) target = $region17
  $region16: #{resnet_forward.18} parent=0 // pred_region
    %18 = vst [vmem:[#allocation2] sm:$0xff] 0.0
  $region17: #{resnet_forward.18} parent=0 // pred_fallthru
    _
  %v19 = vld [vmem:[#allocation2] sm:$0xff]
  %v20 = vld [vmem:[%s0] sm:$0xff]
  %v21 = vld [vmem:[%s0 + $0x8] sm:$0xff]
  %v22 = vld [vmem:[%s0 + $0x10] sm:$0xff]
  %v23 = vld [vmem:[%s0 + $0x18] sm:$0xff]
  %v24 = vld [vmem:[%s0 + $0x20] sm:$0xf]
  %v25 = vld [vmem:[%s1] sm:$0xf]
  %v26 = vld [vmem:[%s1 + $0x4] sm:$0xf]
  %v27 = vld [vmem:[%s1 + $0x8] sm:$0xf]
  %v28 = vld [vmem:[%s1 + $0xc] sm:$0xf]
  %v29 = vld [vmem:[%s1 + $0x10] sm:$0xf]
  %v30 = vld [vmem:[%s1 + $0x14] sm:$0xf]
  %v31 = vld [vmem:[%s1 + $0x18] sm:$0xf]
  %v32 = vld [vmem:[%s1 + $0x1c] sm:$0xf]
  %v33 = vld [vmem:[%s1 + $0x20] sm:$0xf]
  %v34 = vld [vmem:[%s1 + $0x24] sm:$0xf]
  %v35 = vld [vmem:[%s1 + $0x28] sm:$0xf]
  %v36 = vld [vmem:[%s1 + $0x2c] sm:$0xf]
  %v37 = vld [vmem:[%s1 + $0x30] sm:$0xf]
  %v38 = vld [vmem:[%s1 + $0x34] sm:$0xf]
  %v39 = vld [vmem:[%s1 + $0x38] sm:$0xf]
  %v40 = vld [vmem:[%s1 + $0x3c] sm:$0xf]
  %v41 = vld [vmem:[%s1 + $0x40] sm:$0xf]
  %v42 = vld [vmem:[%s1 + $0x44] sm:$0xf]
  %v43 = vld [vmem:[%s1 + $0x48] sm:$0xf]
  %v44 = vld [vmem:[%s1 + $0x4c] sm:$0xf]
  %v45 = vld [vmem:[%s1 + $0x50] sm:$0xf]
  %v46 = vld [vmem:[%s1 + $0x54] sm:$0xf]
  %v47 = vld [vmem:[%s1 + $0x58] sm:$0xf]
  %v48 = vld [vmem:[%s1 + $0x5c] sm:$0xf]
  %v49 = vld [vmem:[%s1 + $0x60] sm:$0xf]
  %v50 = vld [vmem:[%s1 + $0x64] sm:$0xf]
  %v51 = vld [vmem:[%s1 + $0x68] sm:$0xf]
  %v52 = vld [vmem:[%s1 + $0x6c] sm:$0xf]
  %v53 = vld [vmem:[%s1 + $0x70] sm:$0xf]
  %v54 = vld [vmem:[%s1 + $0x74] sm:$0xf]
  %v55 = vld [vmem:[%s1 + $0x78] sm:$0xf]
  %v56 = vld [vmem:[%s1 + $0x7c] sm:$0xf]
  %v57 = vld [vmem:[%s1 + $0x80] sm:$0xf]
  %v58 = vld [vmem:[%s1 + $0x84] sm:$0xf]
  %v59 = vld [vmem:[%s1 + $0x88] sm:$0xf]
  %v60 = vld [vmem:[%s1 + $0x8c] sm:$0xf]
  %v61 = vld [vmem:[%s1 + $0x90] sm:$0xf]
  %v62 = vld [vmem:[%s1 + $0x94] sm:$0xf]
  %v63 = vld [vmem:[%s1 + $0x98] sm:$0xf]
  %v64 = vld [vmem:[%s1 + $0x9c] sm:$0xf]
  %v65 = vld [vmem:[%s1 + $0xa0] sm:$0xf]
  %v66 = vld [vmem:[%s1 + $0xa4] sm:$0xf]
  %v67 = vld [vmem:[%s1 + $0xa8] sm:$0xf]
  %v68 = vld [vmem:[%s1 + $0xac] sm:$0xf]
  %v69 = vld [vmem:[%s1 + $0xb0] sm:$0xf]
  %v70 = vld [vmem:[%s1 + $0xb4] sm:$0xf]
  %v71 = vld [vmem:[%s1 + $0xb8] sm:$0xf]
  %v72 = vld [vmem:[%s1 + $0xbc] sm:$0xf]
  %v73 = vld [vmem:[%s1 + $0xc0] sm:$0xf]
  %v74 = vld [vmem:[%s1 + $0xc4] sm:$0xf]
  %v75 = vld [vmem:[%s1 + $0xc8] sm:$0xf]
  %v76 = vld [vmem:[%s1 + $0xcc] sm:$0xf]
  %v77 = vld [vmem:[%s1 + $0xd0] sm:$0xf]
  %v78 = vld [vmem:[%s1 + $0xd4] sm:$0xf]
  %v79 = vld [vmem:[%s1 + $0xd8] sm:$0xf]
  %v80 = vld [vmem:[%s1 + $0xdc] sm:$0xf]
  %v81 = vld [vmem:[%s1 + $0xe0] sm:$0xf]
  %v82 = vld [vmem:[%s1 + $0xe4] sm:$0xf]
  %v83 = vld [vmem:[%s1 + $0xe8] sm:$0xf]
  %v84 = vld [vmem:[%s1 + $0xec] sm:$0xf]
  %v85 = vld [vmem:[%s1 + $0xf0] sm:$0xf]
  %v86 = vld [vmem:[%s1 + $0xf4] sm:$0xf]
  %v87 = vld [vmem:[%s1 + $0xf8] sm:$0xf]
  %v88 = vld [vmem:[%s1 + $0xfc] sm:$0xf]
  %v89 = vld [vmem:[%s1 + $0x100] sm:$0xf]
  %v90 = vld [vmem:[%s1 + $0x104] sm:$0xf]
  %v91 = vld [vmem:[%s1 + $0x108] sm:$0xf]
  %v92 = vld [vmem:[%s1 + $0x10c] sm:$0xf]
  %v93 = vld [vmem:[%s1 + $0x110] sm:$0xf]
  %v94 = vld [vmem:[%s1 + $0x114] sm:$0xf]
  %v95 = vld [vmem:[%s1 + $0x118] sm:$0xf]
  %v96 = vld [vmem:[%s1 + $0x11c] sm:$0xf]
  %v97 = vld [vmem:[%s1 + $0x120] sm:$0xf]
  %v98 = vld [vmem:[%s1 + $0x124] sm:$0xf]
  %v99 = vld [vmem:[%s1 + $0x128] sm:$0xf]
  %v100 = vld [vmem:[%s1 + $0x12c] sm:$0xf]
  %v101 = vld [vmem:[%s1 + $0x130] sm:$0xf]
  %v102 = vld [vmem:[%s1 + $0x134] sm:$0xf]
  %v103 = vld [vmem:[%s1 + $0x138] sm:$0xf]
  %v104 = vld [vmem:[%s1 + $0x13c] sm:$0xf]
  %v105 = vld [vmem:[%s1 + $0x140] sm:$0xf]
  %v106 = vld [vmem:[%s1 + $0x144] sm:$0xf]
  %v107 = vld [vmem:[%s1 + $0x148] sm:$0xf]
  %v108 = vld [vmem:[%s1 + $0x14c] sm:$0xf]
  %v109 = vld [vmem:[%s1 + $0x150] sm:$0xf]
  %v110 = vld [vmem:[%s1 + $0x154] sm:$0xf]
  %v111 = vld [vmem:[%s1 + $0x158] sm:$0xf]
  %v112 = vld [vmem:[%s1 + $0x15c] sm:$0xf]
  %v113 = vld [vmem:[%s1 + $0x160] sm:$0xf]
  %v114 = vld [vmem:[%s1 + $0x164] sm:$0xf]
  %v115 = vld [vmem:[%s1 + $0x168] sm:$0xf]
  %v116 = vld [vmem:[%s1 + $0x16c] sm:$0xf]
  %v117 = vld [vmem:[%s1 + $0x170] sm:$0xf]
  %v118 = vld [vmem:[%s1 + $0x174] sm:$0xf]
  %v119 = vld [vmem:[%s1 + $0x178] sm:$0xf]
  %v120 = vld [vmem:[%s1 + $0x17c] sm:$0xf]
  %v121 = vld [vmem:[%s1 + $0x180] sm:$0xf]
  %v122 = vld [vmem:[%s1 + $0x184] sm:$0xf]
  %v123 = vld [vmem:[%s1 + $0x188] sm:$0xf]
  %v124 = vld [vmem:[%s1 + $0x18c] sm:$0xf]
  %v125 = vld [vmem:[%s1 + $0x190] sm:$0xf]
  %v126 = vld [vmem:[%s1 + $0x194] sm:$0xf]
  %v127 = vld [vmem:[%s1 + $0x198] sm:$0xf]
  %v128 = vld [vmem:[%s1 + $0x19c] sm:$0xf]
  %v129 = vld [vmem:[%s1 + $0x1a0] sm:$0xf]
  %v130 = vld [vmem:[%s1 + $0x1a4] sm:$0xf]
  %v131 = vld [vmem:[%s1 + $0x1a8] sm:$0xf]
  %v132 = vld [vmem:[%s1 + $0x1ac] sm:$0xf]
  %v133 = vld [vmem:[%s1 + $0x1b0] sm:$0xf]
  %v134 = vld [vmem:[%s1 + $0x1b4] sm:$0xf]
  %v135 = vld [vmem:[%s1 + $0x1b8] sm:$0xf]
  %v136 = vld [vmem:[%s1 + $0x1bc] sm:$0xf]
  %v137 = vld [vmem:[%s1 + $0x1c0] sm:$0xf]
  %v138 = vld [vmem:[%s1 + $0x1c4] sm:$0xf]
  %v139 = vld [vmem:[%s1 + $0x1c8] sm:$0xf]
  %v140 = vld [vmem:[%s1 + $0x1cc] sm:$0xf]
  %v141 = vld [vmem:[%s1 + $0x1d0] sm:$0xf]
  %v142 = vld [vmem:[%s1 + $0x1d4] sm:$0xf]
  %v143 = vld [vmem:[%s1 + $0x1d8] sm:$0xf]
  %v144 = vld [vmem:[%s1 + $0x1dc] sm:$0xf]
  %v145 = vld [vmem:[%s1 + $0x1e0] sm:$0xf]
  %v146 = vld [vmem:[%s1 + $0x1e4] sm:$0xf]
  %v147 = vld [vmem:[%s1 + $0x1e8] sm:$0xf]
  %v148 = vld [vmem:[%s1 + $0x1ec] sm:$0xf]
  %v149 = vld [vmem:[%s1 + $0x1f0] sm:$0xf]
  %v150 = vld [vmem:[%s1 + $0x1f4] sm:$0xf]
  %v151 = vld [vmem:[%s1 + $0x1f8] sm:$0xf]
  %v152 = vld [vmem:[%s1 + $0x1fc] sm:$0xf]
  %v153 = vld [vmem:[%s1 + $0x200] sm:$0xf]
  %v154 = vld [vmem:[%s1 + $0x204] sm:$0xf]
  %v155 = vld [vmem:[%s1 + $0x208] sm:$0xf]
  %v156 = vld [vmem:[%s1 + $0x20c] sm:$0xf]
  %v157 = vld [vmem:[%s1 + $0x210] sm:$0xf]
  %v158 = vld [vmem:[%s1 + $0x214] sm:$0xf]
  %v159 = vld [vmem:[%s1 + $0x218] sm:$0xf]
  %v160 = vld [vmem:[%s1 + $0x21c] sm:$0xf]
  %v161 = vld [vmem:[%s1 + $0x220] sm:$0xf]
  %v162 = vld [vmem:[%s1 + $0x224] sm:$0xf]
  %v163 = vld [vmem:[%s1 + $0x228] sm:$0xf]
  %v164 = vld [vmem:[%s1 + $0x22c] sm:$0xf]
  %v165 = vld [vmem:[%s1 + $0x230] sm:$0xf]
  %v166 = vld [vmem:[%s1 + $0x234] sm:$0xf]
  %v167 = vld [vmem:[%s1 + $0x238] sm:$0xf]
  %v168 = vld [vmem:[%s1 + $0x23c] sm:$0xf]
  %v174 = vunpack.c.l.b16 %v20
  %v175 = vunpack.c.h.b16 %v20
  %v176 = vunpack.c.l.b16 %v21
  %v177 = vunpack.c.h.b16 %v21
  %v178 = vunpack.c.l.b16 %v22
  %v179 = vunpack.c.h.b16 %v22
  %v180 = vunpack.c.l.b16 %v23
  %v181 = vunpack.c.h.b16 %v23
  %v182 = vunpack.c.l.b16 %v24
  %v183 = vpack.c.b16 %v174, %v174
  %v184 = vpack.c.b16 %v175, %v175
  %v185 = vpack.c.b16 %v176, %v176
  %v186 = vpack.c.b16 %v177, %v177
  %v187 = vpack.c.b16 %v178, %v178
  %v188 = vpack.c.b16 %v179, %v179
  %v189 = vpack.c.b16 %v180, %v180
  %v190 = vpack.c.b16 %v181, %v181
  %v191 = vpack.c.b16 %v182, %v182
  %v345 = vunpack.c.l.b16 %v25
  %v346 = vunpack.c.l.b16 %v26
  %v347 = vunpack.c.l.b16 %v27
  %v348 = vunpack.c.l.b16 %v28
  %v349 = vunpack.c.l.b16 %v29
  %v350 = vunpack.c.l.b16 %v30
  %v351 = vunpack.c.l.b16 %v31
  %v352 = vunpack.c.l.b16 %v32
  %v353 = vunpack.c.l.b16 %v33
  %v354 = vunpack.c.l.b16 %v34
  %v355 = vunpack.c.l.b16 %v35
  %v356 = vunpack.c.l.b16 %v36
  %v357 = vunpack.c.l.b16 %v37
  %v358 = vunpack.c.l.b16 %v38
  %v359 = vunpack.c.l.b16 %v39
  %v360 = vunpack.c.l.b16 %v40
  %v361 = vunpack.c.l.b16 %v41
  %v362 = vunpack.c.l.b16 %v42
  %v363 = vunpack.c.l.b16 %v43
  %v364 = vunpack.c.l.b16 %v44
  %v365 = vunpack.c.l.b16 %v45
  %v366 = vunpack.c.l.b16 %v46
  %v367 = vunpack.c.l.b16 %v47
  %v368 = vunpack.c.l.b16 %v48
  %v369 = vunpack.c.l.b16 %v49
  %v370 = vunpack.c.l.b16 %v50
  %v371 = vunpack.c.l.b16 %v51
  %v372 = vunpack.c.l.b16 %v52
  %v373 = vunpack.c.l.b16 %v53
  %v374 = vunpack.c.l.b16 %v54
  %v375 = vunpack.c.l.b16 %v55
  %v376 = vunpack.c.l.b16 %v56
  %v377 = vunpack.c.l.b16 %v57
  %v378 = vunpack.c.l.b16 %v58
  %v379 = vunpack.c.l.b16 %v59
  %v380 = vunpack.c.l.b16 %v60
  %v381 = vunpack.c.l.b16 %v61
  %v382 = vunpack.c.l.b16 %v62
  %v383 = vunpack.c.l.b16 %v63
  %v384 = vunpack.c.l.b16 %v64
  %v385 = vunpack.c.l.b16 %v65
  %v386 = vunpack.c.l.b16 %v66
  %v387 = vunpack.c.l.b16 %v67
  %v388 = vunpack.c.l.b16 %v68
  %v389 = vunpack.c.l.b16 %v69
  %v390 = vunpack.c.l.b16 %v70
  %v391 = vunpack.c.l.b16 %v71
  %v392 = vunpack.c.l.b16 %v72
  %v393 = vunpack.c.l.b16 %v73
  %v394 = vunpack.c.l.b16 %v74
  %v395 = vunpack.c.l.b16 %v75
  %v396 = vunpack.c.l.b16 %v76
  %v397 = vunpack.c.l.b16 %v77
  %v398 = vunpack.c.l.b16 %v78
  %v399 = vunpack.c.l.b16 %v79
  %v400 = vunpack.c.l.b16 %v80
  %v401 = vunpack.c.l.b16 %v81
  %v402 = vunpack.c.l.b16 %v82
  %v403 = vunpack.c.l.b16 %v83
  %v404 = vunpack.c.l.b16 %v84
  %v405 = vunpack.c.l.b16 %v85
  %v406 = vunpack.c.l.b16 %v86
  %v407 = vunpack.c.l.b16 %v87
  %v408 = vunpack.c.l.b16 %v88
  %v409 = vunpack.c.l.b16 %v89
  %v410 = vunpack.c.l.b16 %v90
  %v411 = vunpack.c.l.b16 %v91
  %v412 = vunpack.c.l.b16 %v92
  %v413 = vunpack.c.l.b16 %v93
  %v414 = vunpack.c.l.b16 %v94
  %v415 = vunpack.c.l.b16 %v95
  %v416 = vunpack.c.l.b16 %v96
  %v417 = vunpack.c.l.b16 %v97
  %v418 = vunpack.c.l.b16 %v98
  %v419 = vunpack.c.l.b16 %v99
  %v420 = vunpack.c.l.b16 %v100
  %v421 = vunpack.c.l.b16 %v101
  %v422 = vunpack.c.l.b16 %v102
  %v423 = vunpack.c.l.b16 %v103
  %v424 = vunpack.c.l.b16 %v104
  %v425 = vunpack.c.l.b16 %v105
  %v426 = vunpack.c.l.b16 %v106
  %v427 = vunpack.c.l.b16 %v107
  %v428 = vunpack.c.l.b16 %v108
  %v429 = vunpack.c.l.b16 %v109
  %v430 = vunpack.c.l.b16 %v110
  %v431 = vunpack.c.l.b16 %v111
  %v432 = vunpack.c.l.b16 %v112
  %v433 = vunpack.c.l.b16 %v113
  %v434 = vunpack.c.l.b16 %v114
  %v435 = vunpack.c.l.b16 %v115
  %v436 = vunpack.c.l.b16 %v116
  %v437 = vunpack.c.l.b16 %v117
  %v438 = vunpack.c.l.b16 %v118
  %v439 = vunpack.c.l.b16 %v119
  %v440 = vunpack.c.l.b16 %v120
  %v441 = vunpack.c.l.b16 %v121
  %v442 = vunpack.c.l.b16 %v122
  %v443 = vunpack.c.l.b16 %v123
  %v444 = vunpack.c.l.b16 %v124
  %v445 = vunpack.c.l.b16 %v125
  %v446 = vunpack.c.l.b16 %v126
  %v447 = vunpack.c.l.b16 %v127
  %v448 = vunpack.c.l.b16 %v128
  %v449 = vunpack.c.l.b16 %v129
  %v450 = vunpack.c.l.b16 %v130
  %v451 = vunpack.c.l.b16 %v131
  %v452 = vunpack.c.l.b16 %v132
  %v453 = vunpack.c.l.b16 %v133
  %v454 = vunpack.c.l.b16 %v134
  %v455 = vunpack.c.l.b16 %v135
  %v456 = vunpack.c.l.b16 %v136
  %v457 = vunpack.c.l.b16 %v137
  %v458 = vunpack.c.l.b16 %v138
  %v459 = vunpack.c.l.b16 %v139
  %v460 = vunpack.c.l.b16 %v140
  %v461 = vunpack.c.l.b16 %v141
  %v462 = vunpack.c.l.b16 %v142
  %v463 = vunpack.c.l.b16 %v143
  %v464 = vunpack.c.l.b16 %v144
  %v465 = vunpack.c.l.b16 %v145
  %v466 = vunpack.c.l.b16 %v146
  %v467 = vunpack.c.l.b16 %v147
  %v468 = vunpack.c.l.b16 %v148
  %v469 = vunpack.c.l.b16 %v149
  %v470 = vunpack.c.l.b16 %v150
  %v471 = vunpack.c.l.b16 %v151
  %v472 = vunpack.c.l.b16 %v152
  %v473 = vunpack.c.l.b16 %v153
  %v474 = vunpack.c.l.b16 %v154
  %v475 = vunpack.c.l.b16 %v155
  %v476 = vunpack.c.l.b16 %v156
  %v477 = vunpack.c.l.b16 %v157
  %v478 = vunpack.c.l.b16 %v158
  %v479 = vunpack.c.l.b16 %v159
  %v480 = vunpack.c.l.b16 %v160
  %v481 = vunpack.c.l.b16 %v161
  %v482 = vunpack.c.l.b16 %v162
  %v483 = vunpack.c.l.b16 %v163
  %v484 = vunpack.c.l.b16 %v164
  %v485 = vunpack.c.l.b16 %v165
  %v486 = vunpack.c.l.b16 %v166
  %v487 = vunpack.c.l.b16 %v167
  %v488 = vunpack.c.l.b16 %v168
  %v489 = vpack.c.b16 %v346, %v345
  %v490 = vpack.c.b16 %v348, %v347
  %v491 = vpack.c.b16 %v350, %v349
  %v492 = vpack.c.b16 %v352, %v351
  %v493 = vpack.c.b16 %v354, %v353
  %v494 = vpack.c.b16 %v356, %v355
  %v495 = vpack.c.b16 %v358, %v357
  %v496 = vpack.c.b16 %v360, %v359
  %v497 = vpack.c.b16 %v362, %v361
  %v498 = vpack.c.b16 %v364, %v363
  %v499 = vpack.c.b16 %v366, %v365
  %v500 = vpack.c.b16 %v368, %v367
  %v501 = vpack.c.b16 %v370, %v369
  %v502 = vpack.c.b16 %v372, %v371
  %v503 = vpack.c.b16 %v374, %v373
  %v504 = vpack.c.b16 %v376, %v375
  %v505 = vpack.c.b16 %v378, %v377
  %v506 = vpack.c.b16 %v380, %v379
  %v507 = vpack.c.b16 %v382, %v381
  %v508 = vpack.c.b16 %v384, %v383
  %v509 = vpack.c.b16 %v386, %v385
  %v510 = vpack.c.b16 %v388, %v387
  %v511 = vpack.c.b16 %v390, %v389
  %v512 = vpack.c.b16 %v392, %v391
  %v513 = vpack.c.b16 %v394, %v393
  %v514 = vpack.c.b16 %v396, %v395
  %v515 = vpack.c.b16 %v398, %v397
  %v516 = vpack.c.b16 %v400, %v399
  %v517 = vpack.c.b16 %v402, %v401
  %v518 = vpack.c.b16 %v404, %v403
  %v519 = vpack.c.b16 %v406, %v405
  %v520 = vpack.c.b16 %v408, %v407
  %v521 = vpack.c.b16 %v410, %v409
  %v522 = vpack.c.b16 %v412, %v411
  %v523 = vpack.c.b16 %v414, %v413
  %v524 = vpack.c.b16 %v416, %v415
  %v525 = vpack.c.b16 %v418, %v417
  %v526 = vpack.c.b16 %v420, %v419
  %v527 = vpack.c.b16 %v422, %v421
  %v528 = vpack.c.b16 %v424, %v423
  %v529 = vpack.c.b16 %v426, %v425
  %v530 = vpack.c.b16 %v428, %v427
  %v531 = vpack.c.b16 %v430, %v429
  %v532 = vpack.c.b16 %v432, %v431
  %v533 = vpack.c.b16 %v434, %v433
  %v534 = vpack.c.b16 %v436, %v435
  %v535 = vpack.c.b16 %v438, %v437
  %v536 = vpack.c.b16 %v440, %v439
  %v537 = vpack.c.b16 %v442, %v441
  %v538 = vpack.c.b16 %v444, %v443
  %v539 = vpack.c.b16 %v446, %v445
  %v540 = vpack.c.b16 %v448, %v447
  %v541 = vpack.c.b16 %v450, %v449
  %v542 = vpack.c.b16 %v452, %v451
  %v543 = vpack.c.b16 %v454, %v453
  %v544 = vpack.c.b16 %v456, %v455
  %v545 = vpack.c.b16 %v458, %v457
  %v546 = vpack.c.b16 %v460, %v459
  %v547 = vpack.c.b16 %v462, %v461
  %v548 = vpack.c.b16 %v464, %v463
  %v549 = vpack.c.b16 %v466, %v465
  %v550 = vpack.c.b16 %v468, %v467
  %v551 = vpack.c.b16 %v470, %v469
  %v552 = vpack.c.b16 %v472, %v471
  %v553 = vpack.c.b16 %v474, %v473
  %v554 = vpack.c.b16 %v476, %v475
  %v555 = vpack.c.b16 %v478, %v477
  %v556 = vpack.c.b16 %v480, %v479
  %v557 = vpack.c.b16 %v482, %v481
  %v558 = vpack.c.b16 %v484, %v483
  %v559 = vpack.c.b16 %v486, %v485
  %v560 = vpack.c.b16 %v488, %v487
  %633 = vmatpush.bf16.msra.mxu0 %v496
  %634 = vmatpush.bf16.msra.mxu0 %v495
  %635 = vmatpush.bf16.msra.mxu0 %v494
  %636 = vmatpush.bf16.msra.mxu0 %v493
  %637 = vmatpush.bf16.msra.mxu0 %v492
  %638 = vmatpush.bf16.msra.mxu0 %v491
  %639 = vmatpush.bf16.msra.mxu0 %v490
  %640 = vmatpush.bf16.msra.mxu0 %v489
  %641 = vmatmul.bf16.gmra.mxu0 %v183
  %v642 = vpop.f32.mrf.mxu0
  %v643 = vadd.f32 0.0, %v642
  %v644 = vpop.f32.mrf.mxu0
  %645 = vdwg.mxu0
  %646 = vmatpush.bf16.msra.mxu0 %v504
  %647 = vmatpush.bf16.msra.mxu0 %v503
  %648 = vmatpush.bf16.msra.mxu0 %v502
  %649 = vmatpush.bf16.msra.mxu0 %v501
  %650 = vmatpush.bf16.msra.mxu0 %v500
  %651 = vmatpush.bf16.msra.mxu0 %v499
  %652 = vmatpush.bf16.msra.mxu0 %v498
  %653 = vmatpush.bf16.msra.mxu0 %v497
  %654 = vmatmul.bf16.gmra.mxu0 %v184
  %v655 = vpop.f32.mrf.mxu0
  %v656 = vadd.f32 %v643, %v655
  %v657 = vpop.f32.mrf.mxu0
  %658 = vdwg.mxu0
  %659 = vmatpush.bf16.msra.mxu0 %v512
  %660 = vmatpush.bf16.msra.mxu0 %v511
  %661 = vmatpush.bf16.msra.mxu0 %v510
  %662 = vmatpush.bf16.msra.mxu0 %v509
  %663 = vmatpush.bf16.msra.mxu0 %v508
  %664 = vmatpush.bf16.msra.mxu0 %v507
  %665 = vmatpush.bf16.msra.mxu0 %v506
  %666 = vmatpush.bf16.msra.mxu0 %v505
  %667 = vmatmul.bf16.gmra.mxu0 %v185
  %v668 = vpop.f32.mrf.mxu0
  %v669 = vadd.f32 %v656, %v668
  %v670 = vpop.f32.mrf.mxu0
  %671 = vdwg.mxu0
  %672 = vmatpush.bf16.msra.mxu0 %v520
  %673 = vmatpush.bf16.msra.mxu0 %v519
  %674 = vmatpush.bf16.msra.mxu0 %v518
  %675 = vmatpush.bf16.msra.mxu0 %v517
  %676 = vmatpush.bf16.msra.mxu0 %v516
  %677 = vmatpush.bf16.msra.mxu0 %v515
  %678 = vmatpush.bf16.msra.mxu0 %v514
  %679 = vmatpush.bf16.msra.mxu0 %v513
  %680 = vmatmul.bf16.gmra.mxu0 %v186
  %v681 = vpop.f32.mrf.mxu0
  %v682 = vadd.f32 %v669, %v681
  %v683 = vpop.f32.mrf.mxu0
  %684 = vdwg.mxu0
  %685 = vmatpush.bf16.msra.mxu0 %v528
  %686 = vmatpush.bf16.msra.mxu0 %v527
  %687 = vmatpush.bf16.msra.mxu0 %v526
  %688 = vmatpush.bf16.msra.mxu0 %v525
  %689 = vmatpush.bf16.msra.mxu0 %v524
  %690 = vmatpush.bf16.msra.mxu0 %v523
  %691 = vmatpush.bf16.msra.mxu0 %v522
  %692 = vmatpush.bf16.msra.mxu0 %v521
  %693 = vmatmul.bf16.gmra.mxu0 %v187
  %v694 = vpop.f32.mrf.mxu0
  %v695 = vadd.f32 %v682, %v694
  %v696 = vpop.f32.mrf.mxu0
  %697 = vdwg.mxu0
  %698 = vmatpush.bf16.msra.mxu0 %v536
  %699 = vmatpush.bf16.msra.mxu0 %v535
  %700 = vmatpush.bf16.msra.mxu0 %v534
  %701 = vmatpush.bf16.msra.mxu0 %v533
  %702 = vmatpush.bf16.msra.mxu0 %v532
  %703 = vmatpush.bf16.msra.mxu0 %v531
  %704 = vmatpush.bf16.msra.mxu0 %v530
  %705 = vmatpush.bf16.msra.mxu0 %v529
  %706 = vmatmul.bf16.gmra.mxu0 %v188
  %v707 = vpop.f32.mrf.mxu0
  %v708 = vadd.f32 %v695, %v707
  %v709 = vpop.f32.mrf.mxu0
  %710 = vdwg.mxu0
  %711 = vmatpush.bf16.msra.mxu0 %v544
  %712 = vmatpush.bf16.msra.mxu0 %v543
  %713 = vmatpush.bf16.msra.mxu0 %v542
  %714 = vmatpush.bf16.msra.mxu0 %v541
  %715 = vmatpush.bf16.msra.mxu0 %v540
  %716 = vmatpush.bf16.msra.mxu0 %v539
  %717 = vmatpush.bf16.msra.mxu0 %v538
  %718 = vmatpush.bf16.msra.mxu0 %v537
  %719 = vmatmul.bf16.gmra.mxu0 %v189
  %v720 = vpop.f32.mrf.mxu0
  %v721 = vadd.f32 %v708, %v720
  %v722 = vpop.f32.mrf.mxu0
  %723 = vdwg.mxu0
  %724 = vmatpush.bf16.msra.mxu0 %v552
  %725 = vmatpush.bf16.msra.mxu0 %v551
  %726 = vmatpush.bf16.msra.mxu0 %v550
  %727 = vmatpush.bf16.msra.mxu0 %v549
  %728 = vmatpush.bf16.msra.mxu0 %v548
  %729 = vmatpush.bf16.msra.mxu0 %v547
  %730 = vmatpush.bf16.msra.mxu0 %v546
  %731 = vmatpush.bf16.msra.mxu0 %v545
  %732 = vmatmul.bf16.gmra.mxu0 %v190
  %v733 = vpop.f32.mrf.mxu0
  %v734 = vadd.f32 %v721, %v733
  %v735 = vpop.f32.mrf.mxu0
  %736 = vdwg.mxu0
  %737 = vmatpush.bf16.msra.mxu0 %v560
  %738 = vmatpush.bf16.msra.mxu0 %v559
  %739 = vmatpush.bf16.msra.mxu0 %v558
  %740 = vmatpush.bf16.msra.mxu0 %v557
  %741 = vmatpush.bf16.msra.mxu0 %v556
  %742 = vmatpush.bf16.msra.mxu0 %v555
  %743 = vmatpush.bf16.msra.mxu0 %v554
  %744 = vmatpush.bf16.msra.mxu0 %v553
  %745 = vmatmul.bf16.gmra.mxu0 %v191
  %v746 = vpop.f32.mrf.mxu0
  %v747 = vadd.f32 %v734, %v746
  %v748 = vpop.f32.mrf.mxu0
  %749 = vdwg.mxu0
  %v750 = vadd.f32 %v19, %v747
  %751 = vst [vmem:[#allocation2] sm:$0xff] %v750
  // Predicated region
  $region18: #{resnet_forward.18} parent=0 // pred_check
    %p752 = pneg %p14
  $region19: #{resnet_forward.18} parent=0 // pred_check_branch
    %754 = sbr.rel (%p752) target = $region21
  $region20: #{resnet_forward.18} parent=0 // pred_region
    %v755 = vld [vmem:[#allocation2] sm:$0xff]
    %v756 = vld [vmem:[%s2] sm:$0x1]
    %v758 = vperm.slane %v756, 0
    %v760 = vadd.f32 %v755, %v758
    %v761 = vmax.f32 %v760, 0.0
    %v762 = vpack.c.bf16 %v761, %v761
    %763 = vst [vmem:[%s3] sm:$0xf] %v762
  $region21: #{resnet_forward.18} parent=0 // pred_fallthru
    _
  // Predicated region
  $region22: #{resnet_forward.18} parent=0 // pred_check
    _
  $region23: #{resnet_forward.18} parent=0 // pred_check_branch
    %765 = sbr.rel (0) target = $region25
  $region24: #{resnet_forward.18} parent=0 // pred_region
    _
  $region25: #{resnet_forward.18} parent=0 // pred_fallthru
    _
  // Predicated region
  $region26: #{resnet_forward.18} parent=0 // pred_check
    _
  $region27: #{resnet_forward.18} parent=0 // pred_check_branch
    %767 = sbr.rel (0) target = $region29
  $region28: #{resnet_forward.18} parent=0 // pred_region
    _
  $region29: #{resnet_forward.18} parent=0 // pred_fallthru
    _

// kernel: resnet_forward.19
$region0: #{resnet_forward.19}
  #allocation0 [shape = 'u32[]', space=smem, size = 0x4, offset = 0x4, fixed_abs, tag = 'smem constant byte address 0x4 - core index']
  #allocation1 [shape = 'u32[72,128]{1,0:T(1,128)}', space=vmem, size = 0x9000, scoped, tag = 'internal scratch']
  #allocation2 [shape = 'f32[8,256]{1,0:T(8,128)}', space=vmem, size = 0x2000, scoped, tag = 'scratch operand']
  %s0 = inlined_call_operand.vmem [shape: bf16[8,256], index: 0, kind: input, shape index: {}]
  %s1 = inlined_call_operand.vmem [shape: bf16[256,512], index: 1, kind: input, shape index: {}]
  %s2 = inlined_call_operand.vmem [shape: f32[1,512], index: 2, kind: input, shape index: {}]
  %s3 = inlined_call_operand.vmem [shape: bf16[8,512], index: 3, kind: output, shape index: {}]
  %s4 = sld [smem:[#allocation0]]
  $region91: #{resnet_forward.19} parent=0
    _
  %s6 = ssub.s32 1, %s4
  %s7 = scalar_select 0, %s6, %s4
  $region1: #{resnet_forward.19} parent=0
    #allocation3 [shape = 'u8[262144]{0}', space=vmem, size = 0x40000, scoped, tag = 'input window, operand 1']
    loop: start=0, step=1, limit=4
    $region2: #{resnet_forward.19} parent=1 // loop_pre_header
      _
    $region3: #{resnet_forward.19} parent=1 // loop_header
      %s9 = sphi 0, %s13
      %p10 = scmp.ge.s32.totalorder %s9, 4
      %s16 = sphi 0, %s35
      %s17 = sphi 0, %s31
      %s18 = sphi 0, %s27
      %s19 = sphi 0, %s16
      %s20 = sphi 0, %s17
      %s21 = sphi 0, %s18
      %s22 = sphi 0, %s19
      %s23 = sphi 0, %s20
      %s24 = sphi 0, %s21
      %s40 = sphi 0, %s42
      %s43 = sphi 0, %s40
      %s44 = sphi 0, %s43
      %s60 = sphi 0, %s44
      %s68 = sphi 0, %s70
      %s71 = sphi 0, %s68
      %s72 = sphi 0, %s71
      %s88 = sphi 0, %s72
      %s94 = sphi 0, %s96
      %s97 = sphi 0, %s94
      %s98 = sphi 0, %s97
      %s114 = sphi 0, %s98
      %s122 = sphi 0, %s124
      %s125 = sphi 0, %s122
      %s126 = sphi 0, %s125
      %s142 = sphi 0, %s126
    $region4: #{resnet_forward.19} parent=1 // loop_header_branch
      %12 = sbr.rel (%p10) target = $region8
    $region5: #{resnet_forward.19} parent=1 // loop_body
      %s14 = ssub.s32 %s9, 1
      %s15 = ssub.s32 %s9, 2
      %s25 = sadd.s32 1, %s18
      %p26 = scmp.ge.s32.totalorder %s25, 1
      %s27 = scalar_select %p26, 0, %s25
      %s28 = sadd.s32 1, %s17
      %s29 = scalar_select %p26, %s28, %s17
      %p30 = scmp.ge.s32.totalorder %s29, 2
      %s31 = scalar_select %p30, 0, %s29
      %s32 = sadd.s32 1, %s16
      %s33 = scalar_select %p30, %s32, %s16
      %p34 = scmp.ge.s32.totalorder %s33, 1
      %s35 = scalar_select %p34, 0, %s33
      %s36 = ssub.s32 %s16, %s35
      %s37 = ssub.s32 %s18, %s27
      %s38 = sor.u32 %s36, %s37
      %p39 = scmp.eq.s32.totalorder %s38, 0
      %s41 = sadd.s32 %s40, 1
      %s42 = scalar_select %p39, %s40, %s41
      %p45 = pneg %p39
      %p46 = scmp.eq.s32.totalorder %s9, 1
      %p47 = por %p45, %p46
      %p48 = scmp.ne.s32.totalorder %s40, %s43
      %p49 = scmp.eq.s32.totalorder %s9, 0
      %p50 = por %p48, %p49
      %p51 = scmp.ne.s32.totalorder %s40, %s43
      %p52 = scmp.eq.s32.totalorder %s14, 1
      %p53 = por %p51, %p52
      %p54 = scmp.ne.s32.totalorder %s43, %s44
      %p55 = scmp.eq.s32.totalorder %s14, 0
      %p56 = por %p54, %p55
      %p57 = scmp.ne.s32.totalorder %s43, %s44
      %p58 = scmp.eq.s32.totalorder %s15, 1
      %p59 = por %p57, %p58
      %p61 = scmp.ne.s32.totalorder %s44, %s60
      %p62 = scmp.eq.s32.totalorder %s15, 0
      %p63 = por %p61, %p62
      %s64 = ssub.s32 %s18, %s27
      %s65 = ssub.s32 %s17, %s31
      %s66 = sor.u32 %s64, %s65
      %p67 = scmp.eq.s32.totalorder %s66, 0
      %s69 = sadd.s32 %s68, 1
      %s70 = scalar_select %p67, %s68, %s69
      %p73 = pneg %p67
      %p74 = scmp.eq.s32.totalorder %s9, 1
      %p75 = por %p73, %p74
      %p76 = scmp.ne.s32.totalorder %s68, %s71
      %p77 = scmp.eq.s32.totalorder %s9, 0
      %p78 = por %p76, %p77
      %p79 = scmp.ne.s32.totalorder %s68, %s71
      %p80 = scmp.eq.s32.totalorder %s14, 1
      %p81 = por %p79, %p80
      %p82 = scmp.ne.s32.totalorder %s71, %s72
      %p83 = scmp.eq.s32.totalorder %s14, 0
      %p84 = por %p82, %p83
      %p85 = scmp.ne.s32.totalorder %s71, %s72
      %p86 = scmp.eq.s32.totalorder %s15, 1
      %p87 = por %p85, %p86
      %p89 = scmp.ne.s32.totalorder %s72, %s88
      %p90 = scmp.eq.s32.totalorder %s15, 0
      %p91 = por %p89, %p90
      %s92 = ssub.s32 %s17, %s31
      %p93 = scmp.eq.s32.totalorder %s92, 0
      %s95 = sadd.s32 %s94, 1
      %s96 = scalar_select %p93, %s94, %s95
      %p99 = pneg %p93
      %p100 = scmp.eq.s32.totalorder %s9, 1
      %p101 = por %p99, %p100
      %p102 = scmp.ne.s32.totalorder %s94, %s97
      %p103 = scmp.eq.s32.totalorder %s9, 0
      %p104 = por %p102, %p103
      %p105 = scmp.ne.s32.totalorder %s94, %s97
      %p106 = scmp.eq.s32.totalorder %s14, 1
      %p107 = por %p105, %p106
      %p108 = scmp.ne.s32.totalorder %s97, %s98
      %p109 = scmp.eq.s32.totalorder %s14, 0
      %p110 = por %p108, %p109
      %p111 = scmp.ne.s32.totalorder %s97, %s98
      %p112 = scmp.eq.s32.totalorder %s15, 1
      %p113 = por %p111, %p112
      %p115 = scmp.ne.s32.totalorder %s98, %s114
      %p116 = scmp.eq.s32.totalorder %s15, 0
      %p117 = por %p115, %p116
      %s118 = ssub.s32 %s16, %s35
      %s119 = ssub.s32 %s17, %s31
      %s120 = sor.u32 %s118, %s119
      %p121 = scmp.eq.s32.totalorder %s120, 0
      %s123 = sadd.s32 %s122, 1
      %s124 = scalar_select %p121, %s122, %s123
      %p127 = pneg %p121
      %p128 = scmp.eq.s32.totalorder %s9, 1
      %p129 = por %p127, %p128
      %p130 = scmp.ne.s32.totalorder %s122, %s125
      %p131 = scmp.eq.s32.totalorder %s9, 0
      %p132 = por %p130, %p131
      %p133 = scmp.ne.s32.totalorder %s122, %s125
      %p134 = scmp.eq.s32.totalorder %s14, 1
      %p135 = por %p133, %p134
      %p136 = scmp.ne.s32.totalorder %s125, %s126
      %p137 = scmp.eq.s32.totalorder %s14, 0
      %p138 = por %p136, %p137
      %p139 = scmp.ne.s32.totalorder %s125, %s126
      %p140 = scmp.eq.s32.totalorder %s15, 1
      %p141 = por %p139, %p140
      %p143 = scmp.ne.s32.totalorder %s126, %s142
      %p144 = scmp.eq.s32.totalorder %s15, 0
      %p145 = por %p143, %p144
      %p146 = scmp.le.s32.totalorder 1, %s9
      %p147 = scmp.lt.s32.totalorder %s9, 3
      %p148 = pnand %p146, %p147
      %p149 = pneg %p148
      // Predicated region
      $region9: #{resnet_forward.19} parent=5 // pred_check
        _
      $region10: #{resnet_forward.19} parent=5 // pred_check_branch
        %151 = sbr.rel (%p148) target = $region12
      $region11: #{resnet_forward.19} parent=5 // pred_region
        %s152 = ssub.s32 %s9, 1
        // Predicated region
        $region13: #{resnet_forward.19} parent=11 // pred_check
          %p153 = pneg %p56
        $region14: #{resnet_forward.19} parent=11 // pred_check_branch
          %155 = sbr.rel (%p153) target = $region16
        $region15: #{resnet_forward.19} parent=11 // pred_region
          %s156 = smul.u32 2, %s21
          %p157 = scmp.lt.s32.totalorder %s19, 0
          %s158 = scalar_select %p157, %s19, 0
          %p159 = scmp.lt.s32.totalorder %s156, 1
          %s160 = scalar_select %p159, %s156, 1
          %s161 = smul.addr %s158, 2
          %s162 = sadd.s32 %s160, %s161
          %s163 = smul.addr %s162, 4
          %s164 = scalar_lea.vmem %s0, %s163
          %s165 = smul.u32 2, %s21
        $region16: #{resnet_forward.19} parent=11 // pred_fallthru
          _
      $region12: #{resnet_forward.19} parent=5 // pred_fallthru
        _
      %p166 = scmp.lt.s32.totalorder %s9, 2
      // Predicated region
      $region17: #{resnet_forward.19} parent=5 // pred_check
        %p167 = pneg %p166
      $region18: #{resnet_forward.19} parent=5 // pred_check_branch
        %169 = sbr.rel (%p167) target = $region20
      $region19: #{resnet_forward.19} parent=5 // pred_region
        // Predicated region
        $region21: #{resnet_forward.19} parent=19 // pred_check
          %p170 = pneg %p78
        $region22: #{resnet_forward.19} parent=19 // pred_check_branch
          %172 = sbr.rel (%p170) target = $region24
        $region23: #{resnet_forward.19} parent=19 // pred_region
          %s173 = sand.u32 %s68, 1
          %s174 = sand.u32 %s68, 1
          %s175 = smul.addr %s174, 256
          %s176 = scalar_lea.vmem [#allocation3], %s175
          %s177 = smul.u32 32, %s18
          %s178 = smul.u32 2, %s17
          %s179 = smul.addr %s177, 4
          %s180 = sadd.s32 %s178, %s179
          %s181 = smul.addr %s180, 4
          %s182 = scalar_lea.vmem %s1, %s181
          // Predicated region
          $region25: #{resnet_forward.19} parent=23 // pred_check
            _
          $region26: #{resnet_forward.19} parent=23 // pred_check_branch
            %184 = sbr.rel (0) target = $region28
          $region27: #{resnet_forward.19} parent=23 // pred_region
            // Predicated region
            $region29: #{resnet_forward.19} parent=27 // pred_check
              _
            $region30: #{resnet_forward.19} parent=27 // pred_check_branch
              %186 = sbr.rel (0) target = $region32
            $region31: #{resnet_forward.19} parent=27 // pred_region
              // Predicated region
              $region44: #{resnet_forward.19} parent=31 // pred_check
                _
              $region45: #{resnet_forward.19} parent=31 // pred_check_branch
                %264 = sbr.rel (0) target = $region47
              $region46: #{resnet_forward.19} parent=31 // pred_region
                loop: start=0, step=1, limit=1
                $region48: #{resnet_forward.19} parent=46 // loop_pre_header
                  _
                $region49: #{resnet_forward.19} parent=46 // loop_header
                  %s266 = sphi 0, %s270
                  %p267 = scmp.ge.s32.totalorder %s266, 1
                  %s271 = sphi %s182, %s182
                  %s272 = sphi %s176, %s176
                $region50: #{resnet_forward.19} parent=46 // loop_header_branch
                  %269 = sbr.rel (%p267) target = $region54
                $region51: #{resnet_forward.19} parent=46 // loop_body
                  %v273 = vld [vmem:[%s271] sm:$0xff]
                  %274 = vst [vmem:[%s272] sm:$0xff] %v273
                  %v275 = vld [vmem:[%s271 + $0x10] sm:$0xff]
                  %276 = vst [vmem:[%s272 + $0x8] sm:$0xff] %v275
                  %v277 = vld [vmem:[%s271 + $0x20] sm:$0xff]
                  %278 = vst [vmem:[%s272 + $0x10] sm:$0xff] %v277
                  %v279 = vld [vmem:[%s271 + $0x30] sm:$0xff]
                  %280 = vst [vmem:[%s272 + $0x18] sm:$0xff] %v279
                  %v281 = vld [vmem:[%s271 + $0x40] sm:$0xff]
                  %282 = vst [vmem:[%s272 + $0x20] sm:$0xff] %v281
                  %v283 = vld [vmem:[%s271 + $0x50] sm:$0xff]
                  %284 = vst [vmem:[%s272 + $0x28] sm:$0xff] %v283
                  %v285 = vld [vmem:[%s271 + $0x60] sm:$0xff]
                  %286 = vst [vmem:[%s272 + $0x30] sm:$0xff] %v285
                  %v287 = vld [vmem:[%s271 + $0x70] sm:$0xff]
                  %288 = vst [vmem:[%s272 + $0x38] sm:$0xff] %v287
                  %v289 = vld [vmem:[%s271 + $0x80] sm:$0xff]
                  %290 = vst [vmem:[%s272 + $0x40] sm:$0xff] %v289
                  %v291 = vld [vmem:[%s271 + $0x90] sm:$0xff]
                  %292 = vst [vmem:[%s272 + $0x48] sm:$0xff] %v291
                  %v293 = vld [vmem:[%s271 + $0xa0] sm:$0xff]
                  %294 = vst [vmem:[%s272 + $0x50] sm:$0xff] %v293
                  %v295 = vld [vmem:[%s271 + $0xb0] sm:$0xff]
                  %296 = vst [vmem:[%s272 + $0x58] sm:$0xff] %v295
                  %v297 = vld [vmem:[%s271 + $0xc0] sm:$0xff]
                  %298 = vst [vmem:[%s272 + $0x60] sm:$0xff] %v297
                  %v299 = vld [vmem:[%s271 + $0xd0] sm:$0xff]
                  %300 = vst [vmem:[%s272 + $0x68] sm:$0xff] %v299
                  %v301 = vld [vmem:[%s271 + $0xe0] sm:$0xff]
                  %302 = vst [vmem:[%s272 + $0x70] sm:$0xff] %v301
                  %v303 = vld [vmem:[%s271 + $0xf0] sm:$0xff]
                  %304 = vst [vmem:[%s272 + $0x78] sm:$0xff] %v303
                  %v305 = vld [vmem:[%s271 + $0x100] sm:$0xff]
                  %306 = vst [vmem:[%s272 + $0x80] sm:$0xff] %v305
                  %v307 = vld [vmem:[%s271 + $0x110] sm:$0xff]
                  %308 = vst [vmem:[%s272 + $0x88] sm:$0xff] %v307
                  %v309 = vld [vmem:[%s271 + $0x120] sm:$0xff]
                  %310 = vst [vmem:[%s272 + $0x90] sm:$0xff] %v309
                  %v311 = vld [vmem:[%s271 + $0x130] sm:$0xff]
                  %312 = vst [vmem:[%s272 + $0x98] sm:$0xff] %v311
                  %v313 = vld [vmem:[%s271 + $0x140] sm:$0xff]
                  %314 = vst [vmem:[%s272 + $0xa0] sm:$0xff] %v313
                  %v315 = vld [vmem:[%s271 + $0x150] sm:$0xff]
                  %316 = vst [vmem:[%s272 + $0xa8] sm:$0xff] %v315
                  %v317 = vld [vmem:[%s271 + $0x160] sm:$0xff]
                  %318 = vst [vmem:[%s272 + $0xb0] sm:$0xff] %v317
                  %v319 = vld [vmem:[%s271 + $0x170] sm:$0xff]
                  %320 = vst [vmem:[%s272 + $0xb8] sm:$0xff] %v319
                  %v321 = vld [vmem:[%s271 + $0x180] sm:$0xff]
                  %322 = vst [vmem:[%s272 + $0xc0] sm:$0xff] %v321
                  %v323 = vld [vmem:[%s271 + $0x190] sm:$0xff]
                  %324 = vst [vmem:[%s272 + $0xc8] sm:$0xff] %v323
                  %v325 = vld [vmem:[%s271 + $0x1a0] sm:$0xff]
                  %326 = vst [vmem:[%s272 + $0xd0] sm:$0xff] %v325
                  %v327 = vld [vmem:[%s271 + $0x1b0] sm:$0xff]
                  %328 = vst [vmem:[%s272 + $0xd8] sm:$0xff] %v327
                  %v329 = vld [vmem:[%s271 + $0x1c0] sm:$0xff]
                  %330 = vst [vmem:[%s272 + $0xe0] sm:$0xff] %v329
                  %v331 = vld [vmem:[%s271 + $0x1d0] sm:$0xff]
                  %332 = vst [vmem:[%s272 + $0xe8] sm:$0xff] %v331
                  %v333 = vld [vmem:[%s271 + $0x1e0] sm:$0xff]
                  %334 = vst [vmem:[%s272 + $0xf0] sm:$0xff] %v333
                  %v335 = vld [vmem:[%s271 + $0x1f0] sm:$0xff]
                  %336 = vst [vmem:[%s272 + $0xf8] sm:$0xff] %v335
                $region52: #{resnet_forward.19} parent=46 // loop_footer
                  %s270 = sadd.s32 1, %s266
                $region53: #{resnet_forward.19} parent=46 // loop_footer_branch
                  %265 = sbr.rel target = $region49
                $region54: #{resnet_forward.19} parent=46 // loop_exit
                  _
              $region47: #{resnet_forward.19} parent=31 // pred_fallthru
                _
              // Predicated region
              $region55: #{resnet_forward.19} parent=31 // pred_check
                _
              $region56: #{resnet_forward.19} parent=31 // pred_check_branch
                %338 = sbr.rel target = $region58
              $region57: #{resnet_forward.19} parent=31 // pred_region
                _
              $region58: #{resnet_forward.19} parent=31 // pred_fallthru
                _
            $region32: #{resnet_forward.19} parent=27 // pred_fallthru
              _
            // Predicated region
            $region33: #{resnet_forward.19} parent=27 // pred_check
              _
            $region34: #{resnet_forward.19} parent=27 // pred_check_branch
              %188 = sbr.rel target = $region36
            $region35: #{resnet_forward.19} parent=27 // pred_region
              %s190 = ssub.s32 256, 1
              loop: start=0, step=1, limit=1
              $region37: #{resnet_forward.19} parent=35 // loop_pre_header
                _
              $region38: #{resnet_forward.19} parent=35 // loop_header
                %s192 = sphi 0, %s196
                %p193 = scmp.ge.s32.totalorder %s192, 1
                %s197 = sphi %s182, %s182
                %s198 = sphi %s176, %s176
              $region39: #{resnet_forward.19} parent=35 // loop_header_branch
                %195 = sbr.rel (%p193) target = $region43
              $region40: #{resnet_forward.19} parent=35 // loop_body
                %v199 = vld [vmem:[%s197] sm:%s190]
                %200 = vst [vmem:[%s198] sm:%s190] %v199
                %v201 = vld [vmem:[%s197 + $0x10] sm:%s190]
                %202 = vst [vmem:[%s198 + $0x8] sm:%s190] %v201
                %v203 = vld [vmem:[%s197 + $0x20] sm:%s190]
                %204 = vst [vmem:[%s198 + $0x10] sm:%s190] %v203
                %v205 = vld [vmem:[%s197 + $0x30] sm:%s190]
                %206 = vst [vmem:[%s198 + $0x18] sm:%s190] %v205
                %v207 = vld [vmem:[%s197 + $0x40] sm:%s190]
                %208 = vst [vmem:[%s198 + $0x20] sm:%s190] %v207
                %v209 = vld [vmem:[%s197 + $0x50] sm:%s190]
                %210 = vst [vmem:[%s198 + $0x28] sm:%s190] %v209
                %v211 = vld [vmem:[%s197 + $0x60] sm:%s190]
                %212 = vst [vmem:[%s198 + $0x30] sm:%s190] %v211
                %v213 = vld [vmem:[%s197 + $0x70] sm:%s190]
                %214 = vst [vmem:[%s198 + $0x38] sm:%s190] %v213
                %v215 = vld [vmem:[%s197 + $0x80] sm:%s190]
                %216 = vst [vmem:[%s198 + $0x40] sm:%s190] %v215
                %v217 = vld [vmem:[%s197 + $0x90] sm:%s190]
                %218 = vst [vmem:[%s198 + $0x48] sm:%s190] %v217
                %v219 = vld [vmem:[%s197 + $0xa0] sm:%s190]
                %220 = vst [vmem:[%s198 + $0x50] sm:%s190] %v219
                %v221 = vld [vmem:[%s197 + $0xb0] sm:%s190]
                %222 = vst [vmem:[%s198 + $0x58] sm:%s190] %v221
                %v223 = vld [vmem:[%s197 + $0xc0] sm:%s190]
                %224 = vst [vmem:[%s198 + $0x60] sm:%s190] %v223
                %v225 = vld [vmem:[%s197 + $0xd0] sm:%s190]
                %226 = vst [vmem:[%s198 + $0x68] sm:%s190] %v225
                %v227 = vld [vmem:[%s197 + $0xe0] sm:%s190]
                %228 = vst [vmem:[%s198 + $0x70] sm:%s190] %v227
                %v229 = vld [vmem:[%s197 + $0xf0] sm:%s190]
                %230 = vst [vmem:[%s198 + $0x78] sm:%s190] %v229
                %v231 = vld [vmem:[%s197 + $0x100] sm:%s190]
                %232 = vst [vmem:[%s198 + $0x80] sm:%s190] %v231
                %v233 = vld [vmem:[%s197 + $0x110] sm:%s190]
                %234 = vst [vmem:[%s198 + $0x88] sm:%s190] %v233
                %v235 = vld [vmem:[%s197 + $0x120] sm:%s190]
                %236 = vst [vmem:[%s198 + $0x90] sm:%s190] %v235
                %v237 = vld [vmem:[%s197 + $0x130] sm:%s190]
                %238 = vst [vmem:[%s198 + $0x98] sm:%s190] %v237
                %v239 = vld [vmem:[%s197 + $0x140] sm:%s190]
                %240 = vst [vmem:[%s198 + $0xa0] sm:%s190] %v239
                %v241 = vld [vmem:[%s197 + $0x150] sm:%s190]
                %242 = vst [vmem:[%s198 + $0xa8] sm:%s190] %v241
                %v243 = vld [vmem:[%s197 + $0x160] sm:%s190]
                %244 = vst [vmem:[%s198 + $0xb0] sm:%s190] %v243
                %v245 = vld [vmem:[%s197 + $0x170] sm:%s190]
                %246 = vst [vmem:[%s198 + $0xb8] sm:%s190] %v245
                %v247 = vld [vmem:[%s197 + $0x180] sm:%s190]
                %248 = vst [vmem:[%s198 + $0xc0] sm:%s190] %v247
                %v249 = vld [vmem:[%s197 + $0x190] sm:%s190]
                %250 = vst [vmem:[%s198 + $0xc8] sm:%s190] %v249
                %v251 = vld [vmem:[%s197 + $0x1a0] sm:%s190]
                %252 = vst [vmem:[%s198 + $0xd0] sm:%s190] %v251
                %v253 = vld [vmem:[%s197 + $0x1b0] sm:%s190]
                %254 = vst [vmem:[%s198 + $0xd8] sm:%s190] %v253
                %v255 = vld [vmem:[%s197 + $0x1c0] sm:%s190]
                %256 = vst [vmem:[%s198 + $0xe0] sm:%s190] %v255
                %v257 = vld [vmem:[%s197 + $0x1d0] sm:%s190]
                %258 = vst [vmem:[%s198 + $0xe8] sm:%s190] %v257
                %v259 = vld [vmem:[%s197 + $0x1e0] sm:%s190]
                %260 = vst [vmem:[%s198 + $0xf0] sm:%s190] %v259
                %v261 = vld [vmem:[%s197 + $0x1f0] sm:%s190]
                %262 = vst [vmem:[%s198 + $0xf8] sm:%s190] %v261
              $region41: #{resnet_forward.19} parent=35 // loop_footer
                %s196 = sadd.s32 1, %s192
              $region42: #{resnet_forward.19} parent=35 // loop_footer_branch
                %191 = sbr.rel target = $region38
              $region43: #{resnet_forward.19} parent=35 // loop_exit
                _
            $region36: #{resnet_forward.19} parent=27 // pred_fallthru
              _
          $region28: #{resnet_forward.19} parent=23 // pred_fallthru
            _
          %339 = vnop
        $region24: #{resnet_forward.19} parent=19 // pred_fallthru
          _
        // Predicated region
        $region59: #{resnet_forward.19} parent=19 // pred_check
          %p340 = pneg %p104
        $region60: #{resnet_forward.19} parent=19 // pred_check_branch
          %342 = sbr.rel (%p340) target = $region62
        $region61: #{resnet_forward.19} parent=19 // pred_region
          %s343 = smul.u32 2, %s17
          %p344 = scmp.lt.s32.totalorder %s343, 3
          %s345 = scalar_select %p344, %s343, 3
          %s346 = scalar_lea.vmem %s2, %s345
          %s347 = smul.u32 2, %s17
        $region62: #{resnet_forward.19} parent=19 // pred_fallthru
          _
      $region20: #{resnet_forward.19} parent=5 // pred_fallthru
        _
      %p348 = scmp.le.s32.totalorder 1, %s9
      %p349 = scmp.lt.s32.totalorder %s9, 3
      %p350 = pnand %p348, %p349
      %p351 = pneg %p350
      // Predicated region
      $region63: #{resnet_forward.19} parent=5 // pred_check
        _
      $region64: #{resnet_forward.19} parent=5 // pred_check_branch
        %353 = sbr.rel (%p350) target = $region66
      $region65: #{resnet_forward.19} parent=5 // pred_region
        %s354 = ssub.s32 %s9, 1
        %s355 = sand.u32 %s71, 1
        %s356 = sand.u32 %s71, 1
        %s357 = smul.addr %s356, 256
        %s358 = scalar_lea.vmem [#allocation3], %s357
        // Predicated region
        $region67: #{resnet_forward.19} parent=65 // pred_check
          %p359 = pneg %p84
        $region68: #{resnet_forward.19} parent=65 // pred_check_branch
          %361 = sbr.rel (%p359) target = $region70
        $region69: #{resnet_forward.19} parent=65 // pred_region
          _
        $region70: #{resnet_forward.19} parent=65 // pred_fallthru
          _
        %s362 = smul.u32 2, %s21
        %p363 = scmp.lt.s32.totalorder %s19, 0
        %s364 = scalar_select %p363, %s19, 0
        %p365 = scmp.lt.s32.totalorder %s362, 1
        %s366 = scalar_select %p365, %s362, 1
        %s367 = smul.addr %s364, 2
        %s368 = sadd.s32 %s366, %s367
        %s369 = smul.addr %s368, 4
        %s370 = scalar_lea.vmem %s0, %s369
        %p371 = pneg %p56
        %p372 = pneg %p53
        %s373 = sand.u32 %s71, 1
        %s374 = sand.u32 %s71, 1
        %s375 = smul.addr %s374, 256
        %s376 = scalar_lea.vmem [#allocation3], %s375
        %p377 = pneg %p84
        %p378 = pneg %p81
        %s379 = smul.u32 2, %s20
        %p380 = scmp.lt.s32.totalorder %s379, 3
        %s381 = scalar_select %p380, %s379, 3
        %s382 = scalar_lea.vmem %s2, %s381
        %p383 = pneg %p110
        %p384 = pneg %p107
        %p385 = pneg %p138
        %p386 = pneg %p135
        %s387 = smul.u32 2, %s20
        %p388 = scmp.lt.s32.totalorder %s19, 0
        %s389 = scalar_select %p388, %s19, 0
        %p390 = scmp.lt.s32.totalorder %s387, 3
        %s391 = scalar_select %p390, %s387, 3
        %s392 = smul.addr %s389, 4
        %s393 = sadd.s32 %s391, %s392
        %s394 = smul.addr %s393, 4
        %s395 = scalar_lea.vmem %s3, %s394
        %s396 = smul.u32 2, %s21
        %p397 = scmp.lt.s32.totalorder %s19, 0
        %s398 = scalar_select %p397, %s19, 0
        %p399 = scmp.lt.s32.totalorder %s396, 1
        %s400 = scalar_select %p399, %s396, 1
        %s401 = smul.addr %s398, 2
        %s402 = sadd.s32 %s400, %s401
        %s403 = smul.addr %s402, 4
        %s404 = scalar_lea.vmem %s0, %s403
        %s405 = smul.u32 2, %s21
        %s406 = smul.u32 32, %s21
        %s407 = smul.u32 2, %s20
        %s408 = smul.u32 2, %s20
        %p409 = scmp.lt.s32.totalorder %s408, 3
        %s410 = scalar_select %p409, %s408, 3
        %s411 = scalar_lea.vmem %s2, %s410
        %s412 = smul.u32 2, %s20
        %s413 = smul.u32 2, %s20
        %p414 = scmp.lt.s32.totalorder %s19, 0
        %s415 = scalar_select %p414, %s19, 0
        %p416 = scmp.lt.s32.totalorder %s413, 3
        %s417 = scalar_select %p416, %s413, 3
        %s418 = smul.addr %s415, 4
        %s419 = sadd.s32 %s417, %s418
        %s420 = smul.addr %s419, 4
        %s421 = scalar_lea.vmem %s3, %s420
        %s422 = smul.u32 2, %s20
        %p423 = scmp.eq.s32.totalorder %s21, 0
        // Predicated region
        $region71: #{resnet_forward.19} parent=65 // pred_check
          %p424 = pneg %p423
        $region72: #{resnet_forward.19} parent=65 // pred_check_branch
          %426 = sbr.rel (%p424) target = $region74
        $region73: #{resnet_forward.19} parent=65 // pred_region
          %427 = vst [vmem:[#allocation2] sm:$0xff] 0.0
          %428 = vst [vmem:[#allocation2 + $0x8] sm:$0xff] 0.0
        $region74: #{resnet_forward.19} parent=65 // pred_fallthru
          _
        %v429 = vld [vmem:[#allocation2] sm:$0xff]
        %v430 = vld [vmem:[#allocation2 + $0x8] sm:$0xff]
        %v431 = vld [vmem:[%s404] sm:$0xff]
        %v432 = vld [vmem:[%s358] sm:$0xff]
        %v433 = vld [vmem:[%s358 + $0x8] sm:$0xff]
        %v434 = vld [vmem:[%s358 + $0x10] sm:$0xff]
        %v435 = vld [vmem:[%s358 + $0x18] sm:$0xff]
        %v436 = vld [vmem:[%s358 + $0x20] sm:$0xff]
        %v437 = vld [vmem:[%s358 + $0x28] sm:$0xff]
        %v438 = vld [vmem:[%s358 + $0x30] sm:$0xff]
        %v439 = vld [vmem:[%s358 + $0x38] sm:$0xff]
        %v440 = vld [vmem:[%s358 + $0x40] sm:$0xff]
        %v441 = vld [vmem:[%s358 + $0x48] sm:$0xff]
        %v442 = vld [vmem:[%s358 + $0x50] sm:$0xff]
        %v443 = vld [vmem:[%s358 + $0x58] sm:$0xff]
        %v444 = vld [vmem:[%s358 + $0x60] sm:$0xff]
        %v445 = vld [vmem:[%s358 + $0x68] sm:$0xff]
        %v446 = vld [vmem:[%s358 + $0x70] sm:$0xff]
        %v447 = vld [vmem:[%s358 + $0x78] sm:$0xff]
        %v448 = vld [vmem:[%s358 + $0x80] sm:$0xff]
        %v449 = vld [vmem:[%s358 + $0x88] sm:$0xff]
        %v450 = vld [vmem:[%s358 + $0x90] sm:$0xff]
        %v451 = vld [vmem:[%s358 + $0x98] sm:$0xff]
        %v452 = vld [vmem:[%s358 + $0xa0] sm:$0xff]
        %v453 = vld [vmem:[%s358 + $0xa8] sm:$0xff]
        %v454 = vld [vmem:[%s358 + $0xb0] sm:$0xff]
        %v455 = vld [vmem:[%s358 + $0xb8] sm:$0xff]
        %v456 = vld [vmem:[%s358 + $0xc0] sm:$0xff]
        %v457 = vld [vmem:[%s358 + $0xc8] sm:$0xff]
        %v458 = vld [vmem:[%s358 + $0xd0] sm:$0xff]
        %v459 = vld [vmem:[%s358 + $0xd8] sm:$0xff]
        %v460 = vld [vmem:[%s358 + $0xe0] sm:$0xff]
        %v461 = vld [vmem:[%s358 + $0xe8] sm:$0xff]
        %v462 = vld [vmem:[%s358 + $0xf0] sm:$0xff]
        %v463 = vld [vmem:[%s358 + $0xf8] sm:$0xff]
        %v465 = vunpack.c.l.b16 %v431
        %v466 = vunpack.c.h.b16 %v431
        %v467 = vpack.c.b16 %v465, %v465
        %v468 = vpack.c.b16 %v466, %v466
        %v503 = vunpack.c.l.b16 %v432
        %v504 = vunpack.c.h.b16 %v432
        %v505 = vunpack.c.l.b16 %v433
        %v506 = vunpack.c.h.b16 %v433
        %v507 = vunpack.c.l.b16 %v434
        %v508 = vunpack.c.h.b16 %v434
        %v509 = vunpack.c.l.b16 %v435
        %v510 = vunpack.c.h.b16 %v435
        %v511 = vunpack.c.l.b16 %v436
        %v512 = vunpack.c.h.b16 %v436
        %v513 = vunpack.c.l.b16 %v437
        %v514 = vunpack.c.h.b16 %v437
        %v515 = vunpack.c.l.b16 %v438
        %v516 = vunpack.c.h.b16 %v438
        %v517 = vunpack.c.l.b16 %v439
        %v518 = vunpack.c.h.b16 %v439
        %v519 = vunpack.c.l.b16 %v440
        %v520 = vunpack.c.h.b16 %v440
        %v521 = vunpack.c.l.b16 %v441
        %v522 = vunpack.c.h.b16 %v441
        %v523 = vunpack.c.l.b16 %v442
        %v524 = vunpack.c.h.b16 %v442
        %v525 = vunpack.c.l.b16 %v443
        %v526 = vunpack.c.h.b16 %v443
        %v527 = vunpack.c.l.b16 %v444
        %v528 = vunpack.c.h.b16 %v444
        %v529 = vunpack.c.l.b16 %v445
        %v530 = vunpack.c.h.b16 %v445
        %v531 = vunpack.c.l.b16 %v446
        %v532 = vunpack.c.h.b16 %v446
        %v533 = vunpack.c.l.b16 %v447
        %v534 = vunpack.c.h.b16 %v447
        %v535 = vunpack.c.l.b16 %v448
        %v536 = vunpack.c.h.b16 %v448
        %v537 = vunpack.c.l.b16 %v449
        %v538 = vunpack.c.h.b16 %v449
        %v539 = vunpack.c.l.b16 %v450
        %v540 = vunpack.c.h.b16 %v450
        %v541 = vunpack.c.l.b16 %v451
        %v542 = vunpack.c.h.b16 %v451
        %v543 = vunpack.c.l.b16 %v452
        %v544 = vunpack.c.h.b16 %v452
        %v545 = vunpack.c.l.b16 %v453
        %v546 = vunpack.c.h.b16 %v453
        %v547 = vunpack.c.l.b16 %v454
        %v548 = vunpack.c.h.b16 %v454
        %v549 = vunpack.c.l.b16 %v455
        %v550 = vunpack.c.h.b16 %v455
        %v551 = vunpack.c.l.b16 %v456
        %v552 = vunpack.c.h.b16 %v456
        %v553 = vunpack.c.l.b16 %v457
        %v554 = vunpack.c.h.b16 %v457
        %v555 = vunpack.c.l.b16 %v458
        %v556 = vunpack.c.h.b16 %v458
        %v557 = vunpack.c.l.b16 %v459
        %v558 = vunpack.c.h.b16 %v459
        %v559 = vunpack.c.l.b16 %v460
        %v560 = vunpack.c.h.b16 %v460
        %v561 = vunpack.c.l.b16 %v461
        %v562 = vunpack.c.h.b16 %v461
        %v563 = vunpack.c.l.b16 %v462
        %v564 = vunpack.c.h.b16 %v462
        %v565 = vunpack.c.l.b16 %v463
        %v566 = vunpack.c.h.b16 %v463
        %v567 = vpack.c.b16 %v505, %v503
        %v568 = vpack.c.b16 %v506, %v504
        %v569 = vpack.c.b16 %v509, %v507
        %v570 = vpack.c.b16 %v510, %v508
        %v571 = vpack.c.b16 %v513, %v511
        %v572 = vpack.c.b16 %v514, %v512
        %v573 = vpack.c.b16 %v517, %v515
        %v574 = vpack.c.b16 %v518, %v516
        %v575 = vpack.c.b16 %v521, %v519
        %v576 = vpack.c.b16 %v522, %v520
        %v577 = vpack.c.b16 %v525, %v523
        %v578 = vpack.c.b16 %v526, %v524
        %v579 = vpack.c.b16 %v529, %v527
        %v580 = vpack.c.b16 %v530, %v528
        %v581 = vpack.c.b16 %v533, %v531
        %v582 = vpack.c.b16 %v534, %v532
        %v583 = vpack.c.b16 %v537, %v535
        %v584 = vpack.c.b16 %v538, %v536
        %v585 = vpack.c.b16 %v541, %v539
        %v586 = vpack.c.b16 %v542, %v540
        %v587 = vpack.c.b16 %v545, %v543
        %v588 = vpack.c.b16 %v546, %v544
        %v589 = vpack.c.b16 %v549, %v547
        %v590 = vpack.c.b16 %v550, %v548
        %v591 = vpack.c.b16 %v553, %v551
        %v592 = vpack.c.b16 %v554, %v552
        %v593 = vpack.c.b16 %v557, %v555
        %v594 = vpack.c.b16 %v558, %v556
        %v595 = vpack.c.b16 %v561, %v559
        %v596 = vpack.c.b16 %v562, %v560
        %v597 = vpack.c.b16 %v565, %v563
        %v598 = vpack.c.b16 %v566, %v564
        %631 = vmatpush.bf16.msra.mxu0 %v581
        %632 = vmatpush.bf16.msra.mxu0 %v579
        %633 = vmatpush.bf16.msra.mxu0 %v577
        %634 = vmatpush.bf16.msra.mxu0 %v575
        %635 = vmatpush.bf16.msra.mxu0 %v573
        %636 = vmatpush.bf16.msra.mxu0 %v571
        %637 = vmatpush.bf16.msra.mxu0 %v569
        %638 = vmatpush.bf16.msra.mxu0 %v567
        %639 = vmatmul.bf16.gmra.mxu0 %v467
        %v640 = vpop.f32.mrf.mxu0
        %v641 = vadd.f32 0.0, %v640
        %v642 = vpop.f32.mrf.mxu0
        %643 = vdwg.mxu0
        %644 = vmatpush.bf16.msra.mxu0 %v597
        %645 = vmatpush.bf16.msra.mxu0 %v595
        %646 = vmatpush.bf16.msra.mxu0 %v593
        %647 = vmatpush.bf16.msra.mxu0 %v591
        %648 = vmatpush.bf16.msra.mxu0 %v589
        %649 = vmatpush.bf16.msra.mxu0 %v587
        %650 = vmatpush.bf16.msra.mxu0 %v585
        %651 = vmatpush.bf16.msra.mxu0 %v583
        %652 = vmatmul.bf16.gmra.mxu0 %v468
        %v653 = vpop.f32.mrf.mxu0
        %v654 = vadd.f32 %v641, %v653
        %v655 = vpop.f32.mrf.mxu0
        %656 = vdwg.mxu0
        %657 = vmatpush.bf16.msra.mxu0 %v582
        %658 = vmatpush.bf16.msra.mxu0 %v580
        %659 = vmatpush.bf16.msra.mxu0 %v578
        %660 = vmatpush.bf16.msra.mxu0 %v576
        %661 = vmatpush.bf16.msra.mxu0 %v574
        %662 = vmatpush.bf16.msra.mxu0 %v572
        %663 = vmatpush.bf16.msra.mxu0 %v570
        %664 = vmatpush.bf16.msra.mxu0 %v568
        %665 = vmatmul.bf16.gmra.mxu0 %v467
        %v666 = vpop.f32.mrf.mxu0
        %v667 = vadd.f32 0.0, %v666
        %v668 = vpop.f32.mrf.mxu0
        %669 = vdwg.mxu0
        %670 = vmatpush.bf16.msra.mxu0 %v598
        %671 = vmatpush.bf16.msra.mxu0 %v596
        %672 = vmatpush.bf16.msra.mxu0 %v594
        %673 = vmatpush.bf16.msra.mxu0 %v592
        %674 = vmatpush.bf16.msra.mxu0 %v590
        %675 = vmatpush.bf16.msra.mxu0 %v588
        %676 = vmatpush.bf16.msra.mxu0 %v586
        %677 = vmatpush.bf16.msra.mxu0 %v584
        %678 = vmatmul.bf16.gmra.mxu0 %v468
        %v679 = vpop.f32.mrf.mxu0
        %v680 = vadd.f32 %v667, %v679
        %v681 = vpop.f32.mrf.mxu0
        %682 = vdwg.mxu0
        %v683 = vadd.f32 %v429, %v654
        %v684 = vadd.f32 %v430, %v680
        %685 = vst [vmem:[#allocation2] sm:$0xff] %v683
        %686 = vst [vmem:[#allocation2 + $0x8] sm:$0xff] %v684
        // Predicated region
        $region75: #{resnet_forward.19} parent=65 // pred_check
          %p687 = pneg %p423
        $region76: #{resnet_forward.19} parent=65 // pred_check_branch
          %689 = sbr.rel (%p687) target = $region78
        $region77: #{resnet_forward.19} parent=65 // pred_region
          %v690 = vld [vmem:[#allocation2] sm:$0xff]
          %v691 = vld [vmem:[#allocation2 + $0x8] sm:$0xff]
          %v692 = vld [vmem:[%s411] sm:$0x3]
          %v694 = vperm.slane %v692, 0
          %v695 = vperm.slane %v692, 1
          %v698 = vadd.f32 %v690, %v694
          %v699 = vadd.f32 %v691, %v695
          %v700 = vpack.c.bf16 %v699, %v698
          %701 = vst [vmem:[%s421] sm:$0xff] %v700
        $region78: #{resnet_forward.19} parent=65 // pred_fallthru
          _
        %s702 = smul.u32 2, %s20
        %p703 = scmp.lt.s32.totalorder %s19, 0
        %s704 = scalar_select %p703, %s19, 0
        %p705 = scmp.lt.s32.totalorder %s702, 3
        %s706 = scalar_select %p705, %s702, 3
        %s707 = smul.addr %s704, 4
        %s708 = sadd.s32 %s706, %s707
        %s709 = smul.addr %s708, 4
        %s710 = scalar_lea.vmem %s3, %s709
        // Predicated region
        $region79: #{resnet_forward.19} parent=65 // pred_check
          %p711 = pneg %p135
        $region80: #{resnet_forward.19} parent=65 // pred_check_branch
          %713 = sbr.rel (%p711) target = $region82
        $region81: #{resnet_forward.19} parent=65 // pred_region
          %s714 = smul.u32 2, %s20
        $region82: #{resnet_forward.19} parent=65 // pred_fallthru
          _
      $region66: #{resnet_forward.19} parent=5 // pred_fallthru
        _
      %p715 = scmp.le.s32.totalorder 2, %s9
      // Predicated region
      $region83: #{resnet_forward.19} parent=5 // pred_check
        %p716 = pneg %p715
      $region84: #{resnet_forward.19} parent=5 // pred_check_branch
        %718 = sbr.rel (%p716) target = $region86
      $region85: #{resnet_forward.19} parent=5 // pred_region
        %s719 = ssub.s32 %s9, 2
        // Predicated region
        $region87: #{resnet_forward.19} parent=85 // pred_check
          %p720 = pneg %p141
        $region88: #{resnet_forward.19} parent=85 // pred_check_branch
          %722 = sbr.rel (%p720) target = $region90
        $region89: #{resnet_forward.19} parent=85 // pred_region
          %s723 = smul.u32 2, %s23
          %p724 = scmp.lt.s32.totalorder %s22, 0
          %s725 = scalar_select %p724, %s22, 0
          %p726 = scmp.lt.s32.totalorder %s723, 3
          %s727 = scalar_select %p726, %s723, 3
          %s728 = smul.addr %s725, 4
          %s729 = sadd.s32 %s727, %s728
          %s730 = smul.addr %s729, 4
          %s731 = scalar_lea.vmem %s3, %s730
        $region90: #{resnet_forward.19} parent=85 // pred_fallthru
          _
      $region86: #{resnet_forward.19} parent=5 // pred_fallthru
        _
    $region6: #{resnet_forward.19} parent=1 // loop_footer
      %s13 = sadd.s32 1, %s9
    $region7: #{resnet_forward.19} parent=1 // loop_footer_branch
      %8 = sbr.rel target = $region3
    $region8: #{resnet_forward.19} parent=1 // loop_exit
      _

// kernel: resnet_forward.21
$region0: #{resnet_forward.21}
  #allocation0 [shape = 'u32[]', space=smem, size = 0x4, offset = 0x4, fixed_abs, tag = 'smem constant byte address 0x4 - core index']
  #allocation1 [shape = 'u32[72,128]{1,0:T(1,128)}', space=vmem, size = 0x9000, scoped, tag = 'internal scratch']
  #allocation2 [shape = 'f32[1,1]{1,0:T(1,128)S(1)}', space=vmem, size = 0x200, scoped, tag = 'scoped memory for resnet_forward.21']
  %s0 = inlined_call_operand.vmem [shape: bf16[2,4,512], index: 0, kind: input, shape index: {}]
  %s1 = inlined_call_operand.vmem [shape: f32[1,512], index: 1, kind: input, shape index: {}]
  %s2 = inlined_call_operand.<no memory space> [shape: f32[1,1], index: 2, kind: input, shape index: {}]
  %s3 = inlined_call_operand.vmem [shape: f32[2,1], index: 3, kind: output, shape index: {}]
  %s4 = sld [smem:[#allocation0]]
  $region22: #{resnet_forward.21} parent=0
    _
  %s6 = ssub.s32 1, %s4
  %s7 = scalar_select 0, %s6, %s4
  %v8 = vstv %s2
  %9 = vst [vmem:[#allocation2] sm:$0x1] %v8
  // Predicated region
  $region2: #{resnet_forward.21} parent=0 // pred_check
    _
  $region3: #{resnet_forward.21} parent=0 // pred_check_branch
    %11 = sbr.rel (0) target = $region5
  $region4: #{resnet_forward.21} parent=0 // pred_region
    _
  $region5: #{resnet_forward.21} parent=0 // pred_fallthru
    _
  // Predicated region
  $region6: #{resnet_forward.21} parent=0 // pred_check
    _
  $region7: #{resnet_forward.21} parent=0 // pred_check_branch
    %13 = sbr.rel (0) target = $region9
  $region8: #{resnet_forward.21} parent=0 // pred_region
    _
  $region9: #{resnet_forward.21} parent=0 // pred_fallthru
    _
  // Predicated region
  $region10: #{resnet_forward.21} parent=0 // pred_check
    _
  $region11: #{resnet_forward.21} parent=0 // pred_check_branch
    %15 = sbr.rel (0) target = $region13
  $region12: #{resnet_forward.21} parent=0 // pred_region
    _
  $region13: #{resnet_forward.21} parent=0 // pred_fallthru
    _
  %v16 = vld [vmem:[%s0] sm:$0xff]
  %v17 = vld [vmem:[%s0 + $0x8] sm:$0xff]
  %v18 = vunpack.c.l.bf16 %v16
  %v19 = vunpack.c.h.bf16 %v16
  %v20 = vunpack.c.l.bf16 %v17
  %v21 = vunpack.c.h.bf16 %v17
  %26 = vst [vmem:[#allocation1] ss:$2 sm:$0xff] %v18
  %s27 = scalar_lea.vmem [#allocation1], 16
  %28 = vst [vmem:[%s27] ss:$2 sm:$0xff] %v19
  %v29 = vld.sshfl [vmem:[#allocation1] sm:$0xff pattern:$0x75316420]
  %v30 = vld.sshfl [vmem:[#allocation1 + $0x8] sm:$0xff pattern:$0x75316420]
  %v31 = vld.sshfl [vmem:[#allocation1 + $0x10] sm:$0xff pattern:$0x75316420]
  %v32 = vld.sshfl [vmem:[#allocation1 + $0x18] sm:$0xff pattern:$0x75316420]
  %s33 = scalar_lea.vmem [#allocation1], 32
  %34 = vst [vmem:[%s33] ss:$2 sm:$0xff] %v20
  %s35 = scalar_lea.vmem [#allocation1], 48
  %36 = vst [vmem:[%s35] ss:$2 sm:$0xff] %v21
  %v37 = vld.sshfl [vmem:[#allocation1 + $0x20] sm:$0xff pattern:$0x75316420]
  %v38 = vld.sshfl [vmem:[#allocation1 + $0x28] sm:$0xff pattern:$0x75316420]
  %v39 = vld.sshfl [vmem:[#allocation1 + $0x30] sm:$0xff pattern:$0x75316420]
  %v40 = vld.sshfl [vmem:[#allocation1 + $0x38] sm:$0xff pattern:$0x75316420]
  %vm49 = vcmask 1043456
  %v50 = vsel %vm49, %v29, 0.0
  %v51 = vrot.slane %v50, 4
  %v52 = vadd.f32 %v50, %v51
  %v53 = vrot.slane %v52, 2
  %v54 = vadd.f32 %v52, %v53
  %v55 = vrot.slane %v54, 1
  %v56 = vadd.f32 %v54, %v55
  %v57 = vsel %vm49, %v30, 0.0
  %v58 = vrot.slane %v57, 4
  %v59 = vadd.f32 %v57, %v58
  %v60 = vrot.slane %v59, 2
  %v61 = vadd.f32 %v59, %v60
  %v62 = vrot.slane %v61, 1
  %v63 = vadd.f32 %v61, %v62
  %v64 = vsel %vm49, %v31, 0.0
  %v65 = vrot.slane %v64, 4
  %v66 = vadd.f32 %v64, %v65
  %v67 = vrot.slane %v66, 2
  %v68 = vadd.f32 %v66, %v67
  %v69 = vrot.slane %v68, 1
  %v70 = vadd.f32 %v68, %v69
  %v71 = vsel %vm49, %v32, 0.0
  %v72 = vrot.slane %v71, 4
  %v73 = vadd.f32 %v71, %v72
  %v74 = vrot.slane %v73, 2
  %v75 = vadd.f32 %v73, %v74
  %v76 = vrot.slane %v75, 1
  %v77 = vadd.f32 %v75, %v76
  %v78 = vsel %vm49, %v37, 0.0
  %v79 = vrot.slane %v78, 4
  %v80 = vadd.f32 %v78, %v79
  %v81 = vrot.slane %v80, 2
  %v82 = vadd.f32 %v80, %v81
  %v83 = vrot.slane %v82, 1
  %v84 = vadd.f32 %v82, %v83
  %v85 = vsel %vm49, %v38, 0.0
  %v86 = vrot.slane %v85, 4
  %v87 = vadd.f32 %v85, %v86
  %v88 = vrot.slane %v87, 2
  %v89 = vadd.f32 %v87, %v88
  %v90 = vrot.slane %v89, 1
  %v91 = vadd.f32 %v89, %v90
  %v92 = vsel %vm49, %v39, 0.0
  %v93 = vrot.slane %v92, 4
  %v94 = vadd.f32 %v92, %v93
  %v95 = vrot.slane %v94, 2
  %v96 = vadd.f32 %v94, %v95
  %v97 = vrot.slane %v96, 1
  %v98 = vadd.f32 %v96, %v97
  %v99 = vsel %vm49, %v40, 0.0
  %v100 = vrot.slane %v99, 4
  %v101 = vadd.f32 %v99, %v100
  %v102 = vrot.slane %v101, 2
  %v103 = vadd.f32 %v101, %v102
  %v104 = vrot.slane %v103, 1
  %v105 = vadd.f32 %v103, %v104
  %v106 = vrcp.pop 4.0
  %v107 = vmul.f32 4.0, %v106
  %v108 = vsub.f32 1.0, %v107
  %v109 = vmul.f32 %v106, %v108
  %v110 = vadd.f32 %v106, %v109
  %vm111 = vweird.f32 %v106
  %v112 = vsel %vm111, %v106, %v110
  %v113 = vmul.f32 %v56, %v112
  %v114 = vmul.f32 %v63, %v112
  %v115 = vmul.f32 %v70, %v112
  %v116 = vmul.f32 %v77, %v112
  %v117 = vmul.f32 %v84, %v112
  %v118 = vmul.f32 %v91, %v112
  %v119 = vmul.f32 %v98, %v112
  %v120 = vmul.f32 %v105, %v112
  %v121 = vld [vmem:[%s1] sm:$0xf]
  %v123 = vperm.slane %v121, 0
  %v124 = vperm.slane %v121, 1
  %v125 = vperm.slane %v121, 2
  %v126 = vperm.slane %v121, 3
  %v131 = vmul.f32 %v113, %v123
  %v132 = vmul.f32 %v114, %v124
  %v133 = vmul.f32 %v115, %v125
  %v134 = vmul.f32 %v116, %v126
  %v135 = vmul.f32 %v117, %v123
  %v136 = vmul.f32 %v118, %v124
  %v137 = vmul.f32 %v119, %v125
  %v138 = vmul.f32 %v120, %v126
  %v147 = vrot.slane %v135, 7
  %vm148 = vcmask 1041409
  %v149 = vsel %vm148, %v147, %v131
  %v150 = vrot.slane %v136, 7
  %v151 = vsel %vm148, %v150, %v132
  %v152 = vrot.slane %v137, 7
  %v153 = vsel %vm148, %v152, %v133
  %v154 = vrot.slane %v138, 7
  %v155 = vsel %vm148, %v154, %v134
  %vm160 = vcmask 1041408
  %v161 = vsel %vm160, %v149, 0.0
  %v162 = vsel %vm160, %v151, 0.0
  %v163 = vadd.f32 %v161, %v162
  %v164 = vsel %vm160, %v153, 0.0
  %v165 = vadd.f32 %v163, %v164
  %v166 = vsel %vm160, %v155, 0.0
  %v167 = vadd.f32 %v165, %v166
  %168 = vadd.xlane.f32.xlu0 %v167
  %v169 = vpop.xlane.xlu0 %168
  %v170 = vld [vmem:[#allocation2] sm:$0x1]
  %v172 = vperm.slane %v170, 0
  %v174 = vadd.f32 %v169, %v172
  %vm175 = vcmask 1024
  %176 = vst.msk [vmem:[%s3] sm:$0x3] %vm175, %v174
  // Predicated region
  $region14: #{resnet_forward.21} parent=0 // pred_check
    _
  $region15: #{resnet_forward.21} parent=0 // pred_check_branch
    %178 = sbr.rel (0) target = $region17
  $region16: #{resnet_forward.21} parent=0 // pred_region
    _
  $region17: #{resnet_forward.21} parent=0 // pred_fallthru
    _
  // Predicated region
  $region18: #{resnet_forward.21} parent=0 // pred_check
    _
  $region19: #{resnet_forward.21} parent=0 // pred_check_branch
    %180 = sbr.rel (0) target = $region21
  $region20: #{resnet_forward.21} parent=0 // pred_region
    _
  $region21: #{resnet_forward.21} parent=0 // pred_fallthru
    _

// kernel: resnet_forward.20
$region0: #{resnet_forward.20}
  #allocation0 [shape = 'u32[]', space=smem, size = 0x4, offset = 0x4, fixed_abs, tag = 'smem constant byte address 0x4 - core index']
  #allocation1 [shape = 'u32[72,128]{1,0:T(1,128)}', space=vmem, size = 0x9000, scoped, tag = 'internal scratch']
  #allocation2 [shape = 'f32[8,256]{1,0:T(8,128)}', space=vmem, size = 0x2000, scoped, tag = 'scratch operand']
  %s0 = inlined_call_operand.vmem [shape: bf16[8,128], index: 0, kind: input, shape index: {}]
  %s1 = inlined_call_operand.vmem [shape: bf16[128,512], index: 1, kind: input, shape index: {}]
  %s2 = inlined_call_operand.vmem [shape: f32[1,512], index: 2, kind: input, shape index: {}]
  %s3 = inlined_call_operand.vmem [shape: bf16[8,512], index: 3, kind: input, shape index: {}, may-alias: {3,4}]
  %s4 = inlined_call_operand.vmem [shape: bf16[8,512], index: 4, kind: output, shape index: {}, may-alias: {3,4}]
  %s5 = sld [smem:[#allocation0]]
  $region95: #{resnet_forward.20} parent=0
    _
  %s7 = ssub.s32 1, %s5
  %s8 = scalar_select 0, %s7, %s5
  $region1: #{resnet_forward.20} parent=0
    #allocation3 [shape = 'u8[131072]{0}', space=vmem, size = 0x20000, scoped, tag = 'input window, operand 1']
    loop: start=0, step=1, limit=4
    $region2: #{resnet_forward.20} parent=1 // loop_pre_header
      _
    $region3: #{resnet_forward.20} parent=1 // loop_header
      %s10 = sphi 0, %s14
      %p11 = scmp.ge.s32.totalorder %s10, 4
      %s17 = sphi 0, %s36
      %s18 = sphi 0, %s32
      %s19 = sphi 0, %s28
      %s20 = sphi 0, %s17
      %s21 = sphi 0, %s18
      %s22 = sphi 0, %s19
      %s23 = sphi 0, %s20
      %s24 = sphi 0, %s21
      %s25 = sphi 0, %s22
      %s41 = sphi 0, %s43
      %s44 = sphi 0, %s41
      %s45 = sphi 0, %s44
      %s61 = sphi 0, %s45
      %s69 = sphi 0, %s71
      %s72 = sphi 0, %s69
      %s73 = sphi 0, %s72
      %s89 = sphi 0, %s73
      %s95 = sphi 0, %s97
      %s98 = sphi 0, %s95
      %s99 = sphi 0, %s98
      %s115 = sphi 0, %s99
      %s123 = sphi 0, %s125
      %s126 = sphi 0, %s123
      %s127 = sphi 0, %s126
      %s143 = sphi 0, %s127
      %s151 = sphi 0, %s153
      %s154 = sphi 0, %s151
      %s155 = sphi 0, %s154
      %s171 = sphi 0, %s155
    $region4: #{resnet_forward.20} parent=1 // loop_header_branch
      %13 = sbr.rel (%p11) target = $region8
    $region5: #{resnet_forward.20} parent=1 // loop_body
      %s15 = ssub.s32 %s10, 1
      %s16 = ssub.s32 %s10, 2
      %s26 = sadd.s32 1, %s19
      %p27 = scmp.ge.s32.totalorder %s26, 1
      %s28 = scalar_select %p27, 0, %s26
      %s29 = sadd.s32 1, %s18
      %s30 = scalar_select %p27, %s29, %s18
      %p31 = scmp.ge.s32.totalorder %s30, 2
      %s32 = scalar_select %p31, 0, %s30
      %s33 = sadd.s32 1, %s17
      %s34 = scalar_select %p31, %s33, %s17
      %p35 = scmp.ge.s32.totalorder %s34, 1
      %s36 = scalar_select %p35, 0, %s34
      %s37 = ssub.s32 %s17, %s36
      %s38 = ssub.s32 %s19, %s28
      %s39 = sor.u32 %s37, %s38
      %p40 = scmp.eq.s32.totalorder %s39, 0
      %s42 = sadd.s32 %s41, 1
      %s43 = scalar_select %p40, %s41, %s42
      %p46 = pneg %p40
      %p47 = scmp.eq.s32.totalorder %s10, 1
      %p48 = por %p46, %p47
      %p49 = scmp.ne.s32.totalorder %s41, %s44
      %p50 = scmp.eq.s32.totalorder %s10, 0
      %p51 = por %p49, %p50
      %p52 = scmp.ne.s32.totalorder %s41, %s44
      %p53 = scmp.eq.s32.totalorder %s15, 1
      %p54 = por %p52, %p53
      %p55 = scmp.ne.s32.totalorder %s44, %s45
      %p56 = scmp.eq.s32.totalorder %s15, 0
      %p57 = por %p55, %p56
      %p58 = scmp.ne.s32.totalorder %s44, %s45
      %p59 = scmp.eq.s32.totalorder %s16, 1
      %p60 = por %p58, %p59
      %p62 = scmp.ne.s32.totalorder %s45, %s61
      %p63 = scmp.eq.s32.totalorder %s16, 0
      %p64 = por %p62, %p63
      %s65 = ssub.s32 %s19, %s28
      %s66 = ssub.s32 %s18, %s32
      %s67 = sor.u32 %s65, %s66
      %p68 = scmp.eq.s32.totalorder %s67, 0
      %s70 = sadd.s32 %s69, 1
      %s71 = scalar_select %p68, %s69, %s70
      %p74 = pneg %p68
      %p75 = scmp.eq.s32.totalorder %s10, 1
      %p76 = por %p74, %p75
      %p77 = scmp.ne.s32.totalorder %s69, %s72
      %p78 = scmp.eq.s32.totalorder %s10, 0
      %p79 = por %p77, %p78
      %p80 = scmp.ne.s32.totalorder %s69, %s72
      %p81 = scmp.eq.s32.totalorder %s15, 1
      %p82 = por %p80, %p81
      %p83 = scmp.ne.s32.totalorder %s72, %s73
      %p84 = scmp.eq.s32.totalorder %s15, 0
      %p85 = por %p83, %p84
      %p86 = scmp.ne.s32.totalorder %s72, %s73
      %p87 = scmp.eq.s32.totalorder %s16, 1
      %p88 = por %p86, %p87
      %p90 = scmp.ne.s32.totalorder %s73, %s89
      %p91 = scmp.eq.s32.totalorder %s16, 0
      %p92 = por %p90, %p91
      %s93 = ssub.s32 %s18, %s32
      %p94 = scmp.eq.s32.totalorder %s93, 0
      %s96 = sadd.s32 %s95, 1
      %s97 = scalar_select %p94, %s95, %s96
      %p100 = pneg %p94
      %p101 = scmp.eq.s32.totalorder %s10, 1
      %p102 = por %p100, %p101
      %p103 = scmp.ne.s32.totalorder %s95, %s98
      %p104 = scmp.eq.s32.totalorder %s10, 0
      %p105 = por %p103, %p104
      %p106 = scmp.ne.s32.totalorder %s95, %s98
      %p107 = scmp.eq.s32.totalorder %s15, 1
      %p108 = por %p106, %p107
      %p109 = scmp.ne.s32.totalorder %s98, %s99
      %p110 = scmp.eq.s32.totalorder %s15, 0
      %p111 = por %p109, %p110
      %p112 = scmp.ne.s32.totalorder %s98, %s99
      %p113 = scmp.eq.s32.totalorder %s16, 1
      %p114 = por %p112, %p113
      %p116 = scmp.ne.s32.totalorder %s99, %s115
      %p117 = scmp.eq.s32.totalorder %s16, 0
      %p118 = por %p116, %p117
      %s119 = ssub.s32 %s17, %s36
      %s120 = ssub.s32 %s18, %s32
      %s121 = sor.u32 %s119, %s120
      %p122 = scmp.eq.s32.totalorder %s121, 0
      %s124 = sadd.s32 %s123, 1
      %s125 = scalar_select %p122, %s123, %s124
      %p128 = pneg %p122
      %p129 = scmp.eq.s32.totalorder %s10, 1
      %p130 = por %p128, %p129
      %p131 = scmp.ne.s32.totalorder %s123, %s126
      %p132 = scmp.eq.s32.totalorder %s10, 0
      %p133 = por %p131, %p132
      %p134 = scmp.ne.s32.totalorder %s123, %s126
      %p135 = scmp.eq.s32.totalorder %s15, 1
      %p136 = por %p134, %p135
      %p137 = scmp.ne.s32.totalorder %s126, %s127
      %p138 = scmp.eq.s32.totalorder %s15, 0
      %p139 = por %p137, %p138
      %p140 = scmp.ne.s32.totalorder %s126, %s127
      %p141 = scmp.eq.s32.totalorder %s16, 1
      %p142 = por %p140, %p141
      %p144 = scmp.ne.s32.totalorder %s127, %s143
      %p145 = scmp.eq.s32.totalorder %s16, 0
      %p146 = por %p144, %p145
      %s147 = ssub.s32 %s17, %s36
      %s148 = ssub.s32 %s18, %s32
      %s149 = sor.u32 %s147, %s148
      %p150 = scmp.eq.s32.totalorder %s149, 0
      %s152 = sadd.s32 %s151, 1
      %s153 = scalar_select %p150, %s151, %s152
      %p156 = pneg %p150
      %p157 = scmp.eq.s32.totalorder %s10, 1
      %p158 = por %p156, %p157
      %p159 = scmp.ne.s32.totalorder %s151, %s154
      %p160 = scmp.eq.s32.totalorder %s10, 0
      %p161 = por %p159, %p160
      %p162 = scmp.ne.s32.totalorder %s151, %s154
      %p163 = scmp.eq.s32.totalorder %s15, 1
      %p164 = por %p162, %p163
      %p165 = scmp.ne.s32.totalorder %s154, %s155
      %p166 = scmp.eq.s32.totalorder %s15, 0
      %p167 = por %p165, %p166
      %p168 = scmp.ne.s32.totalorder %s154, %s155
      %p169 = scmp.eq.s32.totalorder %s16, 1
      %p170 = por %p168, %p169
      %p172 = scmp.ne.s32.totalorder %s155, %s171
      %p173 = scmp.eq.s32.totalorder %s16, 0
      %p174 = por %p172, %p173
      %p175 = scmp.le.s32.totalorder 1, %s10
      %p176 = scmp.lt.s32.totalorder %s10, 3
      %p177 = pnand %p175, %p176
      %p178 = pneg %p177
      // Predicated region
      $region9: #{resnet_forward.20} parent=5 // pred_check
        _
      $region10: #{resnet_forward.20} parent=5 // pred_check_branch
        %180 = sbr.rel (%p177) target = $region12
      $region11: #{resnet_forward.20} parent=5 // pred_region
        %s181 = ssub.s32 %s10, 1
        // Predicated region
        $region13: #{resnet_forward.20} parent=11 // pred_check
          %p182 = pneg %p57
        $region14: #{resnet_forward.20} parent=11 // pred_check_branch
          %184 = sbr.rel (%p182) target = $region16
        $region15: #{resnet_forward.20} parent=11 // pred_region
          %p185 = scmp.lt.s32.totalorder %s20, 0
          %s186 = scalar_select %p185, %s20, 0
          %p187 = scmp.lt.s32.totalorder %s22, 0
          %s188 = scalar_select %p187, %s22, 0
          %s189 = sadd.s32 %s188, %s186
          %s190 = smul.addr %s189, 4
          %s191 = scalar_lea.vmem %s0, %s190
        $region16: #{resnet_forward.20} parent=11 // pred_fallthru
          _
      $region12: #{resnet_forward.20} parent=5 // pred_fallthru
        _
      %p192 = scmp.lt.s32.totalorder %s10, 2
      // Predicated region
      $region17: #{resnet_forward.20} parent=5 // pred_check
        %p193 = pneg %p192
      $region18: #{resnet_forward.20} parent=5 // pred_check_branch
        %195 = sbr.rel (%p193) target = $region20
      $region19: #{resnet_forward.20} parent=5 // pred_region
        // Predicated region
        $region21: #{resnet_forward.20} parent=19 // pred_check
          %p196 = pneg %p79
        $region22: #{resnet_forward.20} parent=19 // pred_check_branch
          %198 = sbr.rel (%p196) target = $region24
        $region23: #{resnet_forward.20} parent=19 // pred_region
          %s199 = sand.u32 %s69, 1
          %s200 = sand.u32 %s69, 1
          %s201 = smul.addr %s200, 128
          %s202 = scalar_lea.vmem [#allocation3], %s201
          %s203 = smul.u32 16, %s19
          %s204 = smul.u32 2, %s18
          %s205 = smul.addr %s203, 4
          %s206 = sadd.s32 %s204, %s205
          %s207 = smul.addr %s206, 4
          %s208 = scalar_lea.vmem %s1, %s207
          // Predicated region
          $region25: #{resnet_forward.20} parent=23 // pred_check
            _
          $region26: #{resnet_forward.20} parent=23 // pred_check_branch
            %210 = sbr.rel (0) target = $region28
          $region27: #{resnet_forward.20} parent=23 // pred_region
            // Predicated region
            $region29: #{resnet_forward.20} parent=27 // pred_check
              _
            $region30: #{resnet_forward.20} parent=27 // pred_check_branch
              %212 = sbr.rel (0) target = $region32
            $region31: #{resnet_forward.20} parent=27 // pred_region
              // Predicated region
              $region44: #{resnet_forward.20} parent=31 // pred_check
                _
              $region45: #{resnet_forward.20} parent=31 // pred_check_branch
                %258 = sbr.rel (0) target = $region47
              $region46: #{resnet_forward.20} parent=31 // pred_region
                loop: start=0, step=1, limit=1
                $region48: #{resnet_forward.20} parent=46 // loop_pre_header
                  _
                $region49: #{resnet_forward.20} parent=46 // loop_header
                  %s260 = sphi 0, %s264
                  %p261 = scmp.ge.s32.totalorder %s260, 1
                  %s265 = sphi %s208, %s208
                  %s266 = sphi %s202, %s202
                $region50: #{resnet_forward.20} parent=46 // loop_header_branch
                  %263 = sbr.rel (%p261) target = $region54
                $region51: #{resnet_forward.20} parent=46 // loop_body
                  %v267 = vld [vmem:[%s265] sm:$0xff]
                  %268 = vst [vmem:[%s266] sm:$0xff] %v267
                  %v269 = vld [vmem:[%s265 + $0x10] sm:$0xff]
                  %270 = vst [vmem:[%s266 + $0x8] sm:$0xff] %v269
                  %v271 = vld [vmem:[%s265 + $0x20] sm:$0xff]
                  %272 = vst [vmem:[%s266 + $0x10] sm:$0xff] %v271
                  %v273 = vld [vmem:[%s265 + $0x30] sm:$0xff]
                  %274 = vst [vmem:[%s266 + $0x18] sm:$0xff] %v273
                  %v275 = vld [vmem:[%s265 + $0x40] sm:$0xff]
                  %276 = vst [vmem:[%s266 + $0x20] sm:$0xff] %v275
                  %v277 = vld [vmem:[%s265 + $0x50] sm:$0xff]
                  %278 = vst [vmem:[%s266 + $0x28] sm:$0xff] %v277
                  %v279 = vld [vmem:[%s265 + $0x60] sm:$0xff]
                  %280 = vst [vmem:[%s266 + $0x30] sm:$0xff] %v279
                  %v281 = vld [vmem:[%s265 + $0x70] sm:$0xff]
                  %282 = vst [vmem:[%s266 + $0x38] sm:$0xff] %v281
                  %v283 = vld [vmem:[%s265 + $0x80] sm:$0xff]
                  %284 = vst [vmem:[%s266 + $0x40] sm:$0xff] %v283
                  %v285 = vld [vmem:[%s265 + $0x90] sm:$0xff]
                  %286 = vst [vmem:[%s266 + $0x48] sm:$0xff] %v285
                  %v287 = vld [vmem:[%s265 + $0xa0] sm:$0xff]
                  %288 = vst [vmem:[%s266 + $0x50] sm:$0xff] %v287
                  %v289 = vld [vmem:[%s265 + $0xb0] sm:$0xff]
                  %290 = vst [vmem:[%s266 + $0x58] sm:$0xff] %v289
                  %v291 = vld [vmem:[%s265 + $0xc0] sm:$0xff]
                  %292 = vst [vmem:[%s266 + $0x60] sm:$0xff] %v291
                  %v293 = vld [vmem:[%s265 + $0xd0] sm:$0xff]
                  %294 = vst [vmem:[%s266 + $0x68] sm:$0xff] %v293
                  %v295 = vld [vmem:[%s265 + $0xe0] sm:$0xff]
                  %296 = vst [vmem:[%s266 + $0x70] sm:$0xff] %v295
                  %v297 = vld [vmem:[%s265 + $0xf0] sm:$0xff]
                  %298 = vst [vmem:[%s266 + $0x78] sm:$0xff] %v297
                $region52: #{resnet_forward.20} parent=46 // loop_footer
                  %s264 = sadd.s32 1, %s260
                $region53: #{resnet_forward.20} parent=46 // loop_footer_branch
                  %259 = sbr.rel target = $region49
                $region54: #{resnet_forward.20} parent=46 // loop_exit
                  _
              $region47: #{resnet_forward.20} parent=31 // pred_fallthru
                _
              // Predicated region
              $region55: #{resnet_forward.20} parent=31 // pred_check
                _
              $region56: #{resnet_forward.20} parent=31 // pred_check_branch
                %300 = sbr.rel target = $region58
              $region57: #{resnet_forward.20} parent=31 // pred_region
                _
              $region58: #{resnet_forward.20} parent=31 // pred_fallthru
                _
            $region32: #{resnet_forward.20} parent=27 // pred_fallthru
              _
            // Predicated region
            $region33: #{resnet_forward.20} parent=27 // pred_check
              _
            $region34: #{resnet_forward.20} parent=27 // pred_check_branch
              %214 = sbr.rel target = $region36
            $region35: #{resnet_forward.20} parent=27 // pred_region
              %s216 = ssub.s32 256, 1
              loop: start=0, step=1, limit=1
              $region37: #{resnet_forward.20} parent=35 // loop_pre_header
                _
              $region38: #{resnet_forward.20} parent=35 // loop_header
                %s218 = sphi 0, %s222
                %p219 = scmp.ge.s32.totalorder %s218, 1
                %s223 = sphi %s208, %s208
                %s224 = sphi %s202, %s202
              $region39: #{resnet_forward.20} parent=35 // loop_header_branch
                %221 = sbr.rel (%p219) target = $region43
              $region40: #{resnet_forward.20} parent=35 // loop_body
                %v225 = vld [vmem:[%s223] sm:%s216]
                %226 = vst [vmem:[%s224] sm:%s216] %v225
                %v227 = vld [vmem:[%s223 + $0x10] sm:%s216]
                %228 = vst [vmem:[%s224 + $0x8] sm:%s216] %v227
                %v229 = vld [vmem:[%s223 + $0x20] sm:%s216]
                %230 = vst [vmem:[%s224 + $0x10] sm:%s216] %v229
                %v231 = vld [vmem:[%s223 + $0x30] sm:%s216]
                %232 = vst [vmem:[%s224 + $0x18] sm:%s216] %v231
                %v233 = vld [vmem:[%s223 + $0x40] sm:%s216]
                %234 = vst [vmem:[%s224 + $0x20] sm:%s216] %v233
                %v235 = vld [vmem:[%s223 + $0x50] sm:%s216]
                %236 = vst [vmem:[%s224 + $0x28] sm:%s216] %v235
                %v237 = vld [vmem:[%s223 + $0x60] sm:%s216]
                %238 = vst [vmem:[%s224 + $0x30] sm:%s216] %v237
                %v239 = vld [vmem:[%s223 + $0x70] sm:%s216]
                %240 = vst [vmem:[%s224 + $0x38] sm:%s216] %v239
                %v241 = vld [vmem:[%s223 + $0x80] sm:%s216]
                %242 = vst [vmem:[%s224 + $0x40] sm:%s216] %v241
                %v243 = vld [vmem:[%s223 + $0x90] sm:%s216]
                %244 = vst [vmem:[%s224 + $0x48] sm:%s216] %v243
                %v245 = vld [vmem:[%s223 + $0xa0] sm:%s216]
                %246 = vst [vmem:[%s224 + $0x50] sm:%s216] %v245
                %v247 = vld [vmem:[%s223 + $0xb0] sm:%s216]
                %248 = vst [vmem:[%s224 + $0x58] sm:%s216] %v247
                %v249 = vld [vmem:[%s223 + $0xc0] sm:%s216]
                %250 = vst [vmem:[%s224 + $0x60] sm:%s216] %v249
                %v251 = vld [vmem:[%s223 + $0xd0] sm:%s216]
                %252 = vst [vmem:[%s224 + $0x68] sm:%s216] %v251
                %v253 = vld [vmem:[%s223 + $0xe0] sm:%s216]
                %254 = vst [vmem:[%s224 + $0x70] sm:%s216] %v253
                %v255 = vld [vmem:[%s223 + $0xf0] sm:%s216]
                %256 = vst [vmem:[%s224 + $0x78] sm:%s216] %v255
              $region41: #{resnet_forward.20} parent=35 // loop_footer
                %s222 = sadd.s32 1, %s218
              $region42: #{resnet_forward.20} parent=35 // loop_footer_branch
                %217 = sbr.rel target = $region38
              $region43: #{resnet_forward.20} parent=35 // loop_exit
                _
            $region36: #{resnet_forward.20} parent=27 // pred_fallthru
              _
          $region28: #{resnet_forward.20} parent=23 // pred_fallthru
            _
          %301 = vnop
        $region24: #{resnet_forward.20} parent=19 // pred_fallthru
          _
        // Predicated region
        $region59: #{resnet_forward.20} parent=19 // pred_check
          %p302 = pneg %p105
        $region60: #{resnet_forward.20} parent=19 // pred_check_branch
          %304 = sbr.rel (%p302) target = $region62
        $region61: #{resnet_forward.20} parent=19 // pred_region
          %s305 = smul.u32 2, %s18
          %p306 = scmp.lt.s32.totalorder %s305, 3
          %s307 = scalar_select %p306, %s305, 3
          %s308 = scalar_lea.vmem %s2, %s307
          %s309 = smul.u32 2, %s18
        $region62: #{resnet_forward.20} parent=19 // pred_fallthru
          _
        // Predicated region
        $region63: #{resnet_forward.20} parent=19 // pred_check
          %p310 = pneg %p133
        $region64: #{resnet_forward.20} parent=19 // pred_check_branch
          %312 = sbr.rel (%p310) target = $region66
        $region65: #{resnet_forward.20} parent=19 // pred_region
          %s313 = smul.u32 2, %s18
          %p314 = scmp.lt.s32.totalorder %s17, 0
          %s315 = scalar_select %p314, %s17, 0
          %p316 = scmp.lt.s32.totalorder %s313, 3
          %s317 = scalar_select %p316, %s313, 3
          %s318 = smul.addr %s315, 4
          %s319 = sadd.s32 %s317, %s318
          %s320 = smul.addr %s319, 4
          %s321 = scalar_lea.vmem %s3, %s320
          %s322 = smul.u32 2, %s18
        $region66: #{resnet_forward.20} parent=19 // pred_fallthru
          _
      $region20: #{resnet_forward.20} parent=5 // pred_fallthru
        _
      %p323 = scmp.le.s32.totalorder 1, %s10
      %p324 = scmp.lt.s32.totalorder %s10, 3
      %p325 = pnand %p323, %p324
      %p326 = pneg %p325
      // Predicated region
      $region67: #{resnet_forward.20} parent=5 // pred_check
        _
      $region68: #{resnet_forward.20} parent=5 // pred_check_branch
        %328 = sbr.rel (%p325) target = $region70
      $region69: #{resnet_forward.20} parent=5 // pred_region
        %s329 = ssub.s32 %s10, 1
        %s330 = sand.u32 %s72, 1
        %s331 = sand.u32 %s72, 1
        %s332 = smul.addr %s331, 128
        %s333 = scalar_lea.vmem [#allocation3], %s332
        // Predicated region
        $region71: #{resnet_forward.20} parent=69 // pred_check
          %p334 = pneg %p85
        $region72: #{resnet_forward.20} parent=69 // pred_check_branch
          %336 = sbr.rel (%p334) target = $region74
        $region73: #{resnet_forward.20} parent=69 // pred_region
          _
        $region74: #{resnet_forward.20} parent=69 // pred_fallthru
          _
        %p337 = scmp.lt.s32.totalorder %s20, 0
        %s338 = scalar_select %p337, %s20, 0
        %p339 = scmp.lt.s32.totalorder %s22, 0
        %s340 = scalar_select %p339, %s22, 0
        %s341 = sadd.s32 %s340, %s338
        %s342 = smul.addr %s341, 4
        %s343 = scalar_lea.vmem %s0, %s342
        %p344 = pneg %p57
        %p345 = pneg %p54
        %s346 = sand.u32 %s72, 1
        %s347 = sand.u32 %s72, 1
        %s348 = smul.addr %s347, 128
        %s349 = scalar_lea.vmem [#allocation3], %s348
        %p350 = pneg %p85
        %p351 = pneg %p82
        %s352 = smul.u32 2, %s21
        %p353 = scmp.lt.s32.totalorder %s352, 3
        %s354 = scalar_select %p353, %s352, 3
        %s355 = scalar_lea.vmem %s2, %s354
        %p356 = pneg %p111
        %p357 = pneg %p108
        %s358 = smul.u32 2, %s21
        %p359 = scmp.lt.s32.totalorder %s20, 0
        %s360 = scalar_select %p359, %s20, 0
        %p361 = scmp.lt.s32.totalorder %s358, 3
        %s362 = scalar_select %p361, %s358, 3
        %s363 = smul.addr %s360, 4
        %s364 = sadd.s32 %s362, %s363
        %s365 = smul.addr %s364, 4
        %s366 = scalar_lea.vmem %s3, %s365
        %p367 = pneg %p139
        %p368 = pneg %p136
        %p369 = pneg %p167
        %p370 = pneg %p164
        %s371 = smul.u32 2, %s21
        %p372 = scmp.lt.s32.totalorder %s20, 0
        %s373 = scalar_select %p372, %s20, 0
        %p374 = scmp.lt.s32.totalorder %s371, 3
        %s375 = scalar_select %p374, %s371, 3
        %s376 = smul.addr %s373, 4
        %s377 = sadd.s32 %s375, %s376
        %s378 = smul.addr %s377, 4
        %s379 = scalar_lea.vmem %s4, %s378
        %p380 = scmp.lt.s32.totalorder %s20, 0
        %s381 = scalar_select %p380, %s20, 0
        %p382 = scmp.lt.s32.totalorder %s22, 0
        %s383 = scalar_select %p382, %s22, 0
        %s384 = sadd.s32 %s383, %s381
        %s385 = smul.addr %s384, 4
        %s386 = scalar_lea.vmem %s0, %s385
        %s387 = smul.u32 16, %s22
        %s388 = smul.u32 2, %s21
        %s389 = smul.u32 2, %s21
        %p390 = scmp.lt.s32.totalorder %s389, 3
        %s391 = scalar_select %p390, %s389, 3
        %s392 = scalar_lea.vmem %s2, %s391
        %s393 = smul.u32 2, %s21
        %s394 = smul.u32 2, %s21
        %p395 = scmp.lt.s32.totalorder %s20, 0
        %s396 = scalar_select %p395, %s20, 0
        %p397 = scmp.lt.s32.totalorder %s394, 3
        %s398 = scalar_select %p397, %s394, 3
        %s399 = smul.addr %s396, 4
        %s400 = sadd.s32 %s398, %s399
        %s401 = smul.addr %s400, 4
        %s402 = scalar_lea.vmem %s3, %s401
        %s403 = smul.u32 2, %s21
        %s404 = smul.u32 2, %s21
        %p405 = scmp.lt.s32.totalorder %s20, 0
        %s406 = scalar_select %p405, %s20, 0
        %p407 = scmp.lt.s32.totalorder %s404, 3
        %s408 = scalar_select %p407, %s404, 3
        %s409 = smul.addr %s406, 4
        %s410 = sadd.s32 %s408, %s409
        %s411 = smul.addr %s410, 4
        %s412 = scalar_lea.vmem %s4, %s411
        %s413 = smul.u32 2, %s21
        %p414 = scmp.eq.s32.totalorder %s22, 0
        // Predicated region
        $region75: #{resnet_forward.20} parent=69 // pred_check
          %p415 = pneg %p414
        $region76: #{resnet_forward.20} parent=69 // pred_check_branch
          %417 = sbr.rel (%p415) target = $region78
        $region77: #{resnet_forward.20} parent=69 // pred_region
          %418 = vst [vmem:[#allocation2] sm:$0xff] 0.0
          %419 = vst [vmem:[#allocation2 + $0x8] sm:$0xff] 0.0
        $region78: #{resnet_forward.20} parent=69 // pred_fallthru
          _
        %v420 = vld [vmem:[#allocation2] sm:$0xff]
        %v421 = vld [vmem:[#allocation2 + $0x8] sm:$0xff]
        %v422 = vld [vmem:[%s386] sm:$0xf]
        %v423 = vld [vmem:[%s333] sm:$0xff]
        %v424 = vld [vmem:[%s333 + $0x8] sm:$0xff]
        %v425 = vld [vmem:[%s333 + $0x10] sm:$0xff]
        %v426 = vld [vmem:[%s333 + $0x18] sm:$0xff]
        %v427 = vld [vmem:[%s333 + $0x20] sm:$0xff]
        %v428 = vld [vmem:[%s333 + $0x28] sm:$0xff]
        %v429 = vld [vmem:[%s333 + $0x30] sm:$0xff]
        %v430 = vld [vmem:[%s333 + $0x38] sm:$0xff]
        %v431 = vld [vmem:[%s333 + $0x40] sm:$0xff]
        %v432 = vld [vmem:[%s333 + $0x48] sm:$0xff]
        %v433 = vld [vmem:[%s333 + $0x50] sm:$0xff]
        %v434 = vld [vmem:[%s333 + $0x58] sm:$0xff]
        %v435 = vld [vmem:[%s333 + $0x60] sm:$0xff]
        %v436 = vld [vmem:[%s333 + $0x68] sm:$0xff]
        %v437 = vld [vmem:[%s333 + $0x70] sm:$0xff]
        %v438 = vld [vmem:[%s333 + $0x78] sm:$0xff]
        %v455 = vunpack.c.l.b16 %v423
        %v456 = vunpack.c.h.b16 %v423
        %v457 = vunpack.c.l.b16 %v424
        %v458 = vunpack.c.h.b16 %v424
        %v459 = vunpack.c.l.b16 %v425
        %v460 = vunpack.c.h.b16 %v425
        %v461 = vunpack.c.l.b16 %v426
        %v462 = vunpack.c.h.b16 %v426
        %v463 = vunpack.c.l.b16 %v427
        %v464 = vunpack.c.h.b16 %v427
        %v465 = vunpack.c.l.b16 %v428
        %v466 = vunpack.c.h.b16 %v428
        %v467 = vunpack.c.l.b16 %v429
        %v468 = vunpack.c.h.b16 %v429
        %v469 = vunpack.c.l.b16 %v430
        %v470 = vunpack.c.h.b16 %v430
        %v471 = vunpack.c.l.b16 %v431
        %v472 = vunpack.c.h.b16 %v431
        %v473 = vunpack.c.l.b16 %v432
        %v474 = vunpack.c.h.b16 %v432
        %v475 = vunpack.c.l.b16 %v433
        %v476 = vunpack.c.h.b16 %v433
        %v477 = vunpack.c.l.b16 %v434
        %v478 = vunpack.c.h.b16 %v434
        %v479 = vunpack.c.l.b16 %v435
        %v480 = vunpack.c.h.b16 %v435
        %v481 = vunpack.c.l.b16 %v436
        %v482 = vunpack.c.h.b16 %v436
        %v483 = vunpack.c.l.b16 %v437
        %v484 = vunpack.c.h.b16 %v437
        %v485 = vunpack.c.l.b16 %v438
        %v486 = vunpack.c.h.b16 %v438
        %v487 = vpack.c.b16 %v457, %v455
        %v488 = vpack.c.b16 %v458, %v456
        %v489 = vpack.c.b16 %v461, %v459
        %v490 = vpack.c.b16 %v462, %v460
        %v491 = vpack.c.b16 %v465, %v463
        %v492 = vpack.c.b16 %v466, %v464
        %v493 = vpack.c.b16 %v469, %v467
        %v494 = vpack.c.b16 %v470, %v468
        %v495 = vpack.c.b16 %v473, %v471
        %v496 = vpack.c.b16 %v474, %v472
        %v497 = vpack.c.b16 %v477, %v475
        %v498 = vpack.c.b16 %v478, %v476
        %v499 = vpack.c.b16 %v481, %v479
        %v500 = vpack.c.b16 %v482, %v480
        %v501 = vpack.c.b16 %v485, %v483
        %v502 = vpack.c.b16 %v486, %v484
        %519 = vmatpush.bf16.msra.mxu0 %v501
        %520 = vmatpush.bf16.msra.mxu0 %v499
        %521 = vmatpush.bf16.msra.mxu0 %v497
        %522 = vmatpush.bf16.msra.mxu0 %v495
        %523 = vmatpush.bf16.msra.mxu0 %v493
        %524 = vmatpush.bf16.msra.mxu0 %v491
        %525 = vmatpush.bf16.msra.mxu0 %v489
        %526 = vmatpush.bf16.msra.mxu0 %v487
        %527 = vmatmul.bf16.gmra.mxu0 %v422
        %v528 = vpop.f32.mrf.mxu0
        %v529 = vadd.f32 0.0, %v528
        %v530 = vpop.f32.mrf.mxu0
        %531 = vdwg.mxu0
        %532 = vmatpush.bf16.msra.mxu0 %v502
        %533 = vmatpush.bf16.msra.mxu0 %v500
        %534 = vmatpush.bf16.msra.mxu0 %v498
        %535 = vmatpush.bf16.msra.mxu0 %v496
        %536 = vmatpush.bf16.msra.mxu0 %v494
        %537 = vmatpush.bf16.msra.mxu0 %v492
        %538 = vmatpush.bf16.msra.mxu0 %v490
        %539 = vmatpush.bf16.msra.mxu0 %v488
        %540 = vmatmul.bf16.gmra.mxu0 %v422
        %v541 = vpop.f32.mrf.mxu0
        %v542 = vadd.f32 0.0, %v541
        %v543 = vpop.f32.mrf.mxu0
        %544 = vdwg.mxu0
        %v545 = vadd.f32 %v420, %v529
        %v546 = vadd.f32 %v421, %v542
        %547 = vst [vmem:[#allocation2] sm:$0xff] %v545
        %548 = vst [vmem:[#allocation2 + $0x8] sm:$0xff] %v546
        // Predicated region
        $region79: #{resnet_forward.20} parent=69 // pred_check
          %p549 = pneg %p414
        $region80: #{resnet_forward.20} parent=69 // pred_check_branch
          %551 = sbr.rel (%p549) target = $region82
        $region81: #{resnet_forward.20} parent=69 // pred_region
          %v552 = vld [vmem:[%s402] sm:$0xff]
          %v553 = vunpack.c.l.bf16 %v552
          %v554 = vunpack.c.h.bf16 %v552
          %v555 = vld [vmem:[#allocation2] sm:$0xff]
          %v556 = vld [vmem:[#allocation2 + $0x8] sm:$0xff]
          %v557 = vld [vmem:[%s392] sm:$0x3]
          %v559 = vperm.slane %v557, 0
          %v560 = vperm.slane %v557, 1
          %v563 = vadd.f32 %v555, %v559
          %v564 = vadd.f32 %v556, %v560
          %v565 = vadd.f32 %v563, %v553
          %v566 = vadd.f32 %v564, %v554
          %v567 = vmax.f32 %v565, 0.0
          %v568 = vmax.f32 %v566, 0.0
          %v569 = vpack.c.bf16 %v568, %v567
          %570 = vst [vmem:[%s412] sm:$0xff] %v569
        $region82: #{resnet_forward.20} parent=69 // pred_fallthru
          _
        %s571 = smul.u32 2, %s21
        %p572 = scmp.lt.s32.totalorder %s20, 0
        %s573 = scalar_select %p572, %s20, 0
        %p574 = scmp.lt.s32.totalorder %s571, 3
        %s575 = scalar_select %p574, %s571, 3
        %s576 = smul.addr %s573, 4
        %s577 = sadd.s32 %s575, %s576
        %s578 = smul.addr %s577, 4
        %s579 = scalar_lea.vmem %s4, %s578
        // Predicated region
        $region83: #{resnet_forward.20} parent=69 // pred_check
          %p580 = pneg %p164
        $region84: #{resnet_forward.20} parent=69 // pred_check_branch
          %582 = sbr.rel (%p580) target = $region86
        $region85: #{resnet_forward.20} parent=69 // pred_region
          %s583 = smul.u32 2, %s21
        $region86: #{resnet_forward.20} parent=69 // pred_fallthru
          _
      $region70: #{resnet_forward.20} parent=5 // pred_fallthru
        _
      %p584 = scmp.le.s32.totalorder 2, %s10
      // Predicated region
      $region87: #{resnet_forward.20} parent=5 // pred_check
        %p585 = pneg %p584
      $region88: #{resnet_forward.20} parent=5 // pred_check_branch
        %587 = sbr.rel (%p585) target = $region90
      $region89: #{resnet_forward.20} parent=5 // pred_region
        %s588 = ssub.s32 %s10, 2
        // Predicated region
        $region91: #{resnet_forward.20} parent=89 // pred_check
          %p589 = pneg %p170
        $region92: #{resnet_forward.20} parent=89 // pred_check_branch
          %591 = sbr.rel (%p589) target = $region94
        $region93: #{resnet_forward.20} parent=89 // pred_region
          %s592 = smul.u32 2, %s24
          %p593 = scmp.lt.s32.totalorder %s23, 0
          %s594 = scalar_select %p593, %s23, 0
          %p595 = scmp.lt.s32.totalorder %s592, 3
          %s596 = scalar_select %p595, %s592, 3
          %s597 = smul.addr %s594, 4
          %s598 = sadd.s32 %s596, %s597
          %s599 = smul.addr %s598, 4
          %s600 = scalar_lea.vmem %s4, %s599
        $region94: #{resnet_forward.20} parent=89 // pred_fallthru
          _
      $region90: #{resnet_forward.20} parent=5 // pred_fallthru
        _
    $region6: #{resnet_forward.20} parent=1 // loop_footer
      %s14 = sadd.s32 1, %s10
    $region7: #{resnet_forward.20} parent=1 // loop_footer_branch
      %9 = sbr.rel target = $region3
    $region8: #{resnet_forward.20} parent=1 // loop_exit
      _

</llo_original>
